<compile_context>
chip_gen: v7x
topology: tpu7x:2x2x1
jax: 0.10.0
libtpu: 0.0.40
codegen_flags: <defaults>
</compile_context>

<pallas_src>
import functools
import math

import jax
import jax.numpy as jnp
from jax.experimental import pallas as pl
from jax.experimental.pallas import tpu as pltpu

# ----- config (mirrors args consumed in Qatten_Weight.__init__) -----
N_AGENTS = 8
UNIT_DIM = 16
STATE_DIM = UNIT_DIM * N_AGENTS + 32      # state_dim >= unit_dim * n_agents
N_ACTIONS = 4                             # unused by forward (actions unused)
N_HEAD = 4                                # n_attention_head
EMBED_DIM = 32                            # dplex_embed_dim
HYPER_HID = 64                            # hyper_hidden_dim
ATTEND_REG_COEF = 0.001

HE = N_HEAD * EMBED_DIM                   # 128  (fused selector / key width)
HH = N_HEAD * HYPER_HID                   # 256  (fused hyper hidden width)
W1_OUT = HH + EMBED_DIM                   # 288  (selector hidden + V hidden, fused)
MAX_TILE_BS = 512                         # rows per grid step (multiple of 8)


def _round_up(x, m):
    return (x + m - 1) // m * m


def qatten_kernel(states_ref, unit_ref,
                  w1_ref, b1_ref, selW2_ref, keyW_ref, vW2t_ref, vB2_ref,
                  head_attend_ref, v_ref, partial_ref,
                  *, n_valid):
    tb = states_ref.shape[0]                       # rows in this tile (TILE_BS)
    states = states_ref[...]                       # (TB, STATE_DIM)
    unit_flat = unit_ref[...]                      # (TB*A, UNIT_DIM)

    # ---- one fused first-layer matmul: selector hyper-MLP (all heads) + V L1 ----
    h_all = jnp.dot(states, w1_ref[...], preferred_element_type=jnp.float32)
    h_all = jnp.maximum(h_all + b1_ref[...], 0.0)                      # (TB, 288)
    h1 = h_all[:, :HH]                                                 # (TB, 256) selector hidden
    v1 = h_all[:, HH:]                                                 # (TB, 32)  V hidden (biased+ReLU)

    # selector L2 for all heads at once (block-diagonal weight, lane-dense)
    sel_all = jnp.dot(h1, selW2_ref[...],
                      preferred_element_type=jnp.float32)              # (TB, 128)

    # ---- fused per-agent key projection for all heads ----
    keys_flat = jnp.dot(unit_flat, keyW_ref[...],
                        preferred_element_type=jnp.float32)            # (TB*A, 128)
    # tile-aligned reshape: last dims (A=8 sublanes, 128 lanes) == one vreg tile
    keys = keys_flat.reshape(tb, N_AGENTS, HE)                         # (TB, A, 128)

    # selector broadcast over the agent (sublane) axis, all heads at once
    prod = sel_all[:, None, :] * keys                                  # (TB, A, 128)

    # row-validity mask (only the padded tail of the last tile is invalid)
    row0 = pl.program_id(0) * tb
    rows = row0 + jax.lax.broadcasted_iota(jnp.int32, (tb, 1), 0)
    valid = (rows < n_valid).astype(jnp.float32)                       # (TB, 1)

    inv_sqrt_e = jnp.float32(1.0 / math.sqrt(EMBED_DIM))
    head_sum = jnp.zeros((tb, N_AGENTS), jnp.float32)
    reg_cols = []
    ent_cols = []
    for h in range(N_HEAD):                        # small static head loop (epilogue only)
        lo = h * EMBED_DIM
        # attend_logits[b, a] = <selector_h[b], key_h[b, a]>  (lane-segment reduce)
        logits = jnp.sum(prod[:, :, lo:lo + EMBED_DIM], axis=-1)       # (TB, A)
        scaled = logits * inv_sqrt_e

        # softmax over agents; divide goes to the EUP via approx reciprocal
        m = jnp.max(scaled, axis=-1, keepdims=True)
        e = jnp.exp(scaled - m)
        denom = jnp.sum(e, axis=-1, keepdims=True)
        w = e * pl.reciprocal(denom, approx=True)                      # (TB, A)

        head_sum = head_sum + w
        # per-tile partial sums (global means are finished in the wrapper)
        reg_cols.append(jnp.sum(logits * logits, axis=-1, keepdims=True) * valid)
        ent_cols.append(-jnp.sum(jnp.log(w + 1e-8) * w, axis=-1, keepdims=True) * valid)

    head_attend_ref[...] = head_sum

    # ---- V(states): final E->1 projection on VPU/XLU (broadcast-mul + lane reduce) ----
    v_ref[...] = jnp.sum(v1 * vW2t_ref[...], axis=-1, keepdims=True) + vB2_ref[...]

    # ---- per-tile partials: [reg_h0..h3, ent_h0..h3] as one row, no scalar stores ----
    cols = jnp.concatenate(reg_cols + ent_cols, axis=1)                # (TB, 2*N_HEAD)
    row = jnp.sum(cols, axis=0, keepdims=True)                         # (1, 2*N_HEAD)
    partial_ref[...] = jnp.broadcast_to(row, (8, 2 * N_HEAD))


def qatten_weight(agent_qs, states, actions, params):
    """Matches Qatten_Weight.forward(agent_qs, states, actions).

    Returns (head_attend (bs, n_agents), v (bs, 1), attend_mag_regs scalar,
             head_entropies list of n_head scalars).
    agent_qs / actions do not influence the outputs (same as the torch module).
    """
    del agent_qs, actions
    states = states.reshape(-1, STATE_DIM).astype(jnp.float32)
    bs = states.shape[0]

    # row tiling: pad bs up to a multiple of the tile size
    tile_bs = min(MAX_TILE_BS, _round_up(bs, 8))
    bs_pad = _round_up(bs, tile_bs)
    num_tiles = bs_pad // tile_bs
    if bs_pad != bs:
        states_p = jnp.pad(states, ((0, bs_pad - bs), (0, 0)))
    else:
        states_p = states
    unit_flat = states_p[:, :UNIT_DIM * N_AGENTS].reshape(bs_pad * N_AGENTS, UNIT_DIM)

    row_map = lambda i: (i, 0)     # per-tile rows
    pin_map = lambda i: (0, 0)     # weights stay VMEM-resident across tiles

    in_specs = [
        pl.BlockSpec((tile_bs, STATE_DIM), row_map),
        pl.BlockSpec((tile_bs * N_AGENTS, UNIT_DIM), row_map),
        pl.BlockSpec((STATE_DIM, W1_OUT), pin_map),  # [selW1 heads | vW1] fused
        pl.BlockSpec((1, W1_OUT), pin_map),          # [selB1 heads | vB1] fused
        pl.BlockSpec((HH, HE), pin_map),             # selW2 block-diagonal
        pl.BlockSpec((UNIT_DIM, HE), pin_map),       # keyW fused
        pl.BlockSpec((1, EMBED_DIM), pin_map),       # vW2 transposed -> VPU projection
        pl.BlockSpec((1, 1), pin_map),               # vB2
    ]
    out_shapes = (
        jax.ShapeDtypeStruct((bs_pad, N_AGENTS), jnp.float32),            # head_attend
        jax.ShapeDtypeStruct((bs_pad, 1), jnp.float32),                   # v
        jax.ShapeDtypeStruct((num_tiles * 8, 2 * N_HEAD), jnp.float32),   # per-tile partials
    )
    out_specs = (
        pl.BlockSpec((tile_bs, N_AGENTS), row_map),
        pl.BlockSpec((tile_bs, 1), row_map),
        pl.BlockSpec((8, 2 * N_HEAD), row_map),
    )

    head_attend_p, v_p, partials = pl.pallas_call(
        functools.partial(qatten_kernel, n_valid=bs),
        grid=(num_tiles,),
        in_specs=in_specs,
        out_shape=out_shapes,
        out_specs=out_specs,
        compiler_params=pltpu.CompilerParams(
            dimension_semantics=("parallel",),          # shard tiles across v7x's 2 TCs
            vmem_limit_bytes=32 * 1024 * 1024,          # headroom on v5e's 16 MiB default
        ),
    )(states_p, unit_flat,
      params["W1_all"], params["B1_all"], params["selW2_bd"], params["keyW"],
      params["vW2t"], params["vB2"])

    head_attend = head_attend_p[:bs]
    v = v_p[:bs]

    # finish the global means from the per-tile partial sums
    totals = jnp.sum(partials[::8], axis=0)                               # (2*N_HEAD,)
    attend_mag_regs = ATTEND_REG_COEF * jnp.sum(totals[:N_HEAD]) / (bs * N_AGENTS)
    head_entropies = [totals[N_HEAD + h] / bs for h in range(N_HEAD)]
    return head_attend, v, attend_mag_regs, head_entropies


# ----------------------- parameters (raw torch-like + fused kernel layout) -----------------------
def init_raw_params(key):
    ks = jax.random.split(key, 8)
    s = 0.1
    return dict(
        selW1=jax.random.normal(ks[0], (N_HEAD, STATE_DIM, HYPER_HID), jnp.float32) * s,
        selB1=jax.random.normal(ks[1], (N_HEAD, HYPER_HID), jnp.float32) * s,
        selW2=jax.random.normal(ks[2], (N_HEAD, HYPER_HID, EMBED_DIM), jnp.float32) * s,
        keyW=jax.random.normal(ks[3], (N_HEAD, UNIT_DIM, EMBED_DIM), jnp.float32) * s,
        vW1=jax.random.normal(ks[4], (STATE_DIM, EMBED_DIM), jnp.float32) * s,
        vB1=jax.random.normal(ks[5], (1, EMBED_DIM), jnp.float32) * s,
        vW2=jax.random.normal(ks[6], (EMBED_DIM, 1), jnp.float32) * s,
        vB2=jax.random.normal(ks[7], (1, 1), jnp.float32) * s,
    )


def fuse_params(raw):
    """Build the lane-dense fused weight layout consumed by the kernel."""
    # first layer: [selW1 heads | vW1]  -> one (STATE_DIM, 288) matmul
    W1_all = jnp.concatenate(
        [raw["selW1"][h] for h in range(N_HEAD)] + [raw["vW1"]], axis=1)          # (S, 288)
    B1_all = jnp.concatenate(
        [raw["selB1"].reshape(1, HH), raw["vB1"]], axis=1)                        # (1, 288)
    # selector second layer as one block-diagonal (256, 128) weight
    selW2_bd = jnp.zeros((HH, HE), jnp.float32)
    for h in range(N_HEAD):
        selW2_bd = selW2_bd.at[h * HYPER_HID:(h + 1) * HYPER_HID,
                               h * EMBED_DIM:(h + 1) * EMBED_DIM].set(raw["selW2"][h])
    keyW_f = jnp.concatenate([raw["keyW"][h] for h in range(N_HEAD)], axis=1)     # (16, 128)
    return dict(
        W1_all=W1_all, B1_all=B1_all, selW2_bd=selW2_bd, keyW=keyW_f,
        vW2t=raw["vW2"].reshape(1, EMBED_DIM), vB2=raw["vB2"],
    )


# ----------------------- pure-JAX reference (mirrors the torch module) -----------------------
def qatten_reference(states, raw):
    states = states.reshape(-1, STATE_DIM)
    bs = states.shape[0]
    unit = states[:, :UNIT_DIM * N_AGENTS].reshape(bs, N_AGENTS, UNIT_DIM)
    head_sum = jnp.zeros((bs, N_AGENTS), jnp.float32)
    reg = jnp.float32(0.0)
    ents = []
    for h in range(N_HEAD):
        h1 = jax.nn.relu(states @ raw["selW1"][h] + raw["selB1"][h])
        sel = h1 @ raw["selW2"][h]                                      # (bs, E)
        keys = jnp.einsum("bau,ue->bae", unit, raw["keyW"][h])          # (bs, A, E)
        logits = jnp.einsum("be,bae->ba", sel, keys)                    # (bs, A)
        w = jax.nn.softmax(logits / math.sqrt(EMBED_DIM), axis=-1)
        head_sum = head_sum + w
        reg = reg + jnp.mean(logits ** 2)
        ents.append(-jnp.mean(jnp.sum(jnp.log(w + 1e-8) * w, axis=1)))
    v1 = jax.nn.relu(states @ raw["vW1"] + raw["vB1"])
    v = v1 @ raw["vW2"] + raw["vB2"]
    return head_sum, v, ATTEND_REG_COEF * reg, ents


if __name__ == "__main__":
    key = jax.random.PRNGKey(0)
    kp, ks, kq, ka = jax.random.split(key, 4)
    raw = init_raw_params(kp)
    fused = fuse_params(raw)

    batch, T = 2, 8                       # flattened bs = 16
    states = jax.random.normal(ks, (batch, T, STATE_DIM), jnp.float32)
    agent_qs = jax.random.normal(kq, (batch, T, N_AGENTS), jnp.float32)
    actions = jax.random.normal(ka, (batch, T, N_AGENTS * N_ACTIONS), jnp.float32)

    head_attend, v, attend_mag_regs, head_entropies = qatten_weight(
        agent_qs, states, actions, fused)
    jax.block_until_ready((head_attend, v, attend_mag_regs, head_entropies))

    assert head_attend.shape == (batch * T, N_AGENTS)
    assert v.shape == (batch * T, 1)
    assert len(head_entropies) == N_HEAD

    # loose numeric check vs. pure-JAX reference (MXU default precision + approx recip)
    ha_r, v_r, reg_r, ents_r = qatten_reference(states, raw)
    tol = 5e-2
    assert float(jnp.max(jnp.abs(head_attend - ha_r))) < tol
    assert float(jnp.max(jnp.abs(v - v_r))) < tol
    assert float(jnp.abs(attend_mag_regs - reg_r)) < tol
    assert all(float(jnp.abs(head_entropies[h] - ents_r[h])) < tol for h in range(N_HEAD))
    print("KERNEL_OK")
</pallas_src>

<mosaic_0001>
module attributes {stable_mosaic.version = 11 : i64} {
  func.func @qatten_kernel(%arg0: i32, %arg1: memref<16x160xf32, #tpu.memory_space<vmem>>, %arg2: memref<128x16xf32, #tpu.memory_space<vmem>>, %arg3: memref<160x288xf32, #tpu.memory_space<vmem>>, %arg4: memref<1x288xf32, #tpu.memory_space<vmem>>, %arg5: memref<256x128xf32, #tpu.memory_space<vmem>>, %arg6: memref<16x128xf32, #tpu.memory_space<vmem>>, %arg7: memref<1x32xf32, #tpu.memory_space<vmem>>, %arg8: memref<1x1xf32, #tpu.memory_space<vmem>>, %arg9: memref<16x8xf32, #tpu.memory_space<vmem>>, %arg10: memref<16x1xf32, #tpu.memory_space<vmem>>, %arg11: memref<8x8xf32, #tpu.memory_space<vmem>>) attributes {dimension_semantics = [#tpu.dimension_semantics<parallel>], iteration_bounds = array<i64: 1>, scalar_prefetch = 0 : i64, scratch_operands = 0 : i64, tpu.core_type = #tpu.core_type<tc>, window_params = [{transform_indices = @transform_0, window_bounds = array<i64: 16, 160>}, {transform_indices = @transform_1, window_bounds = array<i64: 128, 16>}, {pipeline_mode = #tpu.pipeline_mode<synchronous>, transform_indices = @transform_2, window_bounds = array<i64: 160, 288>}, {pipeline_mode = #tpu.pipeline_mode<synchronous>, transform_indices = @transform_3, window_bounds = array<i64: 1, 288>}, {pipeline_mode = #tpu.pipeline_mode<synchronous>, transform_indices = @transform_4, window_bounds = array<i64: 256, 128>}, {pipeline_mode = #tpu.pipeline_mode<synchronous>, transform_indices = @transform_5, window_bounds = array<i64: 16, 128>}, {pipeline_mode = #tpu.pipeline_mode<synchronous>, transform_indices = @transform_6, window_bounds = array<i64: 1, 32>}, {pipeline_mode = #tpu.pipeline_mode<synchronous>, transform_indices = @transform_7, window_bounds = array<i64: 1, 1>}, {transform_indices = @transform_8, window_bounds = array<i64: 16, 8>}, {transform_indices = @transform_9, window_bounds = array<i64: 16, 1>}, {transform_indices = @transform_10, window_bounds = array<i64: 8, 8>}]} {
    %c0 = arith.constant 0 : index
    %c0_0 = arith.constant 0 : index
    %0 = vector.load %arg1[%c0, %c0_0] : memref<16x160xf32, #tpu.memory_space<vmem>>, vector<16x160xf32>
    %c0_1 = arith.constant 0 : index
    %c0_2 = arith.constant 0 : index
    %1 = vector.load %arg2[%c0_1, %c0_2] : memref<128x16xf32, #tpu.memory_space<vmem>>, vector<128x16xf32>
    %c0_3 = arith.constant 0 : index
    %c0_4 = arith.constant 0 : index
    %2 = vector.load %arg3[%c0_3, %c0_4] : memref<160x288xf32, #tpu.memory_space<vmem>>, vector<160x288xf32>
    %cst = arith.constant dense<0.000000e+00> : vector<16x288xf32>
    %3 = tpu.matmul %0, %2, %cst {dimension_numbers = #tpu.dot_dimension_numbers<[1], [0], [0], [1], [0, 0, 1, 1], [], []>} : vector<16x160xf32>, vector<160x288xf32>, vector<16x288xf32> -> vector<16x288xf32>
    %c0_5 = arith.constant 0 : index
    %c0_6 = arith.constant 0 : index
    %4 = vector.load %arg4[%c0_5, %c0_6] : memref<1x288xf32, #tpu.memory_space<vmem>>, vector<1x288xf32>
    %5 = vector.broadcast %4 : vector<1x288xf32> to vector<16x288xf32>
    %6 = arith.addf %3, %5 : vector<16x288xf32>
    %cst_7 = arith.constant 0.000000e+00 : f32
    %7 = vector.broadcast %cst_7 : f32 to vector<16x288xf32>
    %8 = arith.maximumf %6, %7 : vector<16x288xf32>
    %9 = vector.extract_strided_slice %8 {offsets = [0, 0], sizes = [16, 256], strides = [1, 1]} : vector<16x288xf32> to vector<16x256xf32>
    %10 = vector.extract_strided_slice %8 {offsets = [0, 256], sizes = [16, 32], strides = [1, 1]} : vector<16x288xf32> to vector<16x32xf32>
    %c0_8 = arith.constant 0 : index
    %c0_9 = arith.constant 0 : index
    %11 = vector.load %arg5[%c0_8, %c0_9] : memref<256x128xf32, #tpu.memory_space<vmem>>, vector<256x128xf32>
    %cst_10 = arith.constant dense<0.000000e+00> : vector<16x128xf32>
    %12 = tpu.matmul %9, %11, %cst_10 {dimension_numbers = #tpu.dot_dimension_numbers<[1], [0], [0], [1], [0, 0, 1, 1], [], []>} : vector<16x256xf32>, vector<256x128xf32>, vector<16x128xf32> -> vector<16x128xf32>
    %c0_11 = arith.constant 0 : index
    %c0_12 = arith.constant 0 : index
    %13 = vector.load %arg6[%c0_11, %c0_12] : memref<16x128xf32, #tpu.memory_space<vmem>>, vector<16x128xf32>
    %cst_13 = arith.constant dense<0.000000e+00> : vector<128x128xf32>
    %14 = tpu.matmul %1, %13, %cst_13 {dimension_numbers = #tpu.dot_dimension_numbers<[1], [0], [0], [1], [0, 0, 1, 1], [], []>} : vector<128x16xf32>, vector<16x128xf32>, vector<128x128xf32> -> vector<128x128xf32>
    %15 = vector.shape_cast %14 : vector<128x128xf32> to vector<16x8x128xf32>
    %16 = vector.shape_cast %12 : vector<16x128xf32> to vector<16x1x128xf32>
    %17 = vector.broadcast %16 : vector<16x1x128xf32> to vector<16x8x128xf32>
    %18 = arith.mulf %17, %15 : vector<16x8x128xf32>
    %c16_i32 = arith.constant 16 : i32
    %19 = arith.muli %arg0, %c16_i32 : i32
    %20 = tpu.iota {dimensions = array<i32: 0>} : vector<16x1xi32>
    %21 = vector.broadcast %19 : i32 to vector<16x1xi32>
    %22 = arith.addi %21, %20 : vector<16x1xi32>
    %c16_i32_14 = arith.constant 16 : i32
    %23 = vector.broadcast %c16_i32_14 : i32 to vector<16x1xi32>
    %24 = arith.cmpi slt, %22, %23 : vector<16x1xi32>
    %25 = arith.extui %24 : vector<16x1xi1> to vector<16x1xi32>
    %26 = arith.sitofp %25 : vector<16x1xi32> to vector<16x1xf32>
    %cst_15 = arith.constant 0.000000e+00 : f32
    %27 = vector.broadcast %cst_15 : f32 to vector<16x8xf32>
    %28 = vector.extract_strided_slice %18 {offsets = [0, 0, 0], sizes = [16, 8, 32], strides = [1, 1, 1]} : vector<16x8x128xf32> to vector<16x8x32xf32>
    %cst_16 = arith.constant dense<0.000000e+00> : vector<16x8xf32>
    %29 = vector.multi_reduction <add>, %28, %cst_16 [2] : vector<16x8x32xf32> to vector<16x8xf32>
    %cst_17 = arith.constant 0.176776692 : f32
    %30 = vector.broadcast %cst_17 : f32 to vector<16x8xf32>
    %31 = arith.mulf %29, %30 : vector<16x8xf32>
    %cst_18 = arith.constant dense<0xFF800000> : vector<16xf32>
    %32 = vector.multi_reduction <maximumf>, %31, %cst_18 [1] : vector<16x8xf32> to vector<16xf32>
    %33 = vector.shape_cast %32 : vector<16xf32> to vector<16x1xf32>
    %34 = vector.broadcast %33 : vector<16x1xf32> to vector<16x8xf32>
    %35 = arith.subf %31, %34 : vector<16x8xf32>
    %36 = math.exp %35 : vector<16x8xf32>
    %cst_19 = arith.constant dense<0.000000e+00> : vector<16xf32>
    %37 = vector.multi_reduction <add>, %36, %cst_19 [1] : vector<16x8xf32> to vector<16xf32>
    %38 = vector.shape_cast %37 : vector<16xf32> to vector<16x1xf32>
    %39 = tpu.reciprocal %38 {approx = true} : vector<16x1xf32> -> vector<16x1xf32>
    %40 = vector.broadcast %39 : vector<16x1xf32> to vector<16x8xf32>
    %41 = arith.mulf %36, %40 : vector<16x8xf32>
    %42 = arith.addf %27, %41 : vector<16x8xf32>
    %43 = arith.mulf %29, %29 : vector<16x8xf32>
    %cst_20 = arith.constant dense<0.000000e+00> : vector<16xf32>
    %44 = vector.multi_reduction <add>, %43, %cst_20 [1] : vector<16x8xf32> to vector<16xf32>
    %45 = vector.shape_cast %44 : vector<16xf32> to vector<16x1xf32>
    %46 = arith.mulf %45, %26 : vector<16x1xf32>
    %cst_21 = arith.constant 9.99999993E-9 : f32
    %47 = vector.broadcast %cst_21 : f32 to vector<16x8xf32>
    %48 = arith.addf %41, %47 : vector<16x8xf32>
    %49 = math.log %48 : vector<16x8xf32>
    %50 = arith.mulf %49, %41 : vector<16x8xf32>
    %cst_22 = arith.constant dense<0.000000e+00> : vector<16xf32>
    %51 = vector.multi_reduction <add>, %50, %cst_22 [1] : vector<16x8xf32> to vector<16xf32>
    %52 = vector.shape_cast %51 : vector<16xf32> to vector<16x1xf32>
    %cst_23 = arith.constant 0.000000e+00 : f32
    %53 = vector.broadcast %cst_23 : f32 to vector<16x1xf32>
    %54 = arith.subf %53, %52 : vector<16x1xf32>
    %55 = arith.mulf %54, %26 : vector<16x1xf32>
    %56 = vector.extract_strided_slice %18 {offsets = [0, 0, 32], sizes = [16, 8, 32], strides = [1, 1, 1]} : vector<16x8x128xf32> to vector<16x8x32xf32>
    %cst_24 = arith.constant dense<0.000000e+00> : vector<16x8xf32>
    %57 = vector.multi_reduction <add>, %56, %cst_24 [2] : vector<16x8x32xf32> to vector<16x8xf32>
    %cst_25 = arith.constant 0.176776692 : f32
    %58 = vector.broadcast %cst_25 : f32 to vector<16x8xf32>
    %59 = arith.mulf %57, %58 : vector<16x8xf32>
    %cst_26 = arith.constant dense<0xFF800000> : vector<16xf32>
    %60 = vector.multi_reduction <maximumf>, %59, %cst_26 [1] : vector<16x8xf32> to vector<16xf32>
    %61 = vector.shape_cast %60 : vector<16xf32> to vector<16x1xf32>
    %62 = vector.broadcast %61 : vector<16x1xf32> to vector<16x8xf32>
    %63 = arith.subf %59, %62 : vector<16x8xf32>
    %64 = math.exp %63 : vector<16x8xf32>
    %cst_27 = arith.constant dense<0.000000e+00> : vector<16xf32>
    %65 = vector.multi_reduction <add>, %64, %cst_27 [1] : vector<16x8xf32> to vector<16xf32>
    %66 = vector.shape_cast %65 : vector<16xf32> to vector<16x1xf32>
    %67 = tpu.reciprocal %66 {approx = true} : vector<16x1xf32> -> vector<16x1xf32>
    %68 = vector.broadcast %67 : vector<16x1xf32> to vector<16x8xf32>
    %69 = arith.mulf %64, %68 : vector<16x8xf32>
    %70 = arith.addf %42, %69 : vector<16x8xf32>
    %71 = arith.mulf %57, %57 : vector<16x8xf32>
    %cst_28 = arith.constant dense<0.000000e+00> : vector<16xf32>
    %72 = vector.multi_reduction <add>, %71, %cst_28 [1] : vector<16x8xf32> to vector<16xf32>
    %73 = vector.shape_cast %72 : vector<16xf32> to vector<16x1xf32>
    %74 = arith.mulf %73, %26 : vector<16x1xf32>
    %cst_29 = arith.constant 9.99999993E-9 : f32
    %75 = vector.broadcast %cst_29 : f32 to vector<16x8xf32>
    %76 = arith.addf %69, %75 : vector<16x8xf32>
    %77 = math.log %76 : vector<16x8xf32>
    %78 = arith.mulf %77, %69 : vector<16x8xf32>
    %cst_30 = arith.constant dense<0.000000e+00> : vector<16xf32>
    %79 = vector.multi_reduction <add>, %78, %cst_30 [1] : vector<16x8xf32> to vector<16xf32>
    %80 = vector.shape_cast %79 : vector<16xf32> to vector<16x1xf32>
    %cst_31 = arith.constant 0.000000e+00 : f32
    %81 = vector.broadcast %cst_31 : f32 to vector<16x1xf32>
    %82 = arith.subf %81, %80 : vector<16x1xf32>
    %83 = arith.mulf %82, %26 : vector<16x1xf32>
    %84 = vector.extract_strided_slice %18 {offsets = [0, 0, 64], sizes = [16, 8, 32], strides = [1, 1, 1]} : vector<16x8x128xf32> to vector<16x8x32xf32>
    %cst_32 = arith.constant dense<0.000000e+00> : vector<16x8xf32>
    %85 = vector.multi_reduction <add>, %84, %cst_32 [2] : vector<16x8x32xf32> to vector<16x8xf32>
    %cst_33 = arith.constant 0.176776692 : f32
    %86 = vector.broadcast %cst_33 : f32 to vector<16x8xf32>
    %87 = arith.mulf %85, %86 : vector<16x8xf32>
    %cst_34 = arith.constant dense<0xFF800000> : vector<16xf32>
    %88 = vector.multi_reduction <maximumf>, %87, %cst_34 [1] : vector<16x8xf32> to vector<16xf32>
    %89 = vector.shape_cast %88 : vector<16xf32> to vector<16x1xf32>
    %90 = vector.broadcast %89 : vector<16x1xf32> to vector<16x8xf32>
    %91 = arith.subf %87, %90 : vector<16x8xf32>
    %92 = math.exp %91 : vector<16x8xf32>
    %cst_35 = arith.constant dense<0.000000e+00> : vector<16xf32>
    %93 = vector.multi_reduction <add>, %92, %cst_35 [1] : vector<16x8xf32> to vector<16xf32>
    %94 = vector.shape_cast %93 : vector<16xf32> to vector<16x1xf32>
    %95 = tpu.reciprocal %94 {approx = true} : vector<16x1xf32> -> vector<16x1xf32>
    %96 = vector.broadcast %95 : vector<16x1xf32> to vector<16x8xf32>
    %97 = arith.mulf %92, %96 : vector<16x8xf32>
    %98 = arith.addf %70, %97 : vector<16x8xf32>
    %99 = arith.mulf %85, %85 : vector<16x8xf32>
    %cst_36 = arith.constant dense<0.000000e+00> : vector<16xf32>
    %100 = vector.multi_reduction <add>, %99, %cst_36 [1] : vector<16x8xf32> to vector<16xf32>
    %101 = vector.shape_cast %100 : vector<16xf32> to vector<16x1xf32>
    %102 = arith.mulf %101, %26 : vector<16x1xf32>
    %cst_37 = arith.constant 9.99999993E-9 : f32
    %103 = vector.broadcast %cst_37 : f32 to vector<16x8xf32>
    %104 = arith.addf %97, %103 : vector<16x8xf32>
    %105 = math.log %104 : vector<16x8xf32>
    %106 = arith.mulf %105, %97 : vector<16x8xf32>
    %cst_38 = arith.constant dense<0.000000e+00> : vector<16xf32>
    %107 = vector.multi_reduction <add>, %106, %cst_38 [1] : vector<16x8xf32> to vector<16xf32>
    %108 = vector.shape_cast %107 : vector<16xf32> to vector<16x1xf32>
    %cst_39 = arith.constant 0.000000e+00 : f32
    %109 = vector.broadcast %cst_39 : f32 to vector<16x1xf32>
    %110 = arith.subf %109, %108 : vector<16x1xf32>
    %111 = arith.mulf %110, %26 : vector<16x1xf32>
    %112 = vector.extract_strided_slice %18 {offsets = [0, 0, 96], sizes = [16, 8, 32], strides = [1, 1, 1]} : vector<16x8x128xf32> to vector<16x8x32xf32>
    %cst_40 = arith.constant dense<0.000000e+00> : vector<16x8xf32>
    %113 = vector.multi_reduction <add>, %112, %cst_40 [2] : vector<16x8x32xf32> to vector<16x8xf32>
    %cst_41 = arith.constant 0.176776692 : f32
    %114 = vector.broadcast %cst_41 : f32 to vector<16x8xf32>
    %115 = arith.mulf %113, %114 : vector<16x8xf32>
    %cst_42 = arith.constant dense<0xFF800000> : vector<16xf32>
    %116 = vector.multi_reduction <maximumf>, %115, %cst_42 [1] : vector<16x8xf32> to vector<16xf32>
    %117 = vector.shape_cast %116 : vector<16xf32> to vector<16x1xf32>
    %118 = vector.broadcast %117 : vector<16x1xf32> to vector<16x8xf32>
    %119 = arith.subf %115, %118 : vector<16x8xf32>
    %120 = math.exp %119 : vector<16x8xf32>
    %cst_43 = arith.constant dense<0.000000e+00> : vector<16xf32>
    %121 = vector.multi_reduction <add>, %120, %cst_43 [1] : vector<16x8xf32> to vector<16xf32>
    %122 = vector.shape_cast %121 : vector<16xf32> to vector<16x1xf32>
    %123 = tpu.reciprocal %122 {approx = true} : vector<16x1xf32> -> vector<16x1xf32>
    %124 = vector.broadcast %123 : vector<16x1xf32> to vector<16x8xf32>
    %125 = arith.mulf %120, %124 : vector<16x8xf32>
    %126 = arith.addf %98, %125 : vector<16x8xf32>
    %127 = arith.mulf %113, %113 : vector<16x8xf32>
    %cst_44 = arith.constant dense<0.000000e+00> : vector<16xf32>
    %128 = vector.multi_reduction <add>, %127, %cst_44 [1] : vector<16x8xf32> to vector<16xf32>
    %129 = vector.shape_cast %128 : vector<16xf32> to vector<16x1xf32>
    %130 = arith.mulf %129, %26 : vector<16x1xf32>
    %cst_45 = arith.constant 9.99999993E-9 : f32
    %131 = vector.broadcast %cst_45 : f32 to vector<16x8xf32>
    %132 = arith.addf %125, %131 : vector<16x8xf32>
    %133 = math.log %132 : vector<16x8xf32>
    %134 = arith.mulf %133, %125 : vector<16x8xf32>
    %cst_46 = arith.constant dense<0.000000e+00> : vector<16xf32>
    %135 = vector.multi_reduction <add>, %134, %cst_46 [1] : vector<16x8xf32> to vector<16xf32>
    %136 = vector.shape_cast %135 : vector<16xf32> to vector<16x1xf32>
    %cst_47 = arith.constant 0.000000e+00 : f32
    %137 = vector.broadcast %cst_47 : f32 to vector<16x1xf32>
    %138 = arith.subf %137, %136 : vector<16x1xf32>
    %139 = arith.mulf %138, %26 : vector<16x1xf32>
    %c0_48 = arith.constant 0 : index
    %c0_49 = arith.constant 0 : index
    %140 = vector.load %arg9[%c0_48, %c0_49] : memref<16x8xf32, #tpu.memory_space<vmem>>, vector<16x8xf32>
    tpu.vector_store %arg9[%c0_48, %c0_49], %126 {strides = array<i32>} : memref<16x8xf32, #tpu.memory_space<vmem>>, vector<16x8xf32>,
    %c0_50 = arith.constant 0 : index
    %c0_51 = arith.constant 0 : index
    %141 = vector.load %arg7[%c0_50, %c0_51] : memref<1x32xf32, #tpu.memory_space<vmem>>, vector<1x32xf32>
    %142 = vector.broadcast %141 : vector<1x32xf32> to vector<16x32xf32>
    %143 = arith.mulf %10, %142 : vector<16x32xf32>
    %cst_52 = arith.constant dense<0.000000e+00> : vector<16xf32>
    %144 = vector.multi_reduction <add>, %143, %cst_52 [1] : vector<16x32xf32> to vector<16xf32>
    %145 = vector.shape_cast %144 : vector<16xf32> to vector<16x1xf32>
    %c0_53 = arith.constant 0 : index
    %c0_54 = arith.constant 0 : index
    %146 = vector.load %arg8[%c0_53, %c0_54] : memref<1x1xf32, #tpu.memory_space<vmem>>, vector<1x1xf32>
    %147 = vector.broadcast %146 : vector<1x1xf32> to vector<16x1xf32>
    %148 = arith.addf %145, %147 : vector<16x1xf32>
    %c0_55 = arith.constant 0 : index
    %c0_56 = arith.constant 0 : index
    %149 = vector.load %arg10[%c0_55, %c0_56] : memref<16x1xf32, #tpu.memory_space<vmem>>, vector<16x1xf32>
    tpu.vector_store %arg10[%c0_55, %c0_56], %148 {strides = array<i32>} : memref<16x1xf32, #tpu.memory_space<vmem>>, vector<16x1xf32>,
    %150 = tpu.concatenate %46, %74, %102, %130, %55, %83, %111, %139 in 1 : vector<16x1xf32>, vector<16x1xf32>, vector<16x1xf32>, vector<16x1xf32>, vector<16x1xf32>, vector<16x1xf32>, vector<16x1xf32>, vector<16x1xf32> -> vector<16x8xf32>
    %cst_57 = arith.constant dense<0.000000e+00> : vector<8xf32>
    %151 = vector.multi_reduction <add>, %150, %cst_57 [0] : vector<16x8xf32> to vector<8xf32>
    %152 = vector.shape_cast %151 : vector<8xf32> to vector<1x8xf32>
    %153 = vector.shape_cast %152 : vector<1x8xf32> to vector<1x8xf32>
    %154 = vector.broadcast %153 : vector<1x8xf32> to vector<8x8xf32>
    %c0_58 = arith.constant 0 : index
    %c0_59 = arith.constant 0 : index
    %155 = vector.load %arg11[%c0_58, %c0_59] : memref<8x8xf32, #tpu.memory_space<vmem>>, vector<8x8xf32>
    tpu.vector_store %arg11[%c0_58, %c0_59], %154 {strides = array<i32>} : memref<8x8xf32, #tpu.memory_space<vmem>>, vector<8x8xf32>,
    return
  }
  func.func @transform_0(%arg0: i32) -> (i32, i32) {
    %c0_i32 = arith.constant 0 : i32
    %c0_i32_0 = arith.constant 0 : i32
    return %arg0, %c0_i32 : i32, i32
  }
  func.func @transform_1(%arg0: i32) -> (i32, i32) {
    %c0_i32 = arith.constant 0 : i32
    %c0_i32_0 = arith.constant 0 : i32
    return %arg0, %c0_i32 : i32, i32
  }
  func.func @transform_2(%arg0: i32) -> (i32, i32) {
    %c0_i32 = arith.constant 0 : i32
    %c0_i32_0 = arith.constant 0 : i32
    %c0_i32_1 = arith.constant 0 : i32
    return %c0_i32, %c0_i32_0 : i32, i32
  }
  func.func @transform_3(%arg0: i32) -> (i32, i32) {
    %c0_i32 = arith.constant 0 : i32
    %c0_i32_0 = arith.constant 0 : i32
    %c0_i32_1 = arith.constant 0 : i32
    return %c0_i32, %c0_i32_0 : i32, i32
  }
  func.func @transform_4(%arg0: i32) -> (i32, i32) {
    %c0_i32 = arith.constant 0 : i32
    %c0_i32_0 = arith.constant 0 : i32
    %c0_i32_1 = arith.constant 0 : i32
    return %c0_i32, %c0_i32_0 : i32, i32
  }
  func.func @transform_5(%arg0: i32) -> (i32, i32) {
    %c0_i32 = arith.constant 0 : i32
    %c0_i32_0 = arith.constant 0 : i32
    %c0_i32_1 = arith.constant 0 : i32
    return %c0_i32, %c0_i32_0 : i32, i32
  }
  func.func @transform_6(%arg0: i32) -> (i32, i32) {
    %c0_i32 = arith.constant 0 : i32
    %c0_i32_0 = arith.constant 0 : i32
    %c0_i32_1 = arith.constant 0 : i32
    return %c0_i32, %c0_i32_0 : i32, i32
  }
  func.func @transform_7(%arg0: i32) -> (i32, i32) {
    %c0_i32 = arith.constant 0 : i32
    %c0_i32_0 = arith.constant 0 : i32
    %c0_i32_1 = arith.constant 0 : i32
    return %c0_i32, %c0_i32_0 : i32, i32
  }
  func.func @transform_8(%arg0: i32) -> (i32, i32) {
    %c0_i32 = arith.constant 0 : i32
    %c0_i32_0 = arith.constant 0 : i32
    return %arg0, %c0_i32 : i32, i32
  }
  func.func @transform_9(%arg0: i32) -> (i32, i32) {
    %c0_i32 = arith.constant 0 : i32
    %c0_i32_0 = arith.constant 0 : i32
    return %arg0, %c0_i32 : i32, i32
  }
  func.func @transform_10(%arg0: i32) -> (i32, i32) {
    %c0_i32 = arith.constant 0 : i32
    %c0_i32_0 = arith.constant 0 : i32
    return %arg0, %c0_i32 : i32, i32
  }
}

</mosaic_0001>

<llo_original>
// kernel: tpu_custom_call.1
$region0: #{tpu_custom_call.1}
  #allocation0 [shape = 'u32[]', space=smem, size = 0x4, offset = 0x4, fixed_abs, tag = 'smem constant byte address 0x4 - core index']
  #allocation1 [shape = 'u32[144,128]{1,0:T(1,128)}', space=vmem, size = 0x12000, scoped, tag = 'internal scratch']
  #allocation2 [shape = 'f32[1,1]{1,0:T(1,128)S(1)}', space=vmem, size = 0x200, scoped, tag = 'scoped memory for tpu_custom_call.1']
  %s0 = inlined_call_operand.vmem [shape: f32[16,160], index: 0, kind: input, shape index: {}]
  %s1 = inlined_call_operand.vmem [shape: f32[128,16], index: 1, kind: input, shape index: {}]
  %s2 = inlined_call_operand.hbm [shape: f32[160,288], index: 2, kind: input, shape index: {}]
  %s3 = inlined_call_operand.vmem [shape: f32[1,288], index: 3, kind: input, shape index: {}]
  %s4 = inlined_call_operand.hbm [shape: f32[256,128], index: 4, kind: input, shape index: {}]
  %s5 = inlined_call_operand.vmem [shape: f32[16,128], index: 5, kind: input, shape index: {}]
  %s6 = inlined_call_operand.vmem [shape: f32[1,32], index: 6, kind: input, shape index: {}]
  %s7 = inlined_call_operand.<no memory space> [shape: f32[1,1], index: 7, kind: input, shape index: {}]
  %s8 = inlined_call_operand.vmem [shape: f32[16,8], index: 8, kind: output, shape index: {0}]
  %s9 = inlined_call_operand.vmem [shape: f32[16,1], index: 9, kind: output, shape index: {1}]
  %s10 = inlined_call_operand.hbm [shape: f32[8,8], index: 10, kind: output, shape index: {2}]
  %11 = xla_tuple %s8, %s9, %s10
  %s12 = sld [smem:[#allocation0]]
  $region66: #{tpu_custom_call.1} parent=0
    _
  %s14 = ssub.s32 1, %s12
  %s15 = scalar_select 0, %s14, %s12
  %v16 = vstv %s7
  %17 = vst [vmem:[#allocation2] sm:$0x1] %v16
  $region1: #{tpu_custom_call.1} parent=0
    #allocation3 [shape = 'u8[245760]{0}', space=vmem, size = 0x3c000, scoped, tag = 'input window, operand 2, single buffered']
    #allocation4 [shape = 's32[1]{0}', space=sflag, size = 0x4, scoped, tag = 'scoped memory for tpu_custom_call.1']
    #allocation5 [shape = 's32[1]{0}', space=sflag, size = 0x4, scoped, tag = 'scoped memory for tpu_custom_call.1']
    #allocation6 [shape = 'u8[131072]{0}', space=vmem, size = 0x20000, scoped, tag = 'input window, operand 4, single buffered']
    #allocation7 [shape = 's32[1]{0}', space=sflag, size = 0x4, scoped, tag = 'scoped memory for tpu_custom_call.1']
    #allocation8 [shape = 'u8[4096]{0}', space=vmem, size = 0x1000, scoped, tag = 'output window, operand 2, single buffered']
    %18 = vsyncpa [#allocation4], 0
    %19 = vsyncpa [#allocation7], 0
    %20 = vsyncpa [#allocation5], 0
    // Predicated region
    $region2: #{tpu_custom_call.1} parent=1 // pred_check
      _
    $region3: #{tpu_custom_call.1} parent=1 // pred_check_branch
      %22 = sbr.rel (0) target = $region5
    $region4: #{tpu_custom_call.1} parent=1 // pred_region
      _
    $region5: #{tpu_custom_call.1} parent=1 // pred_fallthru
      _
    // Predicated region
    $region6: #{tpu_custom_call.1} parent=1 // pred_check
      _
    $region7: #{tpu_custom_call.1} parent=1 // pred_check_branch
      %24 = sbr.rel (0) target = $region9
    $region8: #{tpu_custom_call.1} parent=1 // pred_region
      _
    $region9: #{tpu_custom_call.1} parent=1 // pred_fallthru
      _
    // Predicated region
    $region10: #{tpu_custom_call.1} parent=1 // pred_check
      _
    $region11: #{tpu_custom_call.1} parent=1 // pred_check_branch
      %26 = sbr.rel (0) target = $region13
    $region12: #{tpu_custom_call.1} parent=1 // pred_region
      %s28 = ssub.s32 7680, 7680
      %29 = vsyncadd [#allocation4], %s28
      %s30 = sshll.u32 [#allocation3], 4
      %s31 = int_to_ptr.vmem [resolvable:$true] %s30
      %36 = dma.hbm_to_vmem [thread:$0]  %s2, 7680, %s31, [#allocation4], 384, 384, 24
    $region13: #{tpu_custom_call.1} parent=1 // pred_fallthru
      _
    // Predicated region
    $region14: #{tpu_custom_call.1} parent=1 // pred_check
      _
    $region15: #{tpu_custom_call.1} parent=1 // pred_check_branch
      %38 = sbr.rel (0) target = $region17
    $region16: #{tpu_custom_call.1} parent=1 // pred_region
      _
    $region17: #{tpu_custom_call.1} parent=1 // pred_fallthru
      _
    // Predicated region
    $region18: #{tpu_custom_call.1} parent=1 // pred_check
      _
    $region19: #{tpu_custom_call.1} parent=1 // pred_check_branch
      %40 = sbr.rel (0) target = $region21
    $region20: #{tpu_custom_call.1} parent=1 // pred_region
      %s42 = ssub.s32 4096, 4096
      %43 = vsyncadd [#allocation7], %s42
      %s44 = sshll.u32 [#allocation6], 4
      %s45 = int_to_ptr.vmem [resolvable:$true] %s44
      %50 = dma.hbm_to_vmem [thread:$0]  %s4, 4096, %s45, [#allocation7], 128, 128, 8
    $region21: #{tpu_custom_call.1} parent=1 // pred_fallthru
      _
    // Predicated region
    $region22: #{tpu_custom_call.1} parent=1 // pred_check
      _
    $region23: #{tpu_custom_call.1} parent=1 // pred_check_branch
      %52 = sbr.rel (0) target = $region25
    $region24: #{tpu_custom_call.1} parent=1 // pred_region
      _
    $region25: #{tpu_custom_call.1} parent=1 // pred_fallthru
      _
    // Predicated region
    $region26: #{tpu_custom_call.1} parent=1 // pred_check
      _
    $region27: #{tpu_custom_call.1} parent=1 // pred_check_branch
      %54 = sbr.rel (0) target = $region29
    $region28: #{tpu_custom_call.1} parent=1 // pred_region
      _
    $region29: #{tpu_custom_call.1} parent=1 // pred_fallthru
      _
    // Predicated region
    $region30: #{tpu_custom_call.1} parent=1 // pred_check
      _
    $region31: #{tpu_custom_call.1} parent=1 // pred_check_branch
      %56 = sbr.rel (0) target = $region33
    $region32: #{tpu_custom_call.1} parent=1 // pred_region
      _
    $region33: #{tpu_custom_call.1} parent=1 // pred_fallthru
      _
    // Predicated region
    $region34: #{tpu_custom_call.1} parent=1 // pred_check
      _
    $region35: #{tpu_custom_call.1} parent=1 // pred_check_branch
      %58 = sbr.rel (0) target = $region37
    $region36: #{tpu_custom_call.1} parent=1 // pred_region
      %59 = dma.done [#allocation4], 7680
    $region37: #{tpu_custom_call.1} parent=1 // pred_fallthru
      _
    // Predicated region
    $region38: #{tpu_custom_call.1} parent=1 // pred_check
      _
    $region39: #{tpu_custom_call.1} parent=1 // pred_check_branch
      %61 = sbr.rel (0) target = $region41
    $region40: #{tpu_custom_call.1} parent=1 // pred_region
      %62 = dma.done [#allocation7], 4096
    $region41: #{tpu_custom_call.1} parent=1 // pred_fallthru
      _
    %v63 = vld [vmem:[%s0] sm:$0xff]
    %v64 = vld [vmem:[%s0 + $0x8] sm:$0xff]
    %v65 = vld [vmem:[%s0 + $0x10] sm:$0xff]
    %v66 = vld [vmem:[%s0 + $0x18] sm:$0xff]
    %v67 = vld [vmem:[%s1] sm:$0xff]
    %v68 = vld [vmem:[%s1 + $0x8] sm:$0xff]
    %v69 = vld [vmem:[%s1 + $0x10] sm:$0xff]
    %v70 = vld [vmem:[%s1 + $0x18] sm:$0xff]
    %v71 = vld [vmem:[%s1 + $0x20] sm:$0xff]
    %v72 = vld [vmem:[%s1 + $0x28] sm:$0xff]
    %v73 = vld [vmem:[%s1 + $0x30] sm:$0xff]
    %v74 = vld [vmem:[%s1 + $0x38] sm:$0xff]
    %v75 = vld [vmem:[%s1 + $0x40] sm:$0xff]
    %v76 = vld [vmem:[%s1 + $0x48] sm:$0xff]
    %v77 = vld [vmem:[%s1 + $0x50] sm:$0xff]
    %v78 = vld [vmem:[%s1 + $0x58] sm:$0xff]
    %v79 = vld [vmem:[%s1 + $0x60] sm:$0xff]
    %v80 = vld [vmem:[%s1 + $0x68] sm:$0xff]
    %v81 = vld [vmem:[%s1 + $0x70] sm:$0xff]
    %v82 = vld [vmem:[%s1 + $0x78] sm:$0xff]
    %v83 = vld [vmem:[#allocation3] sm:$0xff]
    %v84 = vld [vmem:[#allocation3 + $0x8] sm:$0xff]
    %v85 = vld [vmem:[#allocation3 + $0x10] sm:$0xff]
    %v86 = vld [vmem:[#allocation3 + $0x18] sm:$0xff]
    %v87 = vld [vmem:[#allocation3 + $0x20] sm:$0xff]
    %v88 = vld [vmem:[#allocation3 + $0x28] sm:$0xff]
    %v89 = vld [vmem:[#allocation3 + $0x30] sm:$0xff]
    %v90 = vld [vmem:[#allocation3 + $0x38] sm:$0xff]
    %v91 = vld [vmem:[#allocation3 + $0x40] sm:$0xff]
    %v92 = vld [vmem:[#allocation3 + $0x48] sm:$0xff]
    %v93 = vld [vmem:[#allocation3 + $0x50] sm:$0xff]
    %v94 = vld [vmem:[#allocation3 + $0x58] sm:$0xff]
    %v95 = vld [vmem:[#allocation3 + $0x60] sm:$0xff]
    %v96 = vld [vmem:[#allocation3 + $0x68] sm:$0xff]
    %v97 = vld [vmem:[#allocation3 + $0x70] sm:$0xff]
    %v98 = vld [vmem:[#allocation3 + $0x78] sm:$0xff]
    %v99 = vld [vmem:[#allocation3 + $0x80] sm:$0xff]
    %v100 = vld [vmem:[#allocation3 + $0x88] sm:$0xff]
    %v101 = vld [vmem:[#allocation3 + $0x90] sm:$0xff]
    %v102 = vld [vmem:[#allocation3 + $0x98] sm:$0xff]
    %v103 = vld [vmem:[#allocation3 + $0xa0] sm:$0xff]
    %v104 = vld [vmem:[#allocation3 + $0xa8] sm:$0xff]
    %v105 = vld [vmem:[#allocation3 + $0xb0] sm:$0xff]
    %v106 = vld [vmem:[#allocation3 + $0xb8] sm:$0xff]
    %v107 = vld [vmem:[#allocation3 + $0xc0] sm:$0xff]
    %v108 = vld [vmem:[#allocation3 + $0xc8] sm:$0xff]
    %v109 = vld [vmem:[#allocation3 + $0xd0] sm:$0xff]
    %v110 = vld [vmem:[#allocation3 + $0xd8] sm:$0xff]
    %v111 = vld [vmem:[#allocation3 + $0xe0] sm:$0xff]
    %v112 = vld [vmem:[#allocation3 + $0xe8] sm:$0xff]
    %v113 = vld [vmem:[#allocation3 + $0xf0] sm:$0xff]
    %v114 = vld [vmem:[#allocation3 + $0xf8] sm:$0xff]
    %v115 = vld [vmem:[#allocation3 + $0x100] sm:$0xff]
    %v116 = vld [vmem:[#allocation3 + $0x108] sm:$0xff]
    %v117 = vld [vmem:[#allocation3 + $0x110] sm:$0xff]
    %v118 = vld [vmem:[#allocation3 + $0x118] sm:$0xff]
    %v119 = vld [vmem:[#allocation3 + $0x120] sm:$0xff]
    %v120 = vld [vmem:[#allocation3 + $0x128] sm:$0xff]
    %v121 = vld [vmem:[#allocation3 + $0x130] sm:$0xff]
    %v122 = vld [vmem:[#allocation3 + $0x138] sm:$0xff]
    %v123 = vld [vmem:[#allocation3 + $0x140] sm:$0xff]
    %v124 = vld [vmem:[#allocation3 + $0x148] sm:$0xff]
    %v125 = vld [vmem:[#allocation3 + $0x150] sm:$0xff]
    %v126 = vld [vmem:[#allocation3 + $0x158] sm:$0xff]
    %v127 = vld [vmem:[#allocation3 + $0x160] sm:$0xff]
    %v128 = vld [vmem:[#allocation3 + $0x168] sm:$0xff]
    %v129 = vld [vmem:[#allocation3 + $0x170] sm:$0xff]
    %v130 = vld [vmem:[#allocation3 + $0x178] sm:$0xff]
    %v131 = vld [vmem:[#allocation3 + $0x180] sm:$0xff]
    %v132 = vld [vmem:[#allocation3 + $0x188] sm:$0xff]
    %v133 = vld [vmem:[#allocation3 + $0x190] sm:$0xff]
    %v134 = vld [vmem:[#allocation3 + $0x198] sm:$0xff]
    %v135 = vld [vmem:[#allocation3 + $0x1a0] sm:$0xff]
    %v136 = vld [vmem:[#allocation3 + $0x1a8] sm:$0xff]
    %v137 = vld [vmem:[#allocation3 + $0x1b0] sm:$0xff]
    %v138 = vld [vmem:[#allocation3 + $0x1b8] sm:$0xff]
    %v139 = vld [vmem:[#allocation3 + $0x1c0] sm:$0xff]
    %v140 = vld [vmem:[#allocation3 + $0x1c8] sm:$0xff]
    %v141 = vld [vmem:[#allocation3 + $0x1d0] sm:$0xff]
    %v142 = vld [vmem:[#allocation3 + $0x1d8] sm:$0xff]
    %v143 = vld [vmem:[%s3] sm:$0x7]
    %v145 = vlaneseq
    %v146 = vshrl.u32 %v145, 7
    %v147 = vsub.s32 0, %v146
    %v148 = vrot.slane %v143, %v147
    %v149 = vlaneseq
    %v150 = vshrl.u32 %v149, 7
    %v151 = vsub.s32 1, %v150
    %v152 = vrot.slane %v143, %v151
    %v153 = vlaneseq
    %v154 = vshrl.u32 %v153, 7
    %v155 = vsub.s32 2, %v154
    %v156 = vrot.slane %v143, %v155
    %vm160 = vcmask 261120
    %v162 = vsel %vm160, %v64, 0
    %v165 = vsel %vm160, %v66, 0
    %167 = vmatprep.subr.mxu0 %v84
    %168 = vmatpush1.msra.mxu0 %v83
    %169 = vmatprep.subr.mxu0 %v87
    %170 = vmatpush1.msra.mxu0 %v86
    %171 = vmatprep.subr.mxu0 %v90
    %172 = vmatpush1.msra.mxu0 %v89
    %173 = vmatprep.subr.mxu0 %v93
    %174 = vmatpush1.msra.mxu0 %v92
    %175 = vmatprep.subr.mxu0 %v96
    %176 = vmatpush1.msra.mxu0 %v95
    %177 = vmatprep.subr.mxu0 %v99
    %178 = vmatpush1.msra.mxu0 %v98
    %179 = vmatprep.subr.mxu0 %v102
    %180 = vmatpush1.msra.mxu0 %v101
    %181 = vmatprep.subr.mxu0 %v105
    %182 = vmatpush1.msra.mxu0 %v104
    %183 = vmatprep.subr.mxu0 %v108
    %184 = vmatpush1.msra.mxu0 %v107
    %185 = vmatprep.subr.mxu0 %v111
    %186 = vmatpush1.msra.mxu0 %v110
    %187 = vmatprep.subr.mxu0 %v114
    %188 = vmatpush1.msra.mxu0 %v113
    %189 = vmatprep.subr.mxu0 %v117
    %190 = vmatpush1.msra.mxu0 %v116
    %191 = vmatprep.subr.mxu0 %v120
    %192 = vmatpush1.msra.mxu0 %v119
    %193 = vmatprep.subr.mxu0 %v123
    %194 = vmatpush1.msra.mxu0 %v122
    %195 = vmatprep.subr.mxu0 %v126
    %196 = vmatpush1.msra.mxu0 %v125
    %197 = vmatprep.subr.mxu0 %v129
    %198 = vmatpush1.msra.mxu0 %v128
    %199 = vmatprep.subr.mxu0 %v132
    %200 = vmatpush1.msra.mxu0 %v131
    %201 = vmatprep.subr.mxu0 %v135
    %202 = vmatpush1.msra.mxu0 %v134
    %203 = vmatprep.subr.mxu0 %v138
    %204 = vmatpush1.msra.mxu0 %v137
    %205 = vmatprep.subr.mxu0 %v141
    %206 = vmatpush1.msra.mxu0 %v140
    %207 = vmatprep.subr.mxu0 0.0
    %208 = vmatpush1.msra.mxu0 0.0
    %209 = vmatprep.subr.mxu0 0.0
    %210 = vmatpush1.msra.mxu0 0.0
    %211 = vmatprep.subr.mxu0 0.0
    %212 = vmatpush1.msra.mxu0 0.0
    %213 = vmatprep.subr.mxu0 0.0
    %214 = vmatpush1.msra.mxu0 0.0
    %215 = vmatprep.subr.mxu0 0.0
    %216 = vmatpush1.msra.mxu0 0.0
    %217 = vmatprep.subr.mxu0 0.0
    %218 = vmatpush1.msra.mxu0 0.0
    %219 = vmatprep.subr.mxu0 0.0
    %220 = vmatpush1.msra.mxu0 0.0
    %221 = vmatprep.subr.mxu0 0.0
    %222 = vmatpush1.msra.mxu0 0.0
    %223 = vmatprep.subr.mxu0 0.0
    %224 = vmatpush1.msra.mxu0 0.0
    %225 = vmatprep.subr.mxu0 0.0
    %226 = vmatpush1.msra.mxu0 0.0
    %227 = vmatprep.subr.mxu0 0.0
    %228 = vmatpush1.msra.mxu0 0.0
    %229 = vmatprep.subr.mxu0 0.0
    %230 = vmatpush1.msra.mxu0 0.0
    %231 = vmatprep.mubr.f32.mxu0 %v162
    %232 = vmatmul.mubr.f32.gmra.mrb[0].mxu0 %v63
    %v233 = vpop.f32.mrb[0].mxu0
    %v234 = vadd.f32 %v148, %v233
    %v235 = vpop.f32.mrb[0].mxu0
    %v236 = vadd.f32 %v152, %v235
    %237 = vmatprep.mubr.f32.mxu0 %v165
    %238 = vmatmul.mubr.f32.gmra.mrb[0].mxu0 %v65
    %v239 = vpop.f32.mrb[0].mxu0
    %v240 = vadd.f32 %v148, %v239
    %v241 = vpop.f32.mrb[0].mxu0
    %v242 = vadd.f32 %v152, %v241
    %243 = vdwg.mxu0
    %244 = vmatprep.subr.mxu0 0.0
    %245 = vmatpush1.msra.mxu0 %v85
    %246 = vmatprep.subr.mxu0 0.0
    %247 = vmatpush1.msra.mxu0 %v88
    %248 = vmatprep.subr.mxu0 0.0
    %249 = vmatpush1.msra.mxu0 %v91
    %250 = vmatprep.subr.mxu0 0.0
    %251 = vmatpush1.msra.mxu0 %v94
    %252 = vmatprep.subr.mxu0 0.0
    %253 = vmatpush1.msra.mxu0 %v97
    %254 = vmatprep.subr.mxu0 0.0
    %255 = vmatpush1.msra.mxu0 %v100
    %256 = vmatprep.subr.mxu0 0.0
    %257 = vmatpush1.msra.mxu0 %v103
    %258 = vmatprep.subr.mxu0 0.0
    %259 = vmatpush1.msra.mxu0 %v106
    %260 = vmatprep.subr.mxu0 0.0
    %261 = vmatpush1.msra.mxu0 %v109
    %262 = vmatprep.subr.mxu0 0.0
    %263 = vmatpush1.msra.mxu0 %v112
    %264 = vmatprep.subr.mxu0 0.0
    %265 = vmatpush1.msra.mxu0 %v115
    %266 = vmatprep.subr.mxu0 0.0
    %267 = vmatpush1.msra.mxu0 %v118
    %268 = vmatprep.subr.mxu0 0.0
    %269 = vmatpush1.msra.mxu0 %v121
    %270 = vmatprep.subr.mxu0 0.0
    %271 = vmatpush1.msra.mxu0 %v124
    %272 = vmatprep.subr.mxu0 0.0
    %273 = vmatpush1.msra.mxu0 %v127
    %274 = vmatprep.subr.mxu0 0.0
    %275 = vmatpush1.msra.mxu0 %v130
    %276 = vmatprep.subr.mxu0 0.0
    %277 = vmatpush1.msra.mxu0 %v133
    %278 = vmatprep.subr.mxu0 0.0
    %279 = vmatpush1.msra.mxu0 %v136
    %280 = vmatprep.subr.mxu0 0.0
    %281 = vmatpush1.msra.mxu0 %v139
    %282 = vmatprep.subr.mxu0 0.0
    %283 = vmatpush1.msra.mxu0 %v142
    %284 = vmatprep.subr.mxu0 0.0
    %285 = vmatpush1.msra.mxu0 0.0
    %286 = vmatprep.subr.mxu0 0.0
    %287 = vmatpush1.msra.mxu0 0.0
    %288 = vmatprep.subr.mxu0 0.0
    %289 = vmatpush1.msra.mxu0 0.0
    %290 = vmatprep.subr.mxu0 0.0
    %291 = vmatpush1.msra.mxu0 0.0
    %292 = vmatprep.subr.mxu0 0.0
    %293 = vmatpush1.msra.mxu0 0.0
    %294 = vmatprep.subr.mxu0 0.0
    %295 = vmatpush1.msra.mxu0 0.0
    %296 = vmatprep.subr.mxu0 0.0
    %297 = vmatpush1.msra.mxu0 0.0
    %298 = vmatprep.subr.mxu0 0.0
    %299 = vmatpush1.msra.mxu0 0.0
    %300 = vmatprep.subr.mxu0 0.0
    %301 = vmatpush1.msra.mxu0 0.0
    %302 = vmatprep.subr.mxu0 0.0
    %303 = vmatpush1.msra.mxu0 0.0
    %304 = vmatprep.subr.mxu0 0.0
    %305 = vmatpush1.msra.mxu0 0.0
    %306 = vmatprep.subr.mxu0 0.0
    %307 = vmatpush1.msra.mxu0 0.0
    %308 = vmatprep.mubr.f32.mxu0 %v162
    %309 = vmatmul.mubr.f32.gmra.mrb[0].mxu0 %v63
    %v310 = vpop.f32.mrb[0].mxu0
    %v311 = vadd.f32 %v156, %v310
    %v312 = vpop.f32.mrb[0].mxu0
    %313 = vmatprep.mubr.f32.mxu0 %v165
    %314 = vmatmul.mubr.f32.gmra.mrb[0].mxu0 %v65
    %v315 = vpop.f32.mrb[0].mxu0
    %v316 = vadd.f32 %v156, %v315
    %v317 = vpop.f32.mrb[0].mxu0
    %318 = vdwg.mxu0
    %v319 = vmax.f32 %v234, 0.0
    %v320 = vmax.f32 %v236, 0.0
    %v321 = vmax.f32 %v311, 0.0
    %v322 = vmax.f32 %v240, 0.0
    %v323 = vmax.f32 %v242, 0.0
    %v324 = vmax.f32 %v316, 0.0
    %v325 = vld [vmem:[#allocation6] sm:$0xff]
    %v326 = vld [vmem:[#allocation6 + $0x8] sm:$0xff]
    %v327 = vld [vmem:[#allocation6 + $0x10] sm:$0xff]
    %v328 = vld [vmem:[#allocation6 + $0x18] sm:$0xff]
    %v329 = vld [vmem:[#allocation6 + $0x20] sm:$0xff]
    %v330 = vld [vmem:[#allocation6 + $0x28] sm:$0xff]
    %v331 = vld [vmem:[#allocation6 + $0x30] sm:$0xff]
    %v332 = vld [vmem:[#allocation6 + $0x38] sm:$0xff]
    %v333 = vld [vmem:[#allocation6 + $0x40] sm:$0xff]
    %v334 = vld [vmem:[#allocation6 + $0x48] sm:$0xff]
    %v335 = vld [vmem:[#allocation6 + $0x50] sm:$0xff]
    %v336 = vld [vmem:[#allocation6 + $0x58] sm:$0xff]
    %v337 = vld [vmem:[#allocation6 + $0x60] sm:$0xff]
    %v338 = vld [vmem:[#allocation6 + $0x68] sm:$0xff]
    %v339 = vld [vmem:[#allocation6 + $0x70] sm:$0xff]
    %v340 = vld [vmem:[#allocation6 + $0x78] sm:$0xff]
    %v341 = vld [vmem:[#allocation6 + $0x80] sm:$0xff]
    %v342 = vld [vmem:[#allocation6 + $0x88] sm:$0xff]
    %v343 = vld [vmem:[#allocation6 + $0x90] sm:$0xff]
    %v344 = vld [vmem:[#allocation6 + $0x98] sm:$0xff]
    %v345 = vld [vmem:[#allocation6 + $0xa0] sm:$0xff]
    %v346 = vld [vmem:[#allocation6 + $0xa8] sm:$0xff]
    %v347 = vld [vmem:[#allocation6 + $0xb0] sm:$0xff]
    %v348 = vld [vmem:[#allocation6 + $0xb8] sm:$0xff]
    %v349 = vld [vmem:[#allocation6 + $0xc0] sm:$0xff]
    %v350 = vld [vmem:[#allocation6 + $0xc8] sm:$0xff]
    %v351 = vld [vmem:[#allocation6 + $0xd0] sm:$0xff]
    %v352 = vld [vmem:[#allocation6 + $0xd8] sm:$0xff]
    %v353 = vld [vmem:[#allocation6 + $0xe0] sm:$0xff]
    %v354 = vld [vmem:[#allocation6 + $0xe8] sm:$0xff]
    %v355 = vld [vmem:[#allocation6 + $0xf0] sm:$0xff]
    %v356 = vld [vmem:[#allocation6 + $0xf8] sm:$0xff]
    %357 = vmatprep.subr.mxu0 0.0
    %358 = vmatpush1.msra.mxu0 %v325
    %359 = vmatprep.subr.mxu0 0.0
    %360 = vmatpush1.msra.mxu0 %v326
    %361 = vmatprep.subr.mxu0 0.0
    %362 = vmatpush1.msra.mxu0 %v327
    %363 = vmatprep.subr.mxu0 0.0
    %364 = vmatpush1.msra.mxu0 %v328
    %365 = vmatprep.subr.mxu0 0.0
    %366 = vmatpush1.msra.mxu0 %v329
    %367 = vmatprep.subr.mxu0 0.0
    %368 = vmatpush1.msra.mxu0 %v330
    %369 = vmatprep.subr.mxu0 0.0
    %370 = vmatpush1.msra.mxu0 %v331
    %371 = vmatprep.subr.mxu0 0.0
    %372 = vmatpush1.msra.mxu0 %v332
    %373 = vmatprep.subr.mxu0 0.0
    %374 = vmatpush1.msra.mxu0 %v333
    %375 = vmatprep.subr.mxu0 0.0
    %376 = vmatpush1.msra.mxu0 %v334
    %377 = vmatprep.subr.mxu0 0.0
    %378 = vmatpush1.msra.mxu0 %v335
    %379 = vmatprep.subr.mxu0 0.0
    %380 = vmatpush1.msra.mxu0 %v336
    %381 = vmatprep.subr.mxu0 0.0
    %382 = vmatpush1.msra.mxu0 %v337
    %383 = vmatprep.subr.mxu0 0.0
    %384 = vmatpush1.msra.mxu0 %v338
    %385 = vmatprep.subr.mxu0 0.0
    %386 = vmatpush1.msra.mxu0 %v339
    %387 = vmatprep.subr.mxu0 0.0
    %388 = vmatpush1.msra.mxu0 %v340
    %389 = vmatprep.subr.mxu0 0.0
    %390 = vmatpush1.msra.mxu0 %v341
    %391 = vmatprep.subr.mxu0 0.0
    %392 = vmatpush1.msra.mxu0 %v342
    %393 = vmatprep.subr.mxu0 0.0
    %394 = vmatpush1.msra.mxu0 %v343
    %395 = vmatprep.subr.mxu0 0.0
    %396 = vmatpush1.msra.mxu0 %v344
    %397 = vmatprep.subr.mxu0 0.0
    %398 = vmatpush1.msra.mxu0 %v345
    %399 = vmatprep.subr.mxu0 0.0
    %400 = vmatpush1.msra.mxu0 %v346
    %401 = vmatprep.subr.mxu0 0.0
    %402 = vmatpush1.msra.mxu0 %v347
    %403 = vmatprep.subr.mxu0 0.0
    %404 = vmatpush1.msra.mxu0 %v348
    %405 = vmatprep.subr.mxu0 0.0
    %406 = vmatpush1.msra.mxu0 %v349
    %407 = vmatprep.subr.mxu0 0.0
    %408 = vmatpush1.msra.mxu0 %v350
    %409 = vmatprep.subr.mxu0 0.0
    %410 = vmatpush1.msra.mxu0 %v351
    %411 = vmatprep.subr.mxu0 0.0
    %412 = vmatpush1.msra.mxu0 %v352
    %413 = vmatprep.subr.mxu0 0.0
    %414 = vmatpush1.msra.mxu0 %v353
    %415 = vmatprep.subr.mxu0 0.0
    %416 = vmatpush1.msra.mxu0 %v354
    %417 = vmatprep.subr.mxu0 0.0
    %418 = vmatpush1.msra.mxu0 %v355
    %419 = vmatprep.subr.mxu0 0.0
    %420 = vmatpush1.msra.mxu0 %v356
    %421 = vmatprep.mubr.f32.mxu0 %v320
    %422 = vmatmul.mubr.f32.gmra.mrb[0].mxu0 %v319
    %v423 = vpop.f32.mrb[0].mxu0
    %v424 = vadd.f32 0.0, %v423
    %v425 = vpop.f32.mrb[0].mxu0
    %426 = vmatprep.mubr.f32.mxu0 %v323
    %427 = vmatmul.mubr.f32.gmra.mrb[0].mxu0 %v322
    %v428 = vpop.f32.mrb[0].mxu0
    %v429 = vadd.f32 0.0, %v428
    %v430 = vpop.f32.mrb[0].mxu0
    %431 = vdwg.mxu0
    %v432 = vld [vmem:[%s5] sm:$0xff]
    %v433 = vld [vmem:[%s5 + $0x8] sm:$0xff]
    %vm434 = vcmask 130048
    %v436 = vsel %vm434, %v67, 0
    %v439 = vsel %vm434, %v68, 0
    %v442 = vsel %vm434, %v69, 0
    %v445 = vsel %vm434, %v70, 0
    %v448 = vsel %vm434, %v71, 0
    %v451 = vsel %vm434, %v72, 0
    %v454 = vsel %vm434, %v73, 0
    %v457 = vsel %vm434, %v74, 0
    %v460 = vsel %vm434, %v75, 0
    %v463 = vsel %vm434, %v76, 0
    %v466 = vsel %vm434, %v77, 0
    %v469 = vsel %vm434, %v78, 0
    %v472 = vsel %vm434, %v79, 0
    %v475 = vsel %vm434, %v80, 0
    %v478 = vsel %vm434, %v81, 0
    %v481 = vsel %vm434, %v82, 0
    %483 = vmatprep.subr.mxu0 0.0
    %484 = vmatpush1.msra.mxu0 %v432
    %485 = vmatprep.subr.mxu0 0.0
    %486 = vmatpush1.msra.mxu0 %v433
    %487 = vmatprep.subr.mxu0 0.0
    %488 = vmatpush1.msra.mxu0 0.0
    %489 = vmatprep.subr.mxu0 0.0
    %490 = vmatpush1.msra.mxu0 0.0
    %491 = vmatprep.subr.mxu0 0.0
    %492 = vmatpush1.msra.mxu0 0.0
    %493 = vmatprep.subr.mxu0 0.0
    %494 = vmatpush1.msra.mxu0 0.0
    %495 = vmatprep.subr.mxu0 0.0
    %496 = vmatpush1.msra.mxu0 0.0
    %497 = vmatprep.subr.mxu0 0.0
    %498 = vmatpush1.msra.mxu0 0.0
    %499 = vmatprep.subr.mxu0 0.0
    %500 = vmatpush1.msra.mxu0 0.0
    %501 = vmatprep.subr.mxu0 0.0
    %502 = vmatpush1.msra.mxu0 0.0
    %503 = vmatprep.subr.mxu0 0.0
    %504 = vmatpush1.msra.mxu0 0.0
    %505 = vmatprep.subr.mxu0 0.0
    %506 = vmatpush1.msra.mxu0 0.0
    %507 = vmatprep.subr.mxu0 0.0
    %508 = vmatpush1.msra.mxu0 0.0
    %509 = vmatprep.subr.mxu0 0.0
    %510 = vmatpush1.msra.mxu0 0.0
    %511 = vmatprep.subr.mxu0 0.0
    %512 = vmatpush1.msra.mxu0 0.0
    %513 = vmatprep.subr.mxu0 0.0
    %514 = vmatpush1.msra.mxu0 0.0
    %515 = vmatprep.subr.mxu0 0.0
    %516 = vmatpush1.msra.mxu0 0.0
    %517 = vmatprep.subr.mxu0 0.0
    %518 = vmatpush1.msra.mxu0 0.0
    %519 = vmatprep.subr.mxu0 0.0
    %520 = vmatpush1.msra.mxu0 0.0
    %521 = vmatprep.subr.mxu0 0.0
    %522 = vmatpush1.msra.mxu0 0.0
    %523 = vmatprep.subr.mxu0 0.0
    %524 = vmatpush1.msra.mxu0 0.0
    %525 = vmatprep.subr.mxu0 0.0
    %526 = vmatpush1.msra.mxu0 0.0
    %527 = vmatprep.subr.mxu0 0.0
    %528 = vmatpush1.msra.mxu0 0.0
    %529 = vmatprep.subr.mxu0 0.0
    %530 = vmatpush1.msra.mxu0 0.0
    %531 = vmatprep.subr.mxu0 0.0
    %532 = vmatpush1.msra.mxu0 0.0
    %533 = vmatprep.subr.mxu0 0.0
    %534 = vmatpush1.msra.mxu0 0.0
    %535 = vmatprep.subr.mxu0 0.0
    %536 = vmatpush1.msra.mxu0 0.0
    %537 = vmatprep.subr.mxu0 0.0
    %538 = vmatpush1.msra.mxu0 0.0
    %539 = vmatprep.subr.mxu0 0.0
    %540 = vmatpush1.msra.mxu0 0.0
    %541 = vmatprep.subr.mxu0 0.0
    %542 = vmatpush1.msra.mxu0 0.0
    %543 = vmatprep.subr.mxu0 0.0
    %544 = vmatpush1.msra.mxu0 0.0
    %545 = vmatprep.subr.mxu0 0.0
    %546 = vmatpush1.msra.mxu0 0.0
    %547 = vmatprep.mubr.f32.mxu0 0.0
    %548 = vmatmul.mubr.f32.gmra.mrb[0].mxu0 %v436
    %v549 = vpop.f32.mrb[0].mxu0
    %v550 = vadd.f32 0.0, %v549
    %v551 = vpop.f32.mrb[0].mxu0
    %552 = vmatprep.mubr.f32.mxu0 0.0
    %553 = vmatmul.mubr.f32.gmra.mrb[0].mxu0 %v439
    %v554 = vpop.f32.mrb[0].mxu0
    %v555 = vadd.f32 0.0, %v554
    %v556 = vpop.f32.mrb[0].mxu0
    %557 = vmatprep.mubr.f32.mxu0 0.0
    %558 = vmatmul.mubr.f32.gmra.mrb[0].mxu0 %v442
    %v559 = vpop.f32.mrb[0].mxu0
    %v560 = vadd.f32 0.0, %v559
    %v561 = vpop.f32.mrb[0].mxu0
    %562 = vmatprep.mubr.f32.mxu0 0.0
    %563 = vmatmul.mubr.f32.gmra.mrb[0].mxu0 %v445
    %v564 = vpop.f32.mrb[0].mxu0
    %v565 = vadd.f32 0.0, %v564
    %v566 = vpop.f32.mrb[0].mxu0
    %567 = vmatprep.mubr.f32.mxu0 0.0
    %568 = vmatmul.mubr.f32.gmra.mrb[0].mxu0 %v448
    %v569 = vpop.f32.mrb[0].mxu0
    %v570 = vadd.f32 0.0, %v569
    %v571 = vpop.f32.mrb[0].mxu0
    %572 = vmatprep.mubr.f32.mxu0 0.0
    %573 = vmatmul.mubr.f32.gmra.mrb[0].mxu0 %v451
    %v574 = vpop.f32.mrb[0].mxu0
    %v575 = vadd.f32 0.0, %v574
    %v576 = vpop.f32.mrb[0].mxu0
    %577 = vmatprep.mubr.f32.mxu0 0.0
    %578 = vmatmul.mubr.f32.gmra.mrb[0].mxu0 %v454
    %v579 = vpop.f32.mrb[0].mxu0
    %v580 = vadd.f32 0.0, %v579
    %v581 = vpop.f32.mrb[0].mxu0
    %582 = vmatprep.mubr.f32.mxu0 0.0
    %583 = vmatmul.mubr.f32.gmra.mrb[0].mxu0 %v457
    %v584 = vpop.f32.mrb[0].mxu0
    %v585 = vadd.f32 0.0, %v584
    %v586 = vpop.f32.mrb[0].mxu0
    %587 = vmatprep.mubr.f32.mxu0 0.0
    %588 = vmatmul.mubr.f32.gmra.mrb[0].mxu0 %v460
    %v589 = vpop.f32.mrb[0].mxu0
    %v590 = vadd.f32 0.0, %v589
    %v591 = vpop.f32.mrb[0].mxu0
    %592 = vmatprep.mubr.f32.mxu0 0.0
    %593 = vmatmul.mubr.f32.gmra.mrb[0].mxu0 %v463
    %v594 = vpop.f32.mrb[0].mxu0
    %v595 = vadd.f32 0.0, %v594
    %v596 = vpop.f32.mrb[0].mxu0
    %597 = vmatprep.mubr.f32.mxu0 0.0
    %598 = vmatmul.mubr.f32.gmra.mrb[0].mxu0 %v466
    %v599 = vpop.f32.mrb[0].mxu0
    %v600 = vadd.f32 0.0, %v599
    %v601 = vpop.f32.mrb[0].mxu0
    %602 = vmatprep.mubr.f32.mxu0 0.0
    %603 = vmatmul.mubr.f32.gmra.mrb[0].mxu0 %v469
    %v604 = vpop.f32.mrb[0].mxu0
    %v605 = vadd.f32 0.0, %v604
    %v606 = vpop.f32.mrb[0].mxu0
    %607 = vmatprep.mubr.f32.mxu0 0.0
    %608 = vmatmul.mubr.f32.gmra.mrb[0].mxu0 %v472
    %v609 = vpop.f32.mrb[0].mxu0
    %v610 = vadd.f32 0.0, %v609
    %v611 = vpop.f32.mrb[0].mxu0
    %612 = vmatprep.mubr.f32.mxu0 0.0
    %613 = vmatmul.mubr.f32.gmra.mrb[0].mxu0 %v475
    %v614 = vpop.f32.mrb[0].mxu0
    %v615 = vadd.f32 0.0, %v614
    %v616 = vpop.f32.mrb[0].mxu0
    %617 = vmatprep.mubr.f32.mxu0 0.0
    %618 = vmatmul.mubr.f32.gmra.mrb[0].mxu0 %v478
    %v619 = vpop.f32.mrb[0].mxu0
    %v620 = vadd.f32 0.0, %v619
    %v621 = vpop.f32.mrb[0].mxu0
    %622 = vmatprep.mubr.f32.mxu0 0.0
    %623 = vmatmul.mubr.f32.gmra.mrb[0].mxu0 %v481
    %v624 = vpop.f32.mrb[0].mxu0
    %v625 = vadd.f32 0.0, %v624
    %v626 = vpop.f32.mrb[0].mxu0
    %627 = vdwg.mxu0
    %v630 = vcombine.high %v424, %v424
    %v632 = vunpack.c.l.s4 1966171168
    %v633 = vunpack.c.0.s8 %v632
    %v634 = vlaneseq
    %v635 = vshrl.u32 %v634, 7
    %v636 = vsub.s32 %v633, %v635
    %v637 = vrot.slane %v424, %v636
    %v639 = vunpack.c.l.s4 1966171168
    %v640 = vunpack.c.0.s8 %v639
    %v641 = vlaneseq
    %v642 = vshrl.u32 %v641, 7
    %v643 = vsub.s32 %v640, %v642
    %v644 = vrot.slane %v630, %v643
    %v645 = vcombine.high %v637, %v637
    %v646 = vcombine.high %v644, %v644
    %v648 = vunpack.c.l.s4 1966171168
    %v649 = vunpack.c.0.s8 %v648
    %v650 = vlaneseq
    %v651 = vshrl.u32 %v650, 7
    %v652 = vsub.s32 %v649, %v651
    %v653 = vrot.slane %v637, %v652
    %v655 = vunpack.c.l.s4 1966171168
    %v656 = vunpack.c.0.s8 %v655
    %v657 = vlaneseq
    %v658 = vshrl.u32 %v657, 7
    %v659 = vsub.s32 %v656, %v658
    %v660 = vrot.slane %v644, %v659
    %v662 = vunpack.c.l.s4 1966171168
    %v663 = vunpack.c.0.s8 %v662
    %v664 = vlaneseq
    %v665 = vshrl.u32 %v664, 7
    %v666 = vsub.s32 %v663, %v665
    %v667 = vrot.slane %v645, %v666
    %v669 = vunpack.c.l.s4 1966171168
    %v670 = vunpack.c.0.s8 %v669
    %v671 = vlaneseq
    %v672 = vshrl.u32 %v671, 7
    %v673 = vsub.s32 %v670, %v672
    %v674 = vrot.slane %v646, %v673
    %v675 = vcombine.high %v653, %v653
    %v676 = vcombine.high %v660, %v660
    %v677 = vcombine.high %v667, %v667
    %v678 = vcombine.high %v674, %v674
    %v679 = vcombine.high %v429, %v429
    %v681 = vunpack.c.l.s4 1966171168
    %v682 = vunpack.c.0.s8 %v681
    %v683 = vlaneseq
    %v684 = vshrl.u32 %v683, 7
    %v685 = vsub.s32 %v682, %v684
    %v686 = vrot.slane %v429, %v685
    %v688 = vunpack.c.l.s4 1966171168
    %v689 = vunpack.c.0.s8 %v688
    %v690 = vlaneseq
    %v691 = vshrl.u32 %v690, 7
    %v692 = vsub.s32 %v689, %v691
    %v693 = vrot.slane %v679, %v692
    %v694 = vcombine.high %v686, %v686
    %v695 = vcombine.high %v693, %v693
    %v697 = vunpack.c.l.s4 1966171168
    %v698 = vunpack.c.0.s8 %v697
    %v699 = vlaneseq
    %v700 = vshrl.u32 %v699, 7
    %v701 = vsub.s32 %v698, %v700
    %v702 = vrot.slane %v686, %v701
    %v704 = vunpack.c.l.s4 1966171168
    %v705 = vunpack.c.0.s8 %v704
    %v706 = vlaneseq
    %v707 = vshrl.u32 %v706, 7
    %v708 = vsub.s32 %v705, %v707
    %v709 = vrot.slane %v693, %v708
    %v711 = vunpack.c.l.s4 1966171168
    %v712 = vunpack.c.0.s8 %v711
    %v713 = vlaneseq
    %v714 = vshrl.u32 %v713, 7
    %v715 = vsub.s32 %v712, %v714
    %v716 = vrot.slane %v694, %v715
    %v718 = vunpack.c.l.s4 1966171168
    %v719 = vunpack.c.0.s8 %v718
    %v720 = vlaneseq
    %v721 = vshrl.u32 %v720, 7
    %v722 = vsub.s32 %v719, %v721
    %v723 = vrot.slane %v695, %v722
    %v724 = vcombine.high %v702, %v702
    %v725 = vcombine.high %v709, %v709
    %v726 = vcombine.high %v716, %v716
    %v727 = vcombine.high %v723, %v723
    %v728 = vlaneseq
    %v729 = vshrl.u32 %v728, 7
    %v730 = vsub.s32 0, %v729
    %v731 = vrot.slane %v653, %v730
    %v732 = vlaneseq
    %v733 = vshrl.u32 %v732, 7
    %v734 = vsub.s32 0, %v733
    %v735 = vrot.slane %v667, %v734
    %v736 = vlaneseq
    %v737 = vshrl.u32 %v736, 7
    %v738 = vsub.s32 0, %v737
    %v739 = vrot.slane %v675, %v738
    %v740 = vlaneseq
    %v741 = vshrl.u32 %v740, 7
    %v742 = vsub.s32 0, %v741
    %v743 = vrot.slane %v677, %v742
    %v744 = vlaneseq
    %v745 = vshrl.u32 %v744, 7
    %v746 = vsub.s32 0, %v745
    %v747 = vrot.slane %v660, %v746
    %v748 = vlaneseq
    %v749 = vshrl.u32 %v748, 7
    %v750 = vsub.s32 0, %v749
    %v751 = vrot.slane %v674, %v750
    %v752 = vlaneseq
    %v753 = vshrl.u32 %v752, 7
    %v754 = vsub.s32 0, %v753
    %v755 = vrot.slane %v676, %v754
    %v756 = vlaneseq
    %v757 = vshrl.u32 %v756, 7
    %v758 = vsub.s32 0, %v757
    %v759 = vrot.slane %v678, %v758
    %v760 = vlaneseq
    %v761 = vshrl.u32 %v760, 7
    %v762 = vsub.s32 0, %v761
    %v763 = vrot.slane %v702, %v762
    %v764 = vlaneseq
    %v765 = vshrl.u32 %v764, 7
    %v766 = vsub.s32 0, %v765
    %v767 = vrot.slane %v716, %v766
    %v768 = vlaneseq
    %v769 = vshrl.u32 %v768, 7
    %v770 = vsub.s32 0, %v769
    %v771 = vrot.slane %v724, %v770
    %v772 = vlaneseq
    %v773 = vshrl.u32 %v772, 7
    %v774 = vsub.s32 0, %v773
    %v775 = vrot.slane %v726, %v774
    %v776 = vlaneseq
    %v777 = vshrl.u32 %v776, 7
    %v778 = vsub.s32 0, %v777
    %v779 = vrot.slane %v709, %v778
    %v780 = vlaneseq
    %v781 = vshrl.u32 %v780, 7
    %v782 = vsub.s32 0, %v781
    %v783 = vrot.slane %v723, %v782
    %v784 = vlaneseq
    %v785 = vshrl.u32 %v784, 7
    %v786 = vsub.s32 0, %v785
    %v787 = vrot.slane %v725, %v786
    %v788 = vlaneseq
    %v789 = vshrl.u32 %v788, 7
    %v790 = vsub.s32 0, %v789
    %v791 = vrot.slane %v727, %v790
    %v808 = vmul.f32 %v731, %v550
    %v809 = vmul.f32 %v735, %v555
    %v810 = vmul.f32 %v739, %v560
    %v811 = vmul.f32 %v743, %v565
    %v812 = vmul.f32 %v747, %v570
    %v813 = vmul.f32 %v751, %v575
    %v814 = vmul.f32 %v755, %v580
    %v815 = vmul.f32 %v759, %v585
    %v816 = vmul.f32 %v763, %v590
    %v817 = vmul.f32 %v767, %v595
    %v818 = vmul.f32 %v771, %v600
    %v819 = vmul.f32 %v775, %v605
    %v820 = vmul.f32 %v779, %v610
    %v821 = vmul.f32 %v783, %v615
    %v822 = vmul.f32 %v787, %v620
    %v823 = vmul.f32 %v791, %v625
    %s824 = smul.u32 0, 16
    %v825 = vlaneseq
    %v826 = vshrl.u32 %v825, 7
    %v827 = vadd.s32 %v826, 8
    %v828 = vstv %s824
    %v829 = vadd.s32 %v828, %v826
    %v830 = vadd.s32 %v828, %v827
    %vm831 = vcmp.lt.s32.totalorder %v829, 16
    %vm832 = vcmp.lt.s32.totalorder %v830, 16
    %v833 = vsel %vm831, 1, 0
    %v834 = vsel %vm832, 1, 0
    %v835 = vcvt.s32.f32 %v833
    %v836 = vcvt.s32.f32 %v834
    %v837 = vsel %vm160, %v808, 0.0
    %838 = vadd.xlane.f32.xlu0 %v837
    %v839 = vpop.xlane.xlu0 %838
    %v840 = vsel %vm160, %v809, 0.0
    %841 = vadd.xlane.f32.xlu0 %v840
    %v842 = vpop.xlane.xlu0 %841
    %v843 = vsel %vm160, %v810, 0.0
    %844 = vadd.xlane.f32.xlu0 %v843
    %v845 = vpop.xlane.xlu0 %844
    %v846 = vsel %vm160, %v811, 0.0
    %847 = vadd.xlane.f32.xlu0 %v846
    %v848 = vpop.xlane.xlu0 %847
    %v849 = vsel %vm160, %v812, 0.0
    %850 = vadd.xlane.f32.xlu0 %v849
    %v851 = vpop.xlane.xlu0 %850
    %v852 = vsel %vm160, %v813, 0.0
    %853 = vadd.xlane.f32.xlu0 %v852
    %v854 = vpop.xlane.xlu0 %853
    %v855 = vsel %vm160, %v814, 0.0
    %856 = vadd.xlane.f32.xlu0 %v855
    %v857 = vpop.xlane.xlu0 %856
    %v858 = vsel %vm160, %v815, 0.0
    %859 = vadd.xlane.f32.xlu0 %v858
    %v860 = vpop.xlane.xlu0 %859
    %v861 = vsel %vm160, %v816, 0.0
    %862 = vadd.xlane.f32.xlu0 %v861
    %v863 = vpop.xlane.xlu0 %862
    %v864 = vsel %vm160, %v817, 0.0
    %865 = vadd.xlane.f32.xlu0 %v864
    %v866 = vpop.xlane.xlu0 %865
    %v867 = vsel %vm160, %v818, 0.0
    %868 = vadd.xlane.f32.xlu0 %v867
    %v869 = vpop.xlane.xlu0 %868
    %v870 = vsel %vm160, %v819, 0.0
    %871 = vadd.xlane.f32.xlu0 %v870
    %v872 = vpop.xlane.xlu0 %871
    %v873 = vsel %vm160, %v820, 0.0
    %874 = vadd.xlane.f32.xlu0 %v873
    %v875 = vpop.xlane.xlu0 %874
    %v876 = vsel %vm160, %v821, 0.0
    %877 = vadd.xlane.f32.xlu0 %v876
    %v878 = vpop.xlane.xlu0 %877
    %v879 = vsel %vm160, %v822, 0.0
    %880 = vadd.xlane.f32.xlu0 %v879
    %v881 = vpop.xlane.xlu0 %880
    %v882 = vsel %vm160, %v823, 0.0
    %883 = vadd.xlane.f32.xlu0 %v882
    %v884 = vpop.xlane.xlu0 %883
    %v885 = vmul.f32 %v839, 0.17677669
    %v886 = vmul.f32 %v842, 0.17677669
    %v887 = vmul.f32 %v845, 0.17677669
    %v888 = vmul.f32 %v848, 0.17677669
    %v889 = vmul.f32 %v851, 0.17677669
    %v890 = vmul.f32 %v854, 0.17677669
    %v891 = vmul.f32 %v857, 0.17677669
    %v892 = vmul.f32 %v860, 0.17677669
    %v893 = vmul.f32 %v863, 0.17677669
    %v894 = vmul.f32 %v866, 0.17677669
    %v895 = vmul.f32 %v869, 0.17677669
    %v896 = vmul.f32 %v872, 0.17677669
    %v897 = vmul.f32 %v875, 0.17677669
    %v898 = vmul.f32 %v878, 0.17677669
    %v899 = vmul.f32 %v881, 0.17677669
    %v900 = vmul.f32 %v884, 0.17677669
    %v917 = vlaneseq
    %v918 = vand.u32 %v917, 127
    %v919 = vlaneseq
    %v920 = vshrl.u32 %v919, 7
    %v921 = vsub.s32 %v918, %v920
    %v922 = vrot.slane %v885, %v921
    %v923 = vlaneseq
    %v924 = vshrl.u32 %v923, 7
    %v925 = vsub.s32 %v918, %v924
    %v926 = vrot.slane %v886, %v925
    %v927 = vlaneseq
    %v928 = vshrl.u32 %v927, 7
    %v929 = vsub.s32 %v918, %v928
    %v930 = vrot.slane %v887, %v929
    %v931 = vlaneseq
    %v932 = vshrl.u32 %v931, 7
    %v933 = vsub.s32 %v918, %v932
    %v934 = vrot.slane %v888, %v933
    %v935 = vlaneseq
    %v936 = vshrl.u32 %v935, 7
    %v937 = vsub.s32 %v918, %v936
    %v938 = vrot.slane %v889, %v937
    %v939 = vlaneseq
    %v940 = vshrl.u32 %v939, 7
    %v941 = vsub.s32 %v918, %v940
    %v942 = vrot.slane %v890, %v941
    %v943 = vlaneseq
    %v944 = vshrl.u32 %v943, 7
    %v945 = vsub.s32 %v918, %v944
    %v946 = vrot.slane %v891, %v945
    %v947 = vlaneseq
    %v948 = vshrl.u32 %v947, 7
    %v949 = vsub.s32 %v918, %v948
    %v950 = vrot.slane %v892, %v949
    %v951 = vlaneseq
    %v952 = vshrl.u32 %v951, 7
    %v953 = vsub.s32 %v918, %v952
    %v954 = vrot.slane %v893, %v953
    %v955 = vlaneseq
    %v956 = vshrl.u32 %v955, 7
    %v957 = vsub.s32 %v918, %v956
    %v958 = vrot.slane %v894, %v957
    %v959 = vlaneseq
    %v960 = vshrl.u32 %v959, 7
    %v961 = vsub.s32 %v918, %v960
    %v962 = vrot.slane %v895, %v961
    %v963 = vlaneseq
    %v964 = vshrl.u32 %v963, 7
    %v965 = vsub.s32 %v918, %v964
    %v966 = vrot.slane %v896, %v965
    %v967 = vlaneseq
    %v968 = vshrl.u32 %v967, 7
    %v969 = vsub.s32 %v918, %v968
    %v970 = vrot.slane %v897, %v969
    %v971 = vlaneseq
    %v972 = vshrl.u32 %v971, 7
    %v973 = vsub.s32 %v918, %v972
    %v974 = vrot.slane %v898, %v973
    %v975 = vlaneseq
    %v976 = vshrl.u32 %v975, 7
    %v977 = vsub.s32 %v918, %v976
    %v978 = vrot.slane %v899, %v977
    %v979 = vlaneseq
    %v980 = vshrl.u32 %v979, 7
    %v981 = vsub.s32 %v918, %v980
    %v982 = vrot.slane %v900, %v981
    %vm983 = vcmask 1041409
    %v984 = vsel %vm983, %v926, %v922
    %vm985 = vcmask 1042434
    %v986 = vsel %vm985, %v930, %v984
    %vm987 = vcmask 1043459
    %v988 = vsel %vm987, %v934, %v986
    %vm989 = vcmask 1044484
    %v990 = vsel %vm989, %v938, %v988
    %vm991 = vcmask 1045509
    %v992 = vsel %vm991, %v942, %v990
    %vm993 = vcmask 1046534
    %v994 = vsel %vm993, %v946, %v992
    %vm995 = vcmask 1047559
    %v996 = vsel %vm995, %v950, %v994
    %v997 = vsel %vm983, %v958, %v954
    %v998 = vsel %vm985, %v962, %v997
    %v999 = vsel %vm987, %v966, %v998
    %v1000 = vsel %vm989, %v970, %v999
    %v1001 = vsel %vm991, %v974, %v1000
    %v1002 = vsel %vm993, %v978, %v1001
    %v1003 = vsel %vm995, %v982, %v1002
    %vm1006 = vcmask 64512
    %v1007 = vsel %vm1006, %v996, -inf
    %1008 = vmax.xlane.f32.xlu0 %v1007
    %v1009 = vpop.xlane.xlu0 %1008
    %v1010 = vsel %vm1006, %v1003, -inf
    %1011 = vmax.xlane.f32.xlu0 %v1010
    %v1012 = vpop.xlane.xlu0 %1011
    %v1015 = vlaneseq
    %v1016 = vshrl.u32 %v1015, 7
    %v1017 = vsub.s32 0, %v1016
    %v1018 = vrot.slane %v1009, %v1017
    %v1019 = vlaneseq
    %v1020 = vshrl.u32 %v1019, 7
    %v1021 = vsub.s32 1, %v1020
    %v1022 = vrot.slane %v1009, %v1021
    %v1023 = vlaneseq
    %v1024 = vshrl.u32 %v1023, 7
    %v1025 = vsub.s32 2, %v1024
    %v1026 = vrot.slane %v1009, %v1025
    %v1027 = vlaneseq
    %v1028 = vshrl.u32 %v1027, 7
    %v1029 = vsub.s32 3, %v1028
    %v1030 = vrot.slane %v1009, %v1029
    %v1031 = vlaneseq
    %v1032 = vshrl.u32 %v1031, 7
    %v1033 = vsub.s32 4, %v1032
    %v1034 = vrot.slane %v1009, %v1033
    %v1035 = vlaneseq
    %v1036 = vshrl.u32 %v1035, 7
    %v1037 = vsub.s32 5, %v1036
    %v1038 = vrot.slane %v1009, %v1037
    %v1039 = vlaneseq
    %v1040 = vshrl.u32 %v1039, 7
    %v1041 = vsub.s32 6, %v1040
    %v1042 = vrot.slane %v1009, %v1041
    %v1043 = vlaneseq
    %v1044 = vshrl.u32 %v1043, 7
    %v1045 = vsub.s32 7, %v1044
    %v1046 = vrot.slane %v1009, %v1045
    %v1047 = vlaneseq
    %v1048 = vshrl.u32 %v1047, 7
    %v1049 = vsub.s32 0, %v1048
    %v1050 = vrot.slane %v1012, %v1049
    %v1051 = vlaneseq
    %v1052 = vshrl.u32 %v1051, 7
    %v1053 = vsub.s32 1, %v1052
    %v1054 = vrot.slane %v1012, %v1053
    %v1055 = vlaneseq
    %v1056 = vshrl.u32 %v1055, 7
    %v1057 = vsub.s32 2, %v1056
    %v1058 = vrot.slane %v1012, %v1057
    %v1059 = vlaneseq
    %v1060 = vshrl.u32 %v1059, 7
    %v1061 = vsub.s32 3, %v1060
    %v1062 = vrot.slane %v1012, %v1061
    %v1063 = vlaneseq
    %v1064 = vshrl.u32 %v1063, 7
    %v1065 = vsub.s32 4, %v1064
    %v1066 = vrot.slane %v1012, %v1065
    %v1067 = vlaneseq
    %v1068 = vshrl.u32 %v1067, 7
    %v1069 = vsub.s32 5, %v1068
    %v1070 = vrot.slane %v1012, %v1069
    %v1071 = vlaneseq
    %v1072 = vshrl.u32 %v1071, 7
    %v1073 = vsub.s32 6, %v1072
    %v1074 = vrot.slane %v1012, %v1073
    %v1075 = vlaneseq
    %v1076 = vshrl.u32 %v1075, 7
    %v1077 = vsub.s32 7, %v1076
    %v1078 = vrot.slane %v1012, %v1077
    %v1095 = vsub.f32 %v885, %v1018
    %v1096 = vsub.f32 %v886, %v1022
    %v1097 = vsub.f32 %v887, %v1026
    %v1098 = vsub.f32 %v888, %v1030
    %v1099 = vsub.f32 %v889, %v1034
    %v1100 = vsub.f32 %v890, %v1038
    %v1101 = vsub.f32 %v891, %v1042
    %v1102 = vsub.f32 %v892, %v1046
    %v1103 = vsub.f32 %v893, %v1050
    %v1104 = vsub.f32 %v894, %v1054
    %v1105 = vsub.f32 %v895, %v1058
    %v1106 = vsub.f32 %v896, %v1062
    %v1107 = vsub.f32 %v897, %v1066
    %v1108 = vsub.f32 %v898, %v1070
    %v1109 = vsub.f32 %v899, %v1074
    %v1110 = vsub.f32 %v900, %v1078
    %v1111 = vmul.f32 %v1095, 1.442695
    %v1112 = vpow.pop %v1111
    %v1113 = vmul.f32 %v1096, 1.442695
    %v1114 = vpow.pop %v1113
    %v1115 = vmul.f32 %v1097, 1.442695
    %v1116 = vpow.pop %v1115
    %v1117 = vmul.f32 %v1098, 1.442695
    %v1118 = vpow.pop %v1117
    %v1119 = vmul.f32 %v1099, 1.442695
    %v1120 = vpow.pop %v1119
    %v1121 = vmul.f32 %v1100, 1.442695
    %v1122 = vpow.pop %v1121
    %v1123 = vmul.f32 %v1101, 1.442695
    %v1124 = vpow.pop %v1123
    %v1125 = vmul.f32 %v1102, 1.442695
    %v1126 = vpow.pop %v1125
    %v1127 = vmul.f32 %v1103, 1.442695
    %v1128 = vpow.pop %v1127
    %v1129 = vmul.f32 %v1104, 1.442695
    %v1130 = vpow.pop %v1129
    %v1131 = vmul.f32 %v1105, 1.442695
    %v1132 = vpow.pop %v1131
    %v1133 = vmul.f32 %v1106, 1.442695
    %v1134 = vpow.pop %v1133
    %v1135 = vmul.f32 %v1107, 1.442695
    %v1136 = vpow.pop %v1135
    %v1137 = vmul.f32 %v1108, 1.442695
    %v1138 = vpow.pop %v1137
    %v1139 = vmul.f32 %v1109, 1.442695
    %v1140 = vpow.pop %v1139
    %v1141 = vmul.f32 %v1110, 1.442695
    %v1142 = vpow.pop %v1141
    %1159 = vset.pattern.permute.xlu0 0
    %1160 = vperm.xlu0 %1159, %v1112
    %v1161 = vpop.permute.xlu0 %1160
    %1162 = vset.pattern.permute.xlu0 0
    %1163 = vperm.xlu0 %1162, %v1114
    %v1164 = vpop.permute.xlu0 %1163
    %1165 = vset.pattern.permute.xlu0 0
    %1166 = vperm.xlu0 %1165, %v1116
    %v1167 = vpop.permute.xlu0 %1166
    %1168 = vset.pattern.permute.xlu0 0
    %1169 = vperm.xlu0 %1168, %v1118
    %v1170 = vpop.permute.xlu0 %1169
    %1171 = vset.pattern.permute.xlu0 0
    %1172 = vperm.xlu0 %1171, %v1120
    %v1173 = vpop.permute.xlu0 %1172
    %1174 = vset.pattern.permute.xlu0 0
    %1175 = vperm.xlu0 %1174, %v1122
    %v1176 = vpop.permute.xlu0 %1175
    %1177 = vset.pattern.permute.xlu0 0
    %1178 = vperm.xlu0 %1177, %v1124
    %v1179 = vpop.permute.xlu0 %1178
    %1180 = vset.pattern.permute.xlu0 0
    %1181 = vperm.xlu0 %1180, %v1126
    %v1182 = vpop.permute.xlu0 %1181
    %1183 = vset.pattern.permute.xlu0 0
    %1184 = vperm.xlu0 %1183, %v1128
    %v1185 = vpop.permute.xlu0 %1184
    %1186 = vset.pattern.permute.xlu0 0
    %1187 = vperm.xlu0 %1186, %v1130
    %v1188 = vpop.permute.xlu0 %1187
    %1189 = vset.pattern.permute.xlu0 0
    %1190 = vperm.xlu0 %1189, %v1132
    %v1191 = vpop.permute.xlu0 %1190
    %1192 = vset.pattern.permute.xlu0 0
    %1193 = vperm.xlu0 %1192, %v1134
    %v1194 = vpop.permute.xlu0 %1193
    %1195 = vset.pattern.permute.xlu0 0
    %1196 = vperm.xlu0 %1195, %v1136
    %v1197 = vpop.permute.xlu0 %1196
    %1198 = vset.pattern.permute.xlu0 0
    %1199 = vperm.xlu0 %1198, %v1138
    %v1200 = vpop.permute.xlu0 %1199
    %1201 = vset.pattern.permute.xlu0 0
    %1202 = vperm.xlu0 %1201, %v1140
    %v1203 = vpop.permute.xlu0 %1202
    %1204 = vset.pattern.permute.xlu0 0
    %1205 = vperm.xlu0 %1204, %v1142
    %v1206 = vpop.permute.xlu0 %1205
    %v1207 = vlaneseq
    %v1208 = vshrl.u32 %v1207, 7
    %v1209 = vsub.s32 %v918, %v1208
    %v1210 = vrot.slane %v1161, %v1209
    %v1211 = vlaneseq
    %v1212 = vshrl.u32 %v1211, 7
    %v1213 = vsub.s32 %v918, %v1212
    %v1214 = vrot.slane %v1164, %v1213
    %v1215 = vlaneseq
    %v1216 = vshrl.u32 %v1215, 7
    %v1217 = vsub.s32 %v918, %v1216
    %v1218 = vrot.slane %v1167, %v1217
    %v1219 = vlaneseq
    %v1220 = vshrl.u32 %v1219, 7
    %v1221 = vsub.s32 %v918, %v1220
    %v1222 = vrot.slane %v1170, %v1221
    %v1223 = vlaneseq
    %v1224 = vshrl.u32 %v1223, 7
    %v1225 = vsub.s32 %v918, %v1224
    %v1226 = vrot.slane %v1173, %v1225
    %v1227 = vlaneseq
    %v1228 = vshrl.u32 %v1227, 7
    %v1229 = vsub.s32 %v918, %v1228
    %v1230 = vrot.slane %v1176, %v1229
    %v1231 = vlaneseq
    %v1232 = vshrl.u32 %v1231, 7
    %v1233 = vsub.s32 %v918, %v1232
    %v1234 = vrot.slane %v1179, %v1233
    %v1235 = vlaneseq
    %v1236 = vshrl.u32 %v1235, 7
    %v1237 = vsub.s32 %v918, %v1236
    %v1238 = vrot.slane %v1182, %v1237
    %v1239 = vlaneseq
    %v1240 = vshrl.u32 %v1239, 7
    %v1241 = vsub.s32 %v918, %v1240
    %v1242 = vrot.slane %v1185, %v1241
    %v1243 = vlaneseq
    %v1244 = vshrl.u32 %v1243, 7
    %v1245 = vsub.s32 %v918, %v1244
    %v1246 = vrot.slane %v1188, %v1245
    %v1247 = vlaneseq
    %v1248 = vshrl.u32 %v1247, 7
    %v1249 = vsub.s32 %v918, %v1248
    %v1250 = vrot.slane %v1191, %v1249
    %v1251 = vlaneseq
    %v1252 = vshrl.u32 %v1251, 7
    %v1253 = vsub.s32 %v918, %v1252
    %v1254 = vrot.slane %v1194, %v1253
    %v1255 = vlaneseq
    %v1256 = vshrl.u32 %v1255, 7
    %v1257 = vsub.s32 %v918, %v1256
    %v1258 = vrot.slane %v1197, %v1257
    %v1259 = vlaneseq
    %v1260 = vshrl.u32 %v1259, 7
    %v1261 = vsub.s32 %v918, %v1260
    %v1262 = vrot.slane %v1200, %v1261
    %v1263 = vlaneseq
    %v1264 = vshrl.u32 %v1263, 7
    %v1265 = vsub.s32 %v918, %v1264
    %v1266 = vrot.slane %v1203, %v1265
    %v1267 = vlaneseq
    %v1268 = vshrl.u32 %v1267, 7
    %v1269 = vsub.s32 %v918, %v1268
    %v1270 = vrot.slane %v1206, %v1269
    %v1271 = vsel %vm983, %v1214, %v1210
    %v1272 = vsel %vm985, %v1218, %v1271
    %v1273 = vsel %vm987, %v1222, %v1272
    %v1274 = vsel %vm989, %v1226, %v1273
    %v1275 = vsel %vm991, %v1230, %v1274
    %v1276 = vsel %vm993, %v1234, %v1275
    %v1277 = vsel %vm995, %v1238, %v1276
    %v1278 = vsel %vm983, %v1246, %v1242
    %v1279 = vsel %vm985, %v1250, %v1278
    %v1280 = vsel %vm987, %v1254, %v1279
    %v1281 = vsel %vm989, %v1258, %v1280
    %v1282 = vsel %vm991, %v1262, %v1281
    %v1283 = vsel %vm993, %v1266, %v1282
    %v1284 = vsel %vm995, %v1270, %v1283
    %v1287 = vsel %vm1006, %v1277, 0.0
    %1288 = vadd.xlane.f32.xlu0 %v1287
    %v1289 = vpop.xlane.xlu0 %1288
    %v1290 = vsel %vm1006, %v1284, 0.0
    %1291 = vadd.xlane.f32.xlu0 %v1290
    %v1292 = vpop.xlane.xlu0 %1291
    %v1293 = vrcp.pop %v1289
    %v1294 = vrcp.pop %v1292
    %v1297 = vlaneseq
    %v1298 = vshrl.u32 %v1297, 7
    %v1299 = vsub.s32 0, %v1298
    %v1300 = vrot.slane %v1293, %v1299
    %v1301 = vlaneseq
    %v1302 = vshrl.u32 %v1301, 7
    %v1303 = vsub.s32 1, %v1302
    %v1304 = vrot.slane %v1293, %v1303
    %v1305 = vlaneseq
    %v1306 = vshrl.u32 %v1305, 7
    %v1307 = vsub.s32 2, %v1306
    %v1308 = vrot.slane %v1293, %v1307
    %v1309 = vlaneseq
    %v1310 = vshrl.u32 %v1309, 7
    %v1311 = vsub.s32 3, %v1310
    %v1312 = vrot.slane %v1293, %v1311
    %v1313 = vlaneseq
    %v1314 = vshrl.u32 %v1313, 7
    %v1315 = vsub.s32 4, %v1314
    %v1316 = vrot.slane %v1293, %v1315
    %v1317 = vlaneseq
    %v1318 = vshrl.u32 %v1317, 7
    %v1319 = vsub.s32 5, %v1318
    %v1320 = vrot.slane %v1293, %v1319
    %v1321 = vlaneseq
    %v1322 = vshrl.u32 %v1321, 7
    %v1323 = vsub.s32 6, %v1322
    %v1324 = vrot.slane %v1293, %v1323
    %v1325 = vlaneseq
    %v1326 = vshrl.u32 %v1325, 7
    %v1327 = vsub.s32 7, %v1326
    %v1328 = vrot.slane %v1293, %v1327
    %v1329 = vlaneseq
    %v1330 = vshrl.u32 %v1329, 7
    %v1331 = vsub.s32 0, %v1330
    %v1332 = vrot.slane %v1294, %v1331
    %v1333 = vlaneseq
    %v1334 = vshrl.u32 %v1333, 7
    %v1335 = vsub.s32 1, %v1334
    %v1336 = vrot.slane %v1294, %v1335
    %v1337 = vlaneseq
    %v1338 = vshrl.u32 %v1337, 7
    %v1339 = vsub.s32 2, %v1338
    %v1340 = vrot.slane %v1294, %v1339
    %v1341 = vlaneseq
    %v1342 = vshrl.u32 %v1341, 7
    %v1343 = vsub.s32 3, %v1342
    %v1344 = vrot.slane %v1294, %v1343
    %v1345 = vlaneseq
    %v1346 = vshrl.u32 %v1345, 7
    %v1347 = vsub.s32 4, %v1346
    %v1348 = vrot.slane %v1294, %v1347
    %v1349 = vlaneseq
    %v1350 = vshrl.u32 %v1349, 7
    %v1351 = vsub.s32 5, %v1350
    %v1352 = vrot.slane %v1294, %v1351
    %v1353 = vlaneseq
    %v1354 = vshrl.u32 %v1353, 7
    %v1355 = vsub.s32 6, %v1354
    %v1356 = vrot.slane %v1294, %v1355
    %v1357 = vlaneseq
    %v1358 = vshrl.u32 %v1357, 7
    %v1359 = vsub.s32 7, %v1358
    %v1360 = vrot.slane %v1294, %v1359
    %v1377 = vmul.f32 %v1112, %v1300
    %v1378 = vmul.f32 %v1114, %v1304
    %v1379 = vmul.f32 %v1116, %v1308
    %v1380 = vmul.f32 %v1118, %v1312
    %v1381 = vmul.f32 %v1120, %v1316
    %v1382 = vmul.f32 %v1122, %v1320
    %v1383 = vmul.f32 %v1124, %v1324
    %v1384 = vmul.f32 %v1126, %v1328
    %v1385 = vmul.f32 %v1128, %v1332
    %v1386 = vmul.f32 %v1130, %v1336
    %v1387 = vmul.f32 %v1132, %v1340
    %v1388 = vmul.f32 %v1134, %v1344
    %v1389 = vmul.f32 %v1136, %v1348
    %v1390 = vmul.f32 %v1138, %v1352
    %v1391 = vmul.f32 %v1140, %v1356
    %v1392 = vmul.f32 %v1142, %v1360
    %v1393 = vadd.f32 %v1377, 0.0
    %v1394 = vadd.f32 %v1378, 0.0
    %v1395 = vadd.f32 %v1379, 0.0
    %v1396 = vadd.f32 %v1380, 0.0
    %v1397 = vadd.f32 %v1381, 0.0
    %v1398 = vadd.f32 %v1382, 0.0
    %v1399 = vadd.f32 %v1383, 0.0
    %v1400 = vadd.f32 %v1384, 0.0
    %v1401 = vadd.f32 %v1385, 0.0
    %v1402 = vadd.f32 %v1386, 0.0
    %v1403 = vadd.f32 %v1387, 0.0
    %v1404 = vadd.f32 %v1388, 0.0
    %v1405 = vadd.f32 %v1389, 0.0
    %v1406 = vadd.f32 %v1390, 0.0
    %v1407 = vadd.f32 %v1391, 0.0
    %v1408 = vadd.f32 %v1392, 0.0
    %v1409 = vmul.f32 %v839, %v839
    %v1410 = vmul.f32 %v842, %v842
    %v1411 = vmul.f32 %v845, %v845
    %v1412 = vmul.f32 %v848, %v848
    %v1413 = vmul.f32 %v851, %v851
    %v1414 = vmul.f32 %v854, %v854
    %v1415 = vmul.f32 %v857, %v857
    %v1416 = vmul.f32 %v860, %v860
    %v1417 = vmul.f32 %v863, %v863
    %v1418 = vmul.f32 %v866, %v866
    %v1419 = vmul.f32 %v869, %v869
    %v1420 = vmul.f32 %v872, %v872
    %v1421 = vmul.f32 %v875, %v875
    %v1422 = vmul.f32 %v878, %v878
    %v1423 = vmul.f32 %v881, %v881
    %v1424 = vmul.f32 %v884, %v884
    %v1441 = vlaneseq
    %v1442 = vshrl.u32 %v1441, 7
    %v1443 = vsub.s32 %v918, %v1442
    %v1444 = vrot.slane %v1409, %v1443
    %v1445 = vlaneseq
    %v1446 = vshrl.u32 %v1445, 7
    %v1447 = vsub.s32 %v918, %v1446
    %v1448 = vrot.slane %v1410, %v1447
    %v1449 = vlaneseq
    %v1450 = vshrl.u32 %v1449, 7
    %v1451 = vsub.s32 %v918, %v1450
    %v1452 = vrot.slane %v1411, %v1451
    %v1453 = vlaneseq
    %v1454 = vshrl.u32 %v1453, 7
    %v1455 = vsub.s32 %v918, %v1454
    %v1456 = vrot.slane %v1412, %v1455
    %v1457 = vlaneseq
    %v1458 = vshrl.u32 %v1457, 7
    %v1459 = vsub.s32 %v918, %v1458
    %v1460 = vrot.slane %v1413, %v1459
    %v1461 = vlaneseq
    %v1462 = vshrl.u32 %v1461, 7
    %v1463 = vsub.s32 %v918, %v1462
    %v1464 = vrot.slane %v1414, %v1463
    %v1465 = vlaneseq
    %v1466 = vshrl.u32 %v1465, 7
    %v1467 = vsub.s32 %v918, %v1466
    %v1468 = vrot.slane %v1415, %v1467
    %v1469 = vlaneseq
    %v1470 = vshrl.u32 %v1469, 7
    %v1471 = vsub.s32 %v918, %v1470
    %v1472 = vrot.slane %v1416, %v1471
    %v1473 = vlaneseq
    %v1474 = vshrl.u32 %v1473, 7
    %v1475 = vsub.s32 %v918, %v1474
    %v1476 = vrot.slane %v1417, %v1475
    %v1477 = vlaneseq
    %v1478 = vshrl.u32 %v1477, 7
    %v1479 = vsub.s32 %v918, %v1478
    %v1480 = vrot.slane %v1418, %v1479
    %v1481 = vlaneseq
    %v1482 = vshrl.u32 %v1481, 7
    %v1483 = vsub.s32 %v918, %v1482
    %v1484 = vrot.slane %v1419, %v1483
    %v1485 = vlaneseq
    %v1486 = vshrl.u32 %v1485, 7
    %v1487 = vsub.s32 %v918, %v1486
    %v1488 = vrot.slane %v1420, %v1487
    %v1489 = vlaneseq
    %v1490 = vshrl.u32 %v1489, 7
    %v1491 = vsub.s32 %v918, %v1490
    %v1492 = vrot.slane %v1421, %v1491
    %v1493 = vlaneseq
    %v1494 = vshrl.u32 %v1493, 7
    %v1495 = vsub.s32 %v918, %v1494
    %v1496 = vrot.slane %v1422, %v1495
    %v1497 = vlaneseq
    %v1498 = vshrl.u32 %v1497, 7
    %v1499 = vsub.s32 %v918, %v1498
    %v1500 = vrot.slane %v1423, %v1499
    %v1501 = vlaneseq
    %v1502 = vshrl.u32 %v1501, 7
    %v1503 = vsub.s32 %v918, %v1502
    %v1504 = vrot.slane %v1424, %v1503
    %v1505 = vsel %vm983, %v1448, %v1444
    %v1506 = vsel %vm985, %v1452, %v1505
    %v1507 = vsel %vm987, %v1456, %v1506
    %v1508 = vsel %vm989, %v1460, %v1507
    %v1509 = vsel %vm991, %v1464, %v1508
    %v1510 = vsel %vm993, %v1468, %v1509
    %v1511 = vsel %vm995, %v1472, %v1510
    %v1512 = vsel %vm983, %v1480, %v1476
    %v1513 = vsel %vm985, %v1484, %v1512
    %v1514 = vsel %vm987, %v1488, %v1513
    %v1515 = vsel %vm989, %v1492, %v1514
    %v1516 = vsel %vm991, %v1496, %v1515
    %v1517 = vsel %vm993, %v1500, %v1516
    %v1518 = vsel %vm995, %v1504, %v1517
    %v1521 = vsel %vm1006, %v1511, 0.0
    %1522 = vadd.xlane.f32.xlu0 %v1521
    %v1523 = vpop.xlane.xlu0 %1522
    %v1524 = vsel %vm1006, %v1518, 0.0
    %1525 = vadd.xlane.f32.xlu0 %v1524
    %v1526 = vpop.xlane.xlu0 %1525
    %v1527 = vmul.f32 %v1523, %v835
    %v1528 = vmul.f32 %v1526, %v836
    %v1529 = vadd.f32 %v1377, 1e-08
    %v1530 = vadd.f32 %v1378, 1e-08
    %v1531 = vadd.f32 %v1379, 1e-08
    %v1532 = vadd.f32 %v1380, 1e-08
    %v1533 = vadd.f32 %v1381, 1e-08
    %v1534 = vadd.f32 %v1382, 1e-08
    %v1535 = vadd.f32 %v1383, 1e-08
    %v1536 = vadd.f32 %v1384, 1e-08
    %v1537 = vadd.f32 %v1385, 1e-08
    %v1538 = vadd.f32 %v1386, 1e-08
    %v1539 = vadd.f32 %v1387, 1e-08
    %v1540 = vadd.f32 %v1388, 1e-08
    %v1541 = vadd.f32 %v1389, 1e-08
    %v1542 = vadd.f32 %v1390, 1e-08
    %v1543 = vadd.f32 %v1391, 1e-08
    %v1544 = vadd.f32 %v1392, 1e-08
    %v1545 = vlog2.pop %v1529
    %v1546 = vmul.f32 %v1545, 0.6931472
    %v1547 = vlog2.pop %v1530
    %v1548 = vmul.f32 %v1547, 0.6931472
    %v1549 = vlog2.pop %v1531
    %v1550 = vmul.f32 %v1549, 0.6931472
    %v1551 = vlog2.pop %v1532
    %v1552 = vmul.f32 %v1551, 0.6931472
    %v1553 = vlog2.pop %v1533
    %v1554 = vmul.f32 %v1553, 0.6931472
    %v1555 = vlog2.pop %v1534
    %v1556 = vmul.f32 %v1555, 0.6931472
    %v1557 = vlog2.pop %v1535
    %v1558 = vmul.f32 %v1557, 0.6931472
    %v1559 = vlog2.pop %v1536
    %v1560 = vmul.f32 %v1559, 0.6931472
    %v1561 = vlog2.pop %v1537
    %v1562 = vmul.f32 %v1561, 0.6931472
    %v1563 = vlog2.pop %v1538
    %v1564 = vmul.f32 %v1563, 0.6931472
    %v1565 = vlog2.pop %v1539
    %v1566 = vmul.f32 %v1565, 0.6931472
    %v1567 = vlog2.pop %v1540
    %v1568 = vmul.f32 %v1567, 0.6931472
    %v1569 = vlog2.pop %v1541
    %v1570 = vmul.f32 %v1569, 0.6931472
    %v1571 = vlog2.pop %v1542
    %v1572 = vmul.f32 %v1571, 0.6931472
    %v1573 = vlog2.pop %v1543
    %v1574 = vmul.f32 %v1573, 0.6931472
    %v1575 = vlog2.pop %v1544
    %v1576 = vmul.f32 %v1575, 0.6931472
    %v1577 = vmul.f32 %v1546, %v1377
    %v1578 = vmul.f32 %v1548, %v1378
    %v1579 = vmul.f32 %v1550, %v1379
    %v1580 = vmul.f32 %v1552, %v1380
    %v1581 = vmul.f32 %v1554, %v1381
    %v1582 = vmul.f32 %v1556, %v1382
    %v1583 = vmul.f32 %v1558, %v1383
    %v1584 = vmul.f32 %v1560, %v1384
    %v1585 = vmul.f32 %v1562, %v1385
    %v1586 = vmul.f32 %v1564, %v1386
    %v1587 = vmul.f32 %v1566, %v1387
    %v1588 = vmul.f32 %v1568, %v1388
    %v1589 = vmul.f32 %v1570, %v1389
    %v1590 = vmul.f32 %v1572, %v1390
    %v1591 = vmul.f32 %v1574, %v1391
    %v1592 = vmul.f32 %v1576, %v1392
    %1609 = vset.pattern.permute.xlu0 0
    %1610 = vperm.xlu0 %1609, %v1577
    %v1611 = vpop.permute.xlu0 %1610
    %1612 = vset.pattern.permute.xlu0 0
    %1613 = vperm.xlu0 %1612, %v1578
    %v1614 = vpop.permute.xlu0 %1613
    %1615 = vset.pattern.permute.xlu0 0
    %1616 = vperm.xlu0 %1615, %v1579
    %v1617 = vpop.permute.xlu0 %1616
    %1618 = vset.pattern.permute.xlu0 0
    %1619 = vperm.xlu0 %1618, %v1580
    %v1620 = vpop.permute.xlu0 %1619
    %1621 = vset.pattern.permute.xlu0 0
    %1622 = vperm.xlu0 %1621, %v1581
    %v1623 = vpop.permute.xlu0 %1622
    %1624 = vset.pattern.permute.xlu0 0
    %1625 = vperm.xlu0 %1624, %v1582
    %v1626 = vpop.permute.xlu0 %1625
    %1627 = vset.pattern.permute.xlu0 0
    %1628 = vperm.xlu0 %1627, %v1583
    %v1629 = vpop.permute.xlu0 %1628
    %1630 = vset.pattern.permute.xlu0 0
    %1631 = vperm.xlu0 %1630, %v1584
    %v1632 = vpop.permute.xlu0 %1631
    %1633 = vset.pattern.permute.xlu0 0
    %1634 = vperm.xlu0 %1633, %v1585
    %v1635 = vpop.permute.xlu0 %1634
    %1636 = vset.pattern.permute.xlu0 0
    %1637 = vperm.xlu0 %1636, %v1586
    %v1638 = vpop.permute.xlu0 %1637
    %1639 = vset.pattern.permute.xlu0 0
    %1640 = vperm.xlu0 %1639, %v1587
    %v1641 = vpop.permute.xlu0 %1640
    %1642 = vset.pattern.permute.xlu0 0
    %1643 = vperm.xlu0 %1642, %v1588
    %v1644 = vpop.permute.xlu0 %1643
    %1645 = vset.pattern.permute.xlu0 0
    %1646 = vperm.xlu0 %1645, %v1589
    %v1647 = vpop.permute.xlu0 %1646
    %1648 = vset.pattern.permute.xlu0 0
    %1649 = vperm.xlu0 %1648, %v1590
    %v1650 = vpop.permute.xlu0 %1649
    %1651 = vset.pattern.permute.xlu0 0
    %1652 = vperm.xlu0 %1651, %v1591
    %v1653 = vpop.permute.xlu0 %1652
    %1654 = vset.pattern.permute.xlu0 0
    %1655 = vperm.xlu0 %1654, %v1592
    %v1656 = vpop.permute.xlu0 %1655
    %v1657 = vlaneseq
    %v1658 = vshrl.u32 %v1657, 7
    %v1659 = vsub.s32 %v918, %v1658
    %v1660 = vrot.slane %v1611, %v1659
    %v1661 = vlaneseq
    %v1662 = vshrl.u32 %v1661, 7
    %v1663 = vsub.s32 %v918, %v1662
    %v1664 = vrot.slane %v1614, %v1663
    %v1665 = vlaneseq
    %v1666 = vshrl.u32 %v1665, 7
    %v1667 = vsub.s32 %v918, %v1666
    %v1668 = vrot.slane %v1617, %v1667
    %v1669 = vlaneseq
    %v1670 = vshrl.u32 %v1669, 7
    %v1671 = vsub.s32 %v918, %v1670
    %v1672 = vrot.slane %v1620, %v1671
    %v1673 = vlaneseq
    %v1674 = vshrl.u32 %v1673, 7
    %v1675 = vsub.s32 %v918, %v1674
    %v1676 = vrot.slane %v1623, %v1675
    %v1677 = vlaneseq
    %v1678 = vshrl.u32 %v1677, 7
    %v1679 = vsub.s32 %v918, %v1678
    %v1680 = vrot.slane %v1626, %v1679
    %v1681 = vlaneseq
    %v1682 = vshrl.u32 %v1681, 7
    %v1683 = vsub.s32 %v918, %v1682
    %v1684 = vrot.slane %v1629, %v1683
    %v1685 = vlaneseq
    %v1686 = vshrl.u32 %v1685, 7
    %v1687 = vsub.s32 %v918, %v1686
    %v1688 = vrot.slane %v1632, %v1687
    %v1689 = vlaneseq
    %v1690 = vshrl.u32 %v1689, 7
    %v1691 = vsub.s32 %v918, %v1690
    %v1692 = vrot.slane %v1635, %v1691
    %v1693 = vlaneseq
    %v1694 = vshrl.u32 %v1693, 7
    %v1695 = vsub.s32 %v918, %v1694
    %v1696 = vrot.slane %v1638, %v1695
    %v1697 = vlaneseq
    %v1698 = vshrl.u32 %v1697, 7
    %v1699 = vsub.s32 %v918, %v1698
    %v1700 = vrot.slane %v1641, %v1699
    %v1701 = vlaneseq
    %v1702 = vshrl.u32 %v1701, 7
    %v1703 = vsub.s32 %v918, %v1702
    %v1704 = vrot.slane %v1644, %v1703
    %v1705 = vlaneseq
    %v1706 = vshrl.u32 %v1705, 7
    %v1707 = vsub.s32 %v918, %v1706
    %v1708 = vrot.slane %v1647, %v1707
    %v1709 = vlaneseq
    %v1710 = vshrl.u32 %v1709, 7
    %v1711 = vsub.s32 %v918, %v1710
    %v1712 = vrot.slane %v1650, %v1711
    %v1713 = vlaneseq
    %v1714 = vshrl.u32 %v1713, 7
    %v1715 = vsub.s32 %v918, %v1714
    %v1716 = vrot.slane %v1653, %v1715
    %v1717 = vlaneseq
    %v1718 = vshrl.u32 %v1717, 7
    %v1719 = vsub.s32 %v918, %v1718
    %v1720 = vrot.slane %v1656, %v1719
    %v1721 = vsel %vm983, %v1664, %v1660
    %v1722 = vsel %vm985, %v1668, %v1721
    %v1723 = vsel %vm987, %v1672, %v1722
    %v1724 = vsel %vm989, %v1676, %v1723
    %v1725 = vsel %vm991, %v1680, %v1724
    %v1726 = vsel %vm993, %v1684, %v1725
    %v1727 = vsel %vm995, %v1688, %v1726
    %v1728 = vsel %vm983, %v1696, %v1692
    %v1729 = vsel %vm985, %v1700, %v1728
    %v1730 = vsel %vm987, %v1704, %v1729
    %v1731 = vsel %vm989, %v1708, %v1730
    %v1732 = vsel %vm991, %v1712, %v1731
    %v1733 = vsel %vm993, %v1716, %v1732
    %v1734 = vsel %vm995, %v1720, %v1733
    %v1737 = vsel %vm1006, %v1727, 0.0
    %1738 = vadd.xlane.f32.xlu0 %v1737
    %v1739 = vpop.xlane.xlu0 %1738
    %v1740 = vsel %vm1006, %v1734, 0.0
    %1741 = vadd.xlane.f32.xlu0 %v1740
    %v1742 = vpop.xlane.xlu0 %1741
    %v1743 = vsub.f32 0.0, %v1739
    %v1744 = vsub.f32 0.0, %v1742
    %v1745 = vmul.f32 %v1743, %v835
    %v1746 = vmul.f32 %v1744, %v836
    %1763 = vrot.lane.b32.xlu0 %v808, 96
    %v1764 = vpop.permute.xlu0 %1763
    %1765 = vrot.lane.b32.xlu0 %v809, 96
    %v1766 = vpop.permute.xlu0 %1765
    %1767 = vrot.lane.b32.xlu0 %v810, 96
    %v1768 = vpop.permute.xlu0 %1767
    %1769 = vrot.lane.b32.xlu0 %v811, 96
    %v1770 = vpop.permute.xlu0 %1769
    %1771 = vrot.lane.b32.xlu0 %v812, 96
    %v1772 = vpop.permute.xlu0 %1771
    %1773 = vrot.lane.b32.xlu0 %v813, 96
    %v1774 = vpop.permute.xlu0 %1773
    %1775 = vrot.lane.b32.xlu0 %v814, 96
    %v1776 = vpop.permute.xlu0 %1775
    %1777 = vrot.lane.b32.xlu0 %v815, 96
    %v1778 = vpop.permute.xlu0 %1777
    %1779 = vrot.lane.b32.xlu0 %v816, 96
    %v1780 = vpop.permute.xlu0 %1779
    %1781 = vrot.lane.b32.xlu0 %v817, 96
    %v1782 = vpop.permute.xlu0 %1781
    %1783 = vrot.lane.b32.xlu0 %v818, 96
    %v1784 = vpop.permute.xlu0 %1783
    %1785 = vrot.lane.b32.xlu0 %v819, 96
    %v1786 = vpop.permute.xlu0 %1785
    %1787 = vrot.lane.b32.xlu0 %v820, 96
    %v1788 = vpop.permute.xlu0 %1787
    %1789 = vrot.lane.b32.xlu0 %v821, 96
    %v1790 = vpop.permute.xlu0 %1789
    %1791 = vrot.lane.b32.xlu0 %v822, 96
    %v1792 = vpop.permute.xlu0 %1791
    %1793 = vrot.lane.b32.xlu0 %v823, 96
    %v1794 = vpop.permute.xlu0 %1793
    %v1811 = vsel %vm160, %v1764, 0.0
    %1812 = vadd.xlane.f32.xlu0 %v1811
    %v1813 = vpop.xlane.xlu0 %1812
    %v1814 = vsel %vm160, %v1766, 0.0
    %1815 = vadd.xlane.f32.xlu0 %v1814
    %v1816 = vpop.xlane.xlu0 %1815
    %v1817 = vsel %vm160, %v1768, 0.0
    %1818 = vadd.xlane.f32.xlu0 %v1817
    %v1819 = vpop.xlane.xlu0 %1818
    %v1820 = vsel %vm160, %v1770, 0.0
    %1821 = vadd.xlane.f32.xlu0 %v1820
    %v1822 = vpop.xlane.xlu0 %1821
    %v1823 = vsel %vm160, %v1772, 0.0
    %1824 = vadd.xlane.f32.xlu0 %v1823
    %v1825 = vpop.xlane.xlu0 %1824
    %v1826 = vsel %vm160, %v1774, 0.0
    %1827 = vadd.xlane.f32.xlu0 %v1826
    %v1828 = vpop.xlane.xlu0 %1827
    %v1829 = vsel %vm160, %v1776, 0.0
    %1830 = vadd.xlane.f32.xlu0 %v1829
    %v1831 = vpop.xlane.xlu0 %1830
    %v1832 = vsel %vm160, %v1778, 0.0
    %1833 = vadd.xlane.f32.xlu0 %v1832
    %v1834 = vpop.xlane.xlu0 %1833
    %v1835 = vsel %vm160, %v1780, 0.0
    %1836 = vadd.xlane.f32.xlu0 %v1835
    %v1837 = vpop.xlane.xlu0 %1836
    %v1838 = vsel %vm160, %v1782, 0.0
    %1839 = vadd.xlane.f32.xlu0 %v1838
    %v1840 = vpop.xlane.xlu0 %1839
    %v1841 = vsel %vm160, %v1784, 0.0
    %1842 = vadd.xlane.f32.xlu0 %v1841
    %v1843 = vpop.xlane.xlu0 %1842
    %v1844 = vsel %vm160, %v1786, 0.0
    %1845 = vadd.xlane.f32.xlu0 %v1844
    %v1846 = vpop.xlane.xlu0 %1845
    %v1847 = vsel %vm160, %v1788, 0.0
    %1848 = vadd.xlane.f32.xlu0 %v1847
    %v1849 = vpop.xlane.xlu0 %1848
    %v1850 = vsel %vm160, %v1790, 0.0
    %1851 = vadd.xlane.f32.xlu0 %v1850
    %v1852 = vpop.xlane.xlu0 %1851
    %v1853 = vsel %vm160, %v1792, 0.0
    %1854 = vadd.xlane.f32.xlu0 %v1853
    %v1855 = vpop.xlane.xlu0 %1854
    %v1856 = vsel %vm160, %v1794, 0.0
    %1857 = vadd.xlane.f32.xlu0 %v1856
    %v1858 = vpop.xlane.xlu0 %1857
    %v1859 = vmul.f32 %v1813, 0.17677669
    %v1860 = vmul.f32 %v1816, 0.17677669
    %v1861 = vmul.f32 %v1819, 0.17677669
    %v1862 = vmul.f32 %v1822, 0.17677669
    %v1863 = vmul.f32 %v1825, 0.17677669
    %v1864 = vmul.f32 %v1828, 0.17677669
    %v1865 = vmul.f32 %v1831, 0.17677669
    %v1866 = vmul.f32 %v1834, 0.17677669
    %v1867 = vmul.f32 %v1837, 0.17677669
    %v1868 = vmul.f32 %v1840, 0.17677669
    %v1869 = vmul.f32 %v1843, 0.17677669
    %v1870 = vmul.f32 %v1846, 0.17677669
    %v1871 = vmul.f32 %v1849, 0.17677669
    %v1872 = vmul.f32 %v1852, 0.17677669
    %v1873 = vmul.f32 %v1855, 0.17677669
    %v1874 = vmul.f32 %v1858, 0.17677669
    %v1891 = vlaneseq
    %v1892 = vshrl.u32 %v1891, 7
    %v1893 = vsub.s32 %v918, %v1892
    %v1894 = vrot.slane %v1859, %v1893
    %v1895 = vlaneseq
    %v1896 = vshrl.u32 %v1895, 7
    %v1897 = vsub.s32 %v918, %v1896
    %v1898 = vrot.slane %v1860, %v1897
    %v1899 = vlaneseq
    %v1900 = vshrl.u32 %v1899, 7
    %v1901 = vsub.s32 %v918, %v1900
    %v1902 = vrot.slane %v1861, %v1901
    %v1903 = vlaneseq
    %v1904 = vshrl.u32 %v1903, 7
    %v1905 = vsub.s32 %v918, %v1904
    %v1906 = vrot.slane %v1862, %v1905
    %v1907 = vlaneseq
    %v1908 = vshrl.u32 %v1907, 7
    %v1909 = vsub.s32 %v918, %v1908
    %v1910 = vrot.slane %v1863, %v1909
    %v1911 = vlaneseq
    %v1912 = vshrl.u32 %v1911, 7
    %v1913 = vsub.s32 %v918, %v1912
    %v1914 = vrot.slane %v1864, %v1913
    %v1915 = vlaneseq
    %v1916 = vshrl.u32 %v1915, 7
    %v1917 = vsub.s32 %v918, %v1916
    %v1918 = vrot.slane %v1865, %v1917
    %v1919 = vlaneseq
    %v1920 = vshrl.u32 %v1919, 7
    %v1921 = vsub.s32 %v918, %v1920
    %v1922 = vrot.slane %v1866, %v1921
    %v1923 = vlaneseq
    %v1924 = vshrl.u32 %v1923, 7
    %v1925 = vsub.s32 %v918, %v1924
    %v1926 = vrot.slane %v1867, %v1925
    %v1927 = vlaneseq
    %v1928 = vshrl.u32 %v1927, 7
    %v1929 = vsub.s32 %v918, %v1928
    %v1930 = vrot.slane %v1868, %v1929
    %v1931 = vlaneseq
    %v1932 = vshrl.u32 %v1931, 7
    %v1933 = vsub.s32 %v918, %v1932
    %v1934 = vrot.slane %v1869, %v1933
    %v1935 = vlaneseq
    %v1936 = vshrl.u32 %v1935, 7
    %v1937 = vsub.s32 %v918, %v1936
    %v1938 = vrot.slane %v1870, %v1937
    %v1939 = vlaneseq
    %v1940 = vshrl.u32 %v1939, 7
    %v1941 = vsub.s32 %v918, %v1940
    %v1942 = vrot.slane %v1871, %v1941
    %v1943 = vlaneseq
    %v1944 = vshrl.u32 %v1943, 7
    %v1945 = vsub.s32 %v918, %v1944
    %v1946 = vrot.slane %v1872, %v1945
    %v1947 = vlaneseq
    %v1948 = vshrl.u32 %v1947, 7
    %v1949 = vsub.s32 %v918, %v1948
    %v1950 = vrot.slane %v1873, %v1949
    %v1951 = vlaneseq
    %v1952 = vshrl.u32 %v1951, 7
    %v1953 = vsub.s32 %v918, %v1952
    %v1954 = vrot.slane %v1874, %v1953
    %v1955 = vsel %vm983, %v1898, %v1894
    %v1956 = vsel %vm985, %v1902, %v1955
    %v1957 = vsel %vm987, %v1906, %v1956
    %v1958 = vsel %vm989, %v1910, %v1957
    %v1959 = vsel %vm991, %v1914, %v1958
    %v1960 = vsel %vm993, %v1918, %v1959
    %v1961 = vsel %vm995, %v1922, %v1960
    %v1962 = vsel %vm983, %v1930, %v1926
    %v1963 = vsel %vm985, %v1934, %v1962
    %v1964 = vsel %vm987, %v1938, %v1963
    %v1965 = vsel %vm989, %v1942, %v1964
    %v1966 = vsel %vm991, %v1946, %v1965
    %v1967 = vsel %vm993, %v1950, %v1966
    %v1968 = vsel %vm995, %v1954, %v1967
    %v1971 = vsel %vm1006, %v1961, -inf
    %1972 = vmax.xlane.f32.xlu0 %v1971
    %v1973 = vpop.xlane.xlu0 %1972
    %v1974 = vsel %vm1006, %v1968, -inf
    %1975 = vmax.xlane.f32.xlu0 %v1974
    %v1976 = vpop.xlane.xlu0 %1975
    %v1979 = vlaneseq
    %v1980 = vshrl.u32 %v1979, 7
    %v1981 = vsub.s32 0, %v1980
    %v1982 = vrot.slane %v1973, %v1981
    %v1983 = vlaneseq
    %v1984 = vshrl.u32 %v1983, 7
    %v1985 = vsub.s32 1, %v1984
    %v1986 = vrot.slane %v1973, %v1985
    %v1987 = vlaneseq
    %v1988 = vshrl.u32 %v1987, 7
    %v1989 = vsub.s32 2, %v1988
    %v1990 = vrot.slane %v1973, %v1989
    %v1991 = vlaneseq
    %v1992 = vshrl.u32 %v1991, 7
    %v1993 = vsub.s32 3, %v1992
    %v1994 = vrot.slane %v1973, %v1993
    %v1995 = vlaneseq
    %v1996 = vshrl.u32 %v1995, 7
    %v1997 = vsub.s32 4, %v1996
    %v1998 = vrot.slane %v1973, %v1997
    %v1999 = vlaneseq
    %v2000 = vshrl.u32 %v1999, 7
    %v2001 = vsub.s32 5, %v2000
    %v2002 = vrot.slane %v1973, %v2001
    %v2003 = vlaneseq
    %v2004 = vshrl.u32 %v2003, 7
    %v2005 = vsub.s32 6, %v2004
    %v2006 = vrot.slane %v1973, %v2005
    %v2007 = vlaneseq
    %v2008 = vshrl.u32 %v2007, 7
    %v2009 = vsub.s32 7, %v2008
    %v2010 = vrot.slane %v1973, %v2009
    %v2011 = vlaneseq
    %v2012 = vshrl.u32 %v2011, 7
    %v2013 = vsub.s32 0, %v2012
    %v2014 = vrot.slane %v1976, %v2013
    %v2015 = vlaneseq
    %v2016 = vshrl.u32 %v2015, 7
    %v2017 = vsub.s32 1, %v2016
    %v2018 = vrot.slane %v1976, %v2017
    %v2019 = vlaneseq
    %v2020 = vshrl.u32 %v2019, 7
    %v2021 = vsub.s32 2, %v2020
    %v2022 = vrot.slane %v1976, %v2021
    %v2023 = vlaneseq
    %v2024 = vshrl.u32 %v2023, 7
    %v2025 = vsub.s32 3, %v2024
    %v2026 = vrot.slane %v1976, %v2025
    %v2027 = vlaneseq
    %v2028 = vshrl.u32 %v2027, 7
    %v2029 = vsub.s32 4, %v2028
    %v2030 = vrot.slane %v1976, %v2029
    %v2031 = vlaneseq
    %v2032 = vshrl.u32 %v2031, 7
    %v2033 = vsub.s32 5, %v2032
    %v2034 = vrot.slane %v1976, %v2033
    %v2035 = vlaneseq
    %v2036 = vshrl.u32 %v2035, 7
    %v2037 = vsub.s32 6, %v2036
    %v2038 = vrot.slane %v1976, %v2037
    %v2039 = vlaneseq
    %v2040 = vshrl.u32 %v2039, 7
    %v2041 = vsub.s32 7, %v2040
    %v2042 = vrot.slane %v1976, %v2041
    %v2059 = vsub.f32 %v1859, %v1982
    %v2060 = vsub.f32 %v1860, %v1986
    %v2061 = vsub.f32 %v1861, %v1990
    %v2062 = vsub.f32 %v1862, %v1994
    %v2063 = vsub.f32 %v1863, %v1998
    %v2064 = vsub.f32 %v1864, %v2002
    %v2065 = vsub.f32 %v1865, %v2006
    %v2066 = vsub.f32 %v1866, %v2010
    %v2067 = vsub.f32 %v1867, %v2014
    %v2068 = vsub.f32 %v1868, %v2018
    %v2069 = vsub.f32 %v1869, %v2022
    %v2070 = vsub.f32 %v1870, %v2026
    %v2071 = vsub.f32 %v1871, %v2030
    %v2072 = vsub.f32 %v1872, %v2034
    %v2073 = vsub.f32 %v1873, %v2038
    %v2074 = vsub.f32 %v1874, %v2042
    %v2075 = vmul.f32 %v2059, 1.442695
    %v2076 = vpow.pop %v2075
    %v2077 = vmul.f32 %v2060, 1.442695
    %v2078 = vpow.pop %v2077
    %v2079 = vmul.f32 %v2061, 1.442695
    %v2080 = vpow.pop %v2079
    %v2081 = vmul.f32 %v2062, 1.442695
    %v2082 = vpow.pop %v2081
    %v2083 = vmul.f32 %v2063, 1.442695
    %v2084 = vpow.pop %v2083
    %v2085 = vmul.f32 %v2064, 1.442695
    %v2086 = vpow.pop %v2085
    %v2087 = vmul.f32 %v2065, 1.442695
    %v2088 = vpow.pop %v2087
    %v2089 = vmul.f32 %v2066, 1.442695
    %v2090 = vpow.pop %v2089
    %v2091 = vmul.f32 %v2067, 1.442695
    %v2092 = vpow.pop %v2091
    %v2093 = vmul.f32 %v2068, 1.442695
    %v2094 = vpow.pop %v2093
    %v2095 = vmul.f32 %v2069, 1.442695
    %v2096 = vpow.pop %v2095
    %v2097 = vmul.f32 %v2070, 1.442695
    %v2098 = vpow.pop %v2097
    %v2099 = vmul.f32 %v2071, 1.442695
    %v2100 = vpow.pop %v2099
    %v2101 = vmul.f32 %v2072, 1.442695
    %v2102 = vpow.pop %v2101
    %v2103 = vmul.f32 %v2073, 1.442695
    %v2104 = vpow.pop %v2103
    %v2105 = vmul.f32 %v2074, 1.442695
    %v2106 = vpow.pop %v2105
    %2123 = vset.pattern.permute.xlu0 0
    %2124 = vperm.xlu0 %2123, %v2076
    %v2125 = vpop.permute.xlu0 %2124
    %2126 = vset.pattern.permute.xlu0 0
    %2127 = vperm.xlu0 %2126, %v2078
    %v2128 = vpop.permute.xlu0 %2127
    %2129 = vset.pattern.permute.xlu0 0
    %2130 = vperm.xlu0 %2129, %v2080
    %v2131 = vpop.permute.xlu0 %2130
    %2132 = vset.pattern.permute.xlu0 0
    %2133 = vperm.xlu0 %2132, %v2082
    %v2134 = vpop.permute.xlu0 %2133
    %2135 = vset.pattern.permute.xlu0 0
    %2136 = vperm.xlu0 %2135, %v2084
    %v2137 = vpop.permute.xlu0 %2136
    %2138 = vset.pattern.permute.xlu0 0
    %2139 = vperm.xlu0 %2138, %v2086
    %v2140 = vpop.permute.xlu0 %2139
    %2141 = vset.pattern.permute.xlu0 0
    %2142 = vperm.xlu0 %2141, %v2088
    %v2143 = vpop.permute.xlu0 %2142
    %2144 = vset.pattern.permute.xlu0 0
    %2145 = vperm.xlu0 %2144, %v2090
    %v2146 = vpop.permute.xlu0 %2145
    %2147 = vset.pattern.permute.xlu0 0
    %2148 = vperm.xlu0 %2147, %v2092
    %v2149 = vpop.permute.xlu0 %2148
    %2150 = vset.pattern.permute.xlu0 0
    %2151 = vperm.xlu0 %2150, %v2094
    %v2152 = vpop.permute.xlu0 %2151
    %2153 = vset.pattern.permute.xlu0 0
    %2154 = vperm.xlu0 %2153, %v2096
    %v2155 = vpop.permute.xlu0 %2154
    %2156 = vset.pattern.permute.xlu0 0
    %2157 = vperm.xlu0 %2156, %v2098
    %v2158 = vpop.permute.xlu0 %2157
    %2159 = vset.pattern.permute.xlu0 0
    %2160 = vperm.xlu0 %2159, %v2100
    %v2161 = vpop.permute.xlu0 %2160
    %2162 = vset.pattern.permute.xlu0 0
    %2163 = vperm.xlu0 %2162, %v2102
    %v2164 = vpop.permute.xlu0 %2163
    %2165 = vset.pattern.permute.xlu0 0
    %2166 = vperm.xlu0 %2165, %v2104
    %v2167 = vpop.permute.xlu0 %2166
    %2168 = vset.pattern.permute.xlu0 0
    %2169 = vperm.xlu0 %2168, %v2106
    %v2170 = vpop.permute.xlu0 %2169
    %v2171 = vlaneseq
    %v2172 = vshrl.u32 %v2171, 7
    %v2173 = vsub.s32 %v918, %v2172
    %v2174 = vrot.slane %v2125, %v2173
    %v2175 = vlaneseq
    %v2176 = vshrl.u32 %v2175, 7
    %v2177 = vsub.s32 %v918, %v2176
    %v2178 = vrot.slane %v2128, %v2177
    %v2179 = vlaneseq
    %v2180 = vshrl.u32 %v2179, 7
    %v2181 = vsub.s32 %v918, %v2180
    %v2182 = vrot.slane %v2131, %v2181
    %v2183 = vlaneseq
    %v2184 = vshrl.u32 %v2183, 7
    %v2185 = vsub.s32 %v918, %v2184
    %v2186 = vrot.slane %v2134, %v2185
    %v2187 = vlaneseq
    %v2188 = vshrl.u32 %v2187, 7
    %v2189 = vsub.s32 %v918, %v2188
    %v2190 = vrot.slane %v2137, %v2189
    %v2191 = vlaneseq
    %v2192 = vshrl.u32 %v2191, 7
    %v2193 = vsub.s32 %v918, %v2192
    %v2194 = vrot.slane %v2140, %v2193
    %v2195 = vlaneseq
    %v2196 = vshrl.u32 %v2195, 7
    %v2197 = vsub.s32 %v918, %v2196
    %v2198 = vrot.slane %v2143, %v2197
    %v2199 = vlaneseq
    %v2200 = vshrl.u32 %v2199, 7
    %v2201 = vsub.s32 %v918, %v2200
    %v2202 = vrot.slane %v2146, %v2201
    %v2203 = vlaneseq
    %v2204 = vshrl.u32 %v2203, 7
    %v2205 = vsub.s32 %v918, %v2204
    %v2206 = vrot.slane %v2149, %v2205
    %v2207 = vlaneseq
    %v2208 = vshrl.u32 %v2207, 7
    %v2209 = vsub.s32 %v918, %v2208
    %v2210 = vrot.slane %v2152, %v2209
    %v2211 = vlaneseq
    %v2212 = vshrl.u32 %v2211, 7
    %v2213 = vsub.s32 %v918, %v2212
    %v2214 = vrot.slane %v2155, %v2213
    %v2215 = vlaneseq
    %v2216 = vshrl.u32 %v2215, 7
    %v2217 = vsub.s32 %v918, %v2216
    %v2218 = vrot.slane %v2158, %v2217
    %v2219 = vlaneseq
    %v2220 = vshrl.u32 %v2219, 7
    %v2221 = vsub.s32 %v918, %v2220
    %v2222 = vrot.slane %v2161, %v2221
    %v2223 = vlaneseq
    %v2224 = vshrl.u32 %v2223, 7
    %v2225 = vsub.s32 %v918, %v2224
    %v2226 = vrot.slane %v2164, %v2225
    %v2227 = vlaneseq
    %v2228 = vshrl.u32 %v2227, 7
    %v2229 = vsub.s32 %v918, %v2228
    %v2230 = vrot.slane %v2167, %v2229
    %v2231 = vlaneseq
    %v2232 = vshrl.u32 %v2231, 7
    %v2233 = vsub.s32 %v918, %v2232
    %v2234 = vrot.slane %v2170, %v2233
    %v2235 = vsel %vm983, %v2178, %v2174
    %v2236 = vsel %vm985, %v2182, %v2235
    %v2237 = vsel %vm987, %v2186, %v2236
    %v2238 = vsel %vm989, %v2190, %v2237
    %v2239 = vsel %vm991, %v2194, %v2238
    %v2240 = vsel %vm993, %v2198, %v2239
    %v2241 = vsel %vm995, %v2202, %v2240
    %v2242 = vsel %vm983, %v2210, %v2206
    %v2243 = vsel %vm985, %v2214, %v2242
    %v2244 = vsel %vm987, %v2218, %v2243
    %v2245 = vsel %vm989, %v2222, %v2244
    %v2246 = vsel %vm991, %v2226, %v2245
    %v2247 = vsel %vm993, %v2230, %v2246
    %v2248 = vsel %vm995, %v2234, %v2247
    %v2251 = vsel %vm1006, %v2241, 0.0
    %2252 = vadd.xlane.f32.xlu0 %v2251
    %v2253 = vpop.xlane.xlu0 %2252
    %v2254 = vsel %vm1006, %v2248, 0.0
    %2255 = vadd.xlane.f32.xlu0 %v2254
    %v2256 = vpop.xlane.xlu0 %2255
    %v2257 = vrcp.pop %v2253
    %v2258 = vrcp.pop %v2256
    %v2261 = vlaneseq
    %v2262 = vshrl.u32 %v2261, 7
    %v2263 = vsub.s32 0, %v2262
    %v2264 = vrot.slane %v2257, %v2263
    %v2265 = vlaneseq
    %v2266 = vshrl.u32 %v2265, 7
    %v2267 = vsub.s32 1, %v2266
    %v2268 = vrot.slane %v2257, %v2267
    %v2269 = vlaneseq
    %v2270 = vshrl.u32 %v2269, 7
    %v2271 = vsub.s32 2, %v2270
    %v2272 = vrot.slane %v2257, %v2271
    %v2273 = vlaneseq
    %v2274 = vshrl.u32 %v2273, 7
    %v2275 = vsub.s32 3, %v2274
    %v2276 = vrot.slane %v2257, %v2275
    %v2277 = vlaneseq
    %v2278 = vshrl.u32 %v2277, 7
    %v2279 = vsub.s32 4, %v2278
    %v2280 = vrot.slane %v2257, %v2279
    %v2281 = vlaneseq
    %v2282 = vshrl.u32 %v2281, 7
    %v2283 = vsub.s32 5, %v2282
    %v2284 = vrot.slane %v2257, %v2283
    %v2285 = vlaneseq
    %v2286 = vshrl.u32 %v2285, 7
    %v2287 = vsub.s32 6, %v2286
    %v2288 = vrot.slane %v2257, %v2287
    %v2289 = vlaneseq
    %v2290 = vshrl.u32 %v2289, 7
    %v2291 = vsub.s32 7, %v2290
    %v2292 = vrot.slane %v2257, %v2291
    %v2293 = vlaneseq
    %v2294 = vshrl.u32 %v2293, 7
    %v2295 = vsub.s32 0, %v2294
    %v2296 = vrot.slane %v2258, %v2295
    %v2297 = vlaneseq
    %v2298 = vshrl.u32 %v2297, 7
    %v2299 = vsub.s32 1, %v2298
    %v2300 = vrot.slane %v2258, %v2299
    %v2301 = vlaneseq
    %v2302 = vshrl.u32 %v2301, 7
    %v2303 = vsub.s32 2, %v2302
    %v2304 = vrot.slane %v2258, %v2303
    %v2305 = vlaneseq
    %v2306 = vshrl.u32 %v2305, 7
    %v2307 = vsub.s32 3, %v2306
    %v2308 = vrot.slane %v2258, %v2307
    %v2309 = vlaneseq
    %v2310 = vshrl.u32 %v2309, 7
    %v2311 = vsub.s32 4, %v2310
    %v2312 = vrot.slane %v2258, %v2311
    %v2313 = vlaneseq
    %v2314 = vshrl.u32 %v2313, 7
    %v2315 = vsub.s32 5, %v2314
    %v2316 = vrot.slane %v2258, %v2315
    %v2317 = vlaneseq
    %v2318 = vshrl.u32 %v2317, 7
    %v2319 = vsub.s32 6, %v2318
    %v2320 = vrot.slane %v2258, %v2319
    %v2321 = vlaneseq
    %v2322 = vshrl.u32 %v2321, 7
    %v2323 = vsub.s32 7, %v2322
    %v2324 = vrot.slane %v2258, %v2323
    %v2341 = vmul.f32 %v2076, %v2264
    %v2342 = vmul.f32 %v2078, %v2268
    %v2343 = vmul.f32 %v2080, %v2272
    %v2344 = vmul.f32 %v2082, %v2276
    %v2345 = vmul.f32 %v2084, %v2280
    %v2346 = vmul.f32 %v2086, %v2284
    %v2347 = vmul.f32 %v2088, %v2288
    %v2348 = vmul.f32 %v2090, %v2292
    %v2349 = vmul.f32 %v2092, %v2296
    %v2350 = vmul.f32 %v2094, %v2300
    %v2351 = vmul.f32 %v2096, %v2304
    %v2352 = vmul.f32 %v2098, %v2308
    %v2353 = vmul.f32 %v2100, %v2312
    %v2354 = vmul.f32 %v2102, %v2316
    %v2355 = vmul.f32 %v2104, %v2320
    %v2356 = vmul.f32 %v2106, %v2324
    %v2357 = vadd.f32 %v1393, %v2341
    %v2358 = vadd.f32 %v1394, %v2342
    %v2359 = vadd.f32 %v1395, %v2343
    %v2360 = vadd.f32 %v1396, %v2344
    %v2361 = vadd.f32 %v1397, %v2345
    %v2362 = vadd.f32 %v1398, %v2346
    %v2363 = vadd.f32 %v1399, %v2347
    %v2364 = vadd.f32 %v1400, %v2348
    %v2365 = vadd.f32 %v1401, %v2349
    %v2366 = vadd.f32 %v1402, %v2350
    %v2367 = vadd.f32 %v1403, %v2351
    %v2368 = vadd.f32 %v1404, %v2352
    %v2369 = vadd.f32 %v1405, %v2353
    %v2370 = vadd.f32 %v1406, %v2354
    %v2371 = vadd.f32 %v1407, %v2355
    %v2372 = vadd.f32 %v1408, %v2356
    %v2373 = vmul.f32 %v1813, %v1813
    %v2374 = vmul.f32 %v1816, %v1816
    %v2375 = vmul.f32 %v1819, %v1819
    %v2376 = vmul.f32 %v1822, %v1822
    %v2377 = vmul.f32 %v1825, %v1825
    %v2378 = vmul.f32 %v1828, %v1828
    %v2379 = vmul.f32 %v1831, %v1831
    %v2380 = vmul.f32 %v1834, %v1834
    %v2381 = vmul.f32 %v1837, %v1837
    %v2382 = vmul.f32 %v1840, %v1840
    %v2383 = vmul.f32 %v1843, %v1843
    %v2384 = vmul.f32 %v1846, %v1846
    %v2385 = vmul.f32 %v1849, %v1849
    %v2386 = vmul.f32 %v1852, %v1852
    %v2387 = vmul.f32 %v1855, %v1855
    %v2388 = vmul.f32 %v1858, %v1858
    %v2405 = vlaneseq
    %v2406 = vshrl.u32 %v2405, 7
    %v2407 = vsub.s32 %v918, %v2406
    %v2408 = vrot.slane %v2373, %v2407
    %v2409 = vlaneseq
    %v2410 = vshrl.u32 %v2409, 7
    %v2411 = vsub.s32 %v918, %v2410
    %v2412 = vrot.slane %v2374, %v2411
    %v2413 = vlaneseq
    %v2414 = vshrl.u32 %v2413, 7
    %v2415 = vsub.s32 %v918, %v2414
    %v2416 = vrot.slane %v2375, %v2415
    %v2417 = vlaneseq
    %v2418 = vshrl.u32 %v2417, 7
    %v2419 = vsub.s32 %v918, %v2418
    %v2420 = vrot.slane %v2376, %v2419
    %v2421 = vlaneseq
    %v2422 = vshrl.u32 %v2421, 7
    %v2423 = vsub.s32 %v918, %v2422
    %v2424 = vrot.slane %v2377, %v2423
    %v2425 = vlaneseq
    %v2426 = vshrl.u32 %v2425, 7
    %v2427 = vsub.s32 %v918, %v2426
    %v2428 = vrot.slane %v2378, %v2427
    %v2429 = vlaneseq
    %v2430 = vshrl.u32 %v2429, 7
    %v2431 = vsub.s32 %v918, %v2430
    %v2432 = vrot.slane %v2379, %v2431
    %v2433 = vlaneseq
    %v2434 = vshrl.u32 %v2433, 7
    %v2435 = vsub.s32 %v918, %v2434
    %v2436 = vrot.slane %v2380, %v2435
    %v2437 = vlaneseq
    %v2438 = vshrl.u32 %v2437, 7
    %v2439 = vsub.s32 %v918, %v2438
    %v2440 = vrot.slane %v2381, %v2439
    %v2441 = vlaneseq
    %v2442 = vshrl.u32 %v2441, 7
    %v2443 = vsub.s32 %v918, %v2442
    %v2444 = vrot.slane %v2382, %v2443
    %v2445 = vlaneseq
    %v2446 = vshrl.u32 %v2445, 7
    %v2447 = vsub.s32 %v918, %v2446
    %v2448 = vrot.slane %v2383, %v2447
    %v2449 = vlaneseq
    %v2450 = vshrl.u32 %v2449, 7
    %v2451 = vsub.s32 %v918, %v2450
    %v2452 = vrot.slane %v2384, %v2451
    %v2453 = vlaneseq
    %v2454 = vshrl.u32 %v2453, 7
    %v2455 = vsub.s32 %v918, %v2454
    %v2456 = vrot.slane %v2385, %v2455
    %v2457 = vlaneseq
    %v2458 = vshrl.u32 %v2457, 7
    %v2459 = vsub.s32 %v918, %v2458
    %v2460 = vrot.slane %v2386, %v2459
    %v2461 = vlaneseq
    %v2462 = vshrl.u32 %v2461, 7
    %v2463 = vsub.s32 %v918, %v2462
    %v2464 = vrot.slane %v2387, %v2463
    %v2465 = vlaneseq
    %v2466 = vshrl.u32 %v2465, 7
    %v2467 = vsub.s32 %v918, %v2466
    %v2468 = vrot.slane %v2388, %v2467
    %v2469 = vsel %vm983, %v2412, %v2408
    %v2470 = vsel %vm985, %v2416, %v2469
    %v2471 = vsel %vm987, %v2420, %v2470
    %v2472 = vsel %vm989, %v2424, %v2471
    %v2473 = vsel %vm991, %v2428, %v2472
    %v2474 = vsel %vm993, %v2432, %v2473
    %v2475 = vsel %vm995, %v2436, %v2474
    %v2476 = vsel %vm983, %v2444, %v2440
    %v2477 = vsel %vm985, %v2448, %v2476
    %v2478 = vsel %vm987, %v2452, %v2477
    %v2479 = vsel %vm989, %v2456, %v2478
    %v2480 = vsel %vm991, %v2460, %v2479
    %v2481 = vsel %vm993, %v2464, %v2480
    %v2482 = vsel %vm995, %v2468, %v2481
    %v2485 = vsel %vm1006, %v2475, 0.0
    %2486 = vadd.xlane.f32.xlu0 %v2485
    %v2487 = vpop.xlane.xlu0 %2486
    %v2488 = vsel %vm1006, %v2482, 0.0
    %2489 = vadd.xlane.f32.xlu0 %v2488
    %v2490 = vpop.xlane.xlu0 %2489
    %v2491 = vmul.f32 %v2487, %v835
    %v2492 = vmul.f32 %v2490, %v836
    %v2493 = vadd.f32 %v2341, 1e-08
    %v2494 = vadd.f32 %v2342, 1e-08
    %v2495 = vadd.f32 %v2343, 1e-08
    %v2496 = vadd.f32 %v2344, 1e-08
    %v2497 = vadd.f32 %v2345, 1e-08
    %v2498 = vadd.f32 %v2346, 1e-08
    %v2499 = vadd.f32 %v2347, 1e-08
    %v2500 = vadd.f32 %v2348, 1e-08
    %v2501 = vadd.f32 %v2349, 1e-08
    %v2502 = vadd.f32 %v2350, 1e-08
    %v2503 = vadd.f32 %v2351, 1e-08
    %v2504 = vadd.f32 %v2352, 1e-08
    %v2505 = vadd.f32 %v2353, 1e-08
    %v2506 = vadd.f32 %v2354, 1e-08
    %v2507 = vadd.f32 %v2355, 1e-08
    %v2508 = vadd.f32 %v2356, 1e-08
    %v2509 = vlog2.pop %v2493
    %v2510 = vmul.f32 %v2509, 0.6931472
    %v2511 = vlog2.pop %v2494
    %v2512 = vmul.f32 %v2511, 0.6931472
    %v2513 = vlog2.pop %v2495
    %v2514 = vmul.f32 %v2513, 0.6931472
    %v2515 = vlog2.pop %v2496
    %v2516 = vmul.f32 %v2515, 0.6931472
    %v2517 = vlog2.pop %v2497
    %v2518 = vmul.f32 %v2517, 0.6931472
    %v2519 = vlog2.pop %v2498
    %v2520 = vmul.f32 %v2519, 0.6931472
    %v2521 = vlog2.pop %v2499
    %v2522 = vmul.f32 %v2521, 0.6931472
    %v2523 = vlog2.pop %v2500
    %v2524 = vmul.f32 %v2523, 0.6931472
    %v2525 = vlog2.pop %v2501
    %v2526 = vmul.f32 %v2525, 0.6931472
    %v2527 = vlog2.pop %v2502
    %v2528 = vmul.f32 %v2527, 0.6931472
    %v2529 = vlog2.pop %v2503
    %v2530 = vmul.f32 %v2529, 0.6931472
    %v2531 = vlog2.pop %v2504
    %v2532 = vmul.f32 %v2531, 0.6931472
    %v2533 = vlog2.pop %v2505
    %v2534 = vmul.f32 %v2533, 0.6931472
    %v2535 = vlog2.pop %v2506
    %v2536 = vmul.f32 %v2535, 0.6931472
    %v2537 = vlog2.pop %v2507
    %v2538 = vmul.f32 %v2537, 0.6931472
    %v2539 = vlog2.pop %v2508
    %v2540 = vmul.f32 %v2539, 0.6931472
    %v2541 = vmul.f32 %v2510, %v2341
    %v2542 = vmul.f32 %v2512, %v2342
    %v2543 = vmul.f32 %v2514, %v2343
    %v2544 = vmul.f32 %v2516, %v2344
    %v2545 = vmul.f32 %v2518, %v2345
    %v2546 = vmul.f32 %v2520, %v2346
    %v2547 = vmul.f32 %v2522, %v2347
    %v2548 = vmul.f32 %v2524, %v2348
    %v2549 = vmul.f32 %v2526, %v2349
    %v2550 = vmul.f32 %v2528, %v2350
    %v2551 = vmul.f32 %v2530, %v2351
    %v2552 = vmul.f32 %v2532, %v2352
    %v2553 = vmul.f32 %v2534, %v2353
    %v2554 = vmul.f32 %v2536, %v2354
    %v2555 = vmul.f32 %v2538, %v2355
    %v2556 = vmul.f32 %v2540, %v2356
    %2573 = vset.pattern.permute.xlu0 0
    %2574 = vperm.xlu0 %2573, %v2541
    %v2575 = vpop.permute.xlu0 %2574
    %2576 = vset.pattern.permute.xlu0 0
    %2577 = vperm.xlu0 %2576, %v2542
    %v2578 = vpop.permute.xlu0 %2577
    %2579 = vset.pattern.permute.xlu0 0
    %2580 = vperm.xlu0 %2579, %v2543
    %v2581 = vpop.permute.xlu0 %2580
    %2582 = vset.pattern.permute.xlu0 0
    %2583 = vperm.xlu0 %2582, %v2544
    %v2584 = vpop.permute.xlu0 %2583
    %2585 = vset.pattern.permute.xlu0 0
    %2586 = vperm.xlu0 %2585, %v2545
    %v2587 = vpop.permute.xlu0 %2586
    %2588 = vset.pattern.permute.xlu0 0
    %2589 = vperm.xlu0 %2588, %v2546
    %v2590 = vpop.permute.xlu0 %2589
    %2591 = vset.pattern.permute.xlu0 0
    %2592 = vperm.xlu0 %2591, %v2547
    %v2593 = vpop.permute.xlu0 %2592
    %2594 = vset.pattern.permute.xlu0 0
    %2595 = vperm.xlu0 %2594, %v2548
    %v2596 = vpop.permute.xlu0 %2595
    %2597 = vset.pattern.permute.xlu0 0
    %2598 = vperm.xlu0 %2597, %v2549
    %v2599 = vpop.permute.xlu0 %2598
    %2600 = vset.pattern.permute.xlu0 0
    %2601 = vperm.xlu0 %2600, %v2550
    %v2602 = vpop.permute.xlu0 %2601
    %2603 = vset.pattern.permute.xlu0 0
    %2604 = vperm.xlu0 %2603, %v2551
    %v2605 = vpop.permute.xlu0 %2604
    %2606 = vset.pattern.permute.xlu0 0
    %2607 = vperm.xlu0 %2606, %v2552
    %v2608 = vpop.permute.xlu0 %2607
    %2609 = vset.pattern.permute.xlu0 0
    %2610 = vperm.xlu0 %2609, %v2553
    %v2611 = vpop.permute.xlu0 %2610
    %2612 = vset.pattern.permute.xlu0 0
    %2613 = vperm.xlu0 %2612, %v2554
    %v2614 = vpop.permute.xlu0 %2613
    %2615 = vset.pattern.permute.xlu0 0
    %2616 = vperm.xlu0 %2615, %v2555
    %v2617 = vpop.permute.xlu0 %2616
    %2618 = vset.pattern.permute.xlu0 0
    %2619 = vperm.xlu0 %2618, %v2556
    %v2620 = vpop.permute.xlu0 %2619
    %v2621 = vlaneseq
    %v2622 = vshrl.u32 %v2621, 7
    %v2623 = vsub.s32 %v918, %v2622
    %v2624 = vrot.slane %v2575, %v2623
    %v2625 = vlaneseq
    %v2626 = vshrl.u32 %v2625, 7
    %v2627 = vsub.s32 %v918, %v2626
    %v2628 = vrot.slane %v2578, %v2627
    %v2629 = vlaneseq
    %v2630 = vshrl.u32 %v2629, 7
    %v2631 = vsub.s32 %v918, %v2630
    %v2632 = vrot.slane %v2581, %v2631
    %v2633 = vlaneseq
    %v2634 = vshrl.u32 %v2633, 7
    %v2635 = vsub.s32 %v918, %v2634
    %v2636 = vrot.slane %v2584, %v2635
    %v2637 = vlaneseq
    %v2638 = vshrl.u32 %v2637, 7
    %v2639 = vsub.s32 %v918, %v2638
    %v2640 = vrot.slane %v2587, %v2639
    %v2641 = vlaneseq
    %v2642 = vshrl.u32 %v2641, 7
    %v2643 = vsub.s32 %v918, %v2642
    %v2644 = vrot.slane %v2590, %v2643
    %v2645 = vlaneseq
    %v2646 = vshrl.u32 %v2645, 7
    %v2647 = vsub.s32 %v918, %v2646
    %v2648 = vrot.slane %v2593, %v2647
    %v2649 = vlaneseq
    %v2650 = vshrl.u32 %v2649, 7
    %v2651 = vsub.s32 %v918, %v2650
    %v2652 = vrot.slane %v2596, %v2651
    %v2653 = vlaneseq
    %v2654 = vshrl.u32 %v2653, 7
    %v2655 = vsub.s32 %v918, %v2654
    %v2656 = vrot.slane %v2599, %v2655
    %v2657 = vlaneseq
    %v2658 = vshrl.u32 %v2657, 7
    %v2659 = vsub.s32 %v918, %v2658
    %v2660 = vrot.slane %v2602, %v2659
    %v2661 = vlaneseq
    %v2662 = vshrl.u32 %v2661, 7
    %v2663 = vsub.s32 %v918, %v2662
    %v2664 = vrot.slane %v2605, %v2663
    %v2665 = vlaneseq
    %v2666 = vshrl.u32 %v2665, 7
    %v2667 = vsub.s32 %v918, %v2666
    %v2668 = vrot.slane %v2608, %v2667
    %v2669 = vlaneseq
    %v2670 = vshrl.u32 %v2669, 7
    %v2671 = vsub.s32 %v918, %v2670
    %v2672 = vrot.slane %v2611, %v2671
    %v2673 = vlaneseq
    %v2674 = vshrl.u32 %v2673, 7
    %v2675 = vsub.s32 %v918, %v2674
    %v2676 = vrot.slane %v2614, %v2675
    %v2677 = vlaneseq
    %v2678 = vshrl.u32 %v2677, 7
    %v2679 = vsub.s32 %v918, %v2678
    %v2680 = vrot.slane %v2617, %v2679
    %v2681 = vlaneseq
    %v2682 = vshrl.u32 %v2681, 7
    %v2683 = vsub.s32 %v918, %v2682
    %v2684 = vrot.slane %v2620, %v2683
    %v2685 = vsel %vm983, %v2628, %v2624
    %v2686 = vsel %vm985, %v2632, %v2685
    %v2687 = vsel %vm987, %v2636, %v2686
    %v2688 = vsel %vm989, %v2640, %v2687
    %v2689 = vsel %vm991, %v2644, %v2688
    %v2690 = vsel %vm993, %v2648, %v2689
    %v2691 = vsel %vm995, %v2652, %v2690
    %v2692 = vsel %vm983, %v2660, %v2656
    %v2693 = vsel %vm985, %v2664, %v2692
    %v2694 = vsel %vm987, %v2668, %v2693
    %v2695 = vsel %vm989, %v2672, %v2694
    %v2696 = vsel %vm991, %v2676, %v2695
    %v2697 = vsel %vm993, %v2680, %v2696
    %v2698 = vsel %vm995, %v2684, %v2697
    %v2701 = vsel %vm1006, %v2691, 0.0
    %2702 = vadd.xlane.f32.xlu0 %v2701
    %v2703 = vpop.xlane.xlu0 %2702
    %v2704 = vsel %vm1006, %v2698, 0.0
    %2705 = vadd.xlane.f32.xlu0 %v2704
    %v2706 = vpop.xlane.xlu0 %2705
    %v2707 = vsub.f32 0.0, %v2703
    %v2708 = vsub.f32 0.0, %v2706
    %v2709 = vmul.f32 %v2707, %v835
    %v2710 = vmul.f32 %v2708, %v836
    %2711 = vrot.lane.b32.xlu0 %v808, 64
    %v2712 = vpop.permute.xlu0 %2711
    %2713 = vrot.lane.b32.xlu0 %v809, 64
    %v2714 = vpop.permute.xlu0 %2713
    %2715 = vrot.lane.b32.xlu0 %v810, 64
    %v2716 = vpop.permute.xlu0 %2715
    %2717 = vrot.lane.b32.xlu0 %v811, 64
    %v2718 = vpop.permute.xlu0 %2717
    %2719 = vrot.lane.b32.xlu0 %v812, 64
    %v2720 = vpop.permute.xlu0 %2719
    %2721 = vrot.lane.b32.xlu0 %v813, 64
    %v2722 = vpop.permute.xlu0 %2721
    %2723 = vrot.lane.b32.xlu0 %v814, 64
    %v2724 = vpop.permute.xlu0 %2723
    %2725 = vrot.lane.b32.xlu0 %v815, 64
    %v2726 = vpop.permute.xlu0 %2725
    %2727 = vrot.lane.b32.xlu0 %v816, 64
    %v2728 = vpop.permute.xlu0 %2727
    %2729 = vrot.lane.b32.xlu0 %v817, 64
    %v2730 = vpop.permute.xlu0 %2729
    %2731 = vrot.lane.b32.xlu0 %v818, 64
    %v2732 = vpop.permute.xlu0 %2731
    %2733 = vrot.lane.b32.xlu0 %v819, 64
    %v2734 = vpop.permute.xlu0 %2733
    %2735 = vrot.lane.b32.xlu0 %v820, 64
    %v2736 = vpop.permute.xlu0 %2735
    %2737 = vrot.lane.b32.xlu0 %v821, 64
    %v2738 = vpop.permute.xlu0 %2737
    %2739 = vrot.lane.b32.xlu0 %v822, 64
    %v2740 = vpop.permute.xlu0 %2739
    %2741 = vrot.lane.b32.xlu0 %v823, 64
    %v2742 = vpop.permute.xlu0 %2741
    %v2759 = vsel %vm160, %v2712, 0.0
    %2760 = vadd.xlane.f32.xlu0 %v2759
    %v2761 = vpop.xlane.xlu0 %2760
    %v2762 = vsel %vm160, %v2714, 0.0
    %2763 = vadd.xlane.f32.xlu0 %v2762
    %v2764 = vpop.xlane.xlu0 %2763
    %v2765 = vsel %vm160, %v2716, 0.0
    %2766 = vadd.xlane.f32.xlu0 %v2765
    %v2767 = vpop.xlane.xlu0 %2766
    %v2768 = vsel %vm160, %v2718, 0.0
    %2769 = vadd.xlane.f32.xlu0 %v2768
    %v2770 = vpop.xlane.xlu0 %2769
    %v2771 = vsel %vm160, %v2720, 0.0
    %2772 = vadd.xlane.f32.xlu0 %v2771
    %v2773 = vpop.xlane.xlu0 %2772
    %v2774 = vsel %vm160, %v2722, 0.0
    %2775 = vadd.xlane.f32.xlu0 %v2774
    %v2776 = vpop.xlane.xlu0 %2775
    %v2777 = vsel %vm160, %v2724, 0.0
    %2778 = vadd.xlane.f32.xlu0 %v2777
    %v2779 = vpop.xlane.xlu0 %2778
    %v2780 = vsel %vm160, %v2726, 0.0
    %2781 = vadd.xlane.f32.xlu0 %v2780
    %v2782 = vpop.xlane.xlu0 %2781
    %v2783 = vsel %vm160, %v2728, 0.0
    %2784 = vadd.xlane.f32.xlu0 %v2783
    %v2785 = vpop.xlane.xlu0 %2784
    %v2786 = vsel %vm160, %v2730, 0.0
    %2787 = vadd.xlane.f32.xlu0 %v2786
    %v2788 = vpop.xlane.xlu0 %2787
    %v2789 = vsel %vm160, %v2732, 0.0
    %2790 = vadd.xlane.f32.xlu0 %v2789
    %v2791 = vpop.xlane.xlu0 %2790
    %v2792 = vsel %vm160, %v2734, 0.0
    %2793 = vadd.xlane.f32.xlu0 %v2792
    %v2794 = vpop.xlane.xlu0 %2793
    %v2795 = vsel %vm160, %v2736, 0.0
    %2796 = vadd.xlane.f32.xlu0 %v2795
    %v2797 = vpop.xlane.xlu0 %2796
    %v2798 = vsel %vm160, %v2738, 0.0
    %2799 = vadd.xlane.f32.xlu0 %v2798
    %v2800 = vpop.xlane.xlu0 %2799
    %v2801 = vsel %vm160, %v2740, 0.0
    %2802 = vadd.xlane.f32.xlu0 %v2801
    %v2803 = vpop.xlane.xlu0 %2802
    %v2804 = vsel %vm160, %v2742, 0.0
    %2805 = vadd.xlane.f32.xlu0 %v2804
    %v2806 = vpop.xlane.xlu0 %2805
    %v2807 = vmul.f32 %v2761, 0.17677669
    %v2808 = vmul.f32 %v2764, 0.17677669
    %v2809 = vmul.f32 %v2767, 0.17677669
    %v2810 = vmul.f32 %v2770, 0.17677669
    %v2811 = vmul.f32 %v2773, 0.17677669
    %v2812 = vmul.f32 %v2776, 0.17677669
    %v2813 = vmul.f32 %v2779, 0.17677669
    %v2814 = vmul.f32 %v2782, 0.17677669
    %v2815 = vmul.f32 %v2785, 0.17677669
    %v2816 = vmul.f32 %v2788, 0.17677669
    %v2817 = vmul.f32 %v2791, 0.17677669
    %v2818 = vmul.f32 %v2794, 0.17677669
    %v2819 = vmul.f32 %v2797, 0.17677669
    %v2820 = vmul.f32 %v2800, 0.17677669
    %v2821 = vmul.f32 %v2803, 0.17677669
    %v2822 = vmul.f32 %v2806, 0.17677669
    %v2839 = vlaneseq
    %v2840 = vshrl.u32 %v2839, 7
    %v2841 = vsub.s32 %v918, %v2840
    %v2842 = vrot.slane %v2807, %v2841
    %v2843 = vlaneseq
    %v2844 = vshrl.u32 %v2843, 7
    %v2845 = vsub.s32 %v918, %v2844
    %v2846 = vrot.slane %v2808, %v2845
    %v2847 = vlaneseq
    %v2848 = vshrl.u32 %v2847, 7
    %v2849 = vsub.s32 %v918, %v2848
    %v2850 = vrot.slane %v2809, %v2849
    %v2851 = vlaneseq
    %v2852 = vshrl.u32 %v2851, 7
    %v2853 = vsub.s32 %v918, %v2852
    %v2854 = vrot.slane %v2810, %v2853
    %v2855 = vlaneseq
    %v2856 = vshrl.u32 %v2855, 7
    %v2857 = vsub.s32 %v918, %v2856
    %v2858 = vrot.slane %v2811, %v2857
    %v2859 = vlaneseq
    %v2860 = vshrl.u32 %v2859, 7
    %v2861 = vsub.s32 %v918, %v2860
    %v2862 = vrot.slane %v2812, %v2861
    %v2863 = vlaneseq
    %v2864 = vshrl.u32 %v2863, 7
    %v2865 = vsub.s32 %v918, %v2864
    %v2866 = vrot.slane %v2813, %v2865
    %v2867 = vlaneseq
    %v2868 = vshrl.u32 %v2867, 7
    %v2869 = vsub.s32 %v918, %v2868
    %v2870 = vrot.slane %v2814, %v2869
    %v2871 = vlaneseq
    %v2872 = vshrl.u32 %v2871, 7
    %v2873 = vsub.s32 %v918, %v2872
    %v2874 = vrot.slane %v2815, %v2873
    %v2875 = vlaneseq
    %v2876 = vshrl.u32 %v2875, 7
    %v2877 = vsub.s32 %v918, %v2876
    %v2878 = vrot.slane %v2816, %v2877
    %v2879 = vlaneseq
    %v2880 = vshrl.u32 %v2879, 7
    %v2881 = vsub.s32 %v918, %v2880
    %v2882 = vrot.slane %v2817, %v2881
    %v2883 = vlaneseq
    %v2884 = vshrl.u32 %v2883, 7
    %v2885 = vsub.s32 %v918, %v2884
    %v2886 = vrot.slane %v2818, %v2885
    %v2887 = vlaneseq
    %v2888 = vshrl.u32 %v2887, 7
    %v2889 = vsub.s32 %v918, %v2888
    %v2890 = vrot.slane %v2819, %v2889
    %v2891 = vlaneseq
    %v2892 = vshrl.u32 %v2891, 7
    %v2893 = vsub.s32 %v918, %v2892
    %v2894 = vrot.slane %v2820, %v2893
    %v2895 = vlaneseq
    %v2896 = vshrl.u32 %v2895, 7
    %v2897 = vsub.s32 %v918, %v2896
    %v2898 = vrot.slane %v2821, %v2897
    %v2899 = vlaneseq
    %v2900 = vshrl.u32 %v2899, 7
    %v2901 = vsub.s32 %v918, %v2900
    %v2902 = vrot.slane %v2822, %v2901
    %v2903 = vsel %vm983, %v2846, %v2842
    %v2904 = vsel %vm985, %v2850, %v2903
    %v2905 = vsel %vm987, %v2854, %v2904
    %v2906 = vsel %vm989, %v2858, %v2905
    %v2907 = vsel %vm991, %v2862, %v2906
    %v2908 = vsel %vm993, %v2866, %v2907
    %v2909 = vsel %vm995, %v2870, %v2908
    %v2910 = vsel %vm983, %v2878, %v2874
    %v2911 = vsel %vm985, %v2882, %v2910
    %v2912 = vsel %vm987, %v2886, %v2911
    %v2913 = vsel %vm989, %v2890, %v2912
    %v2914 = vsel %vm991, %v2894, %v2913
    %v2915 = vsel %vm993, %v2898, %v2914
    %v2916 = vsel %vm995, %v2902, %v2915
    %v2919 = vsel %vm1006, %v2909, -inf
    %2920 = vmax.xlane.f32.xlu0 %v2919
    %v2921 = vpop.xlane.xlu0 %2920
    %v2922 = vsel %vm1006, %v2916, -inf
    %2923 = vmax.xlane.f32.xlu0 %v2922
    %v2924 = vpop.xlane.xlu0 %2923
    %v2927 = vlaneseq
    %v2928 = vshrl.u32 %v2927, 7
    %v2929 = vsub.s32 0, %v2928
    %v2930 = vrot.slane %v2921, %v2929
    %v2931 = vlaneseq
    %v2932 = vshrl.u32 %v2931, 7
    %v2933 = vsub.s32 1, %v2932
    %v2934 = vrot.slane %v2921, %v2933
    %v2935 = vlaneseq
    %v2936 = vshrl.u32 %v2935, 7
    %v2937 = vsub.s32 2, %v2936
    %v2938 = vrot.slane %v2921, %v2937
    %v2939 = vlaneseq
    %v2940 = vshrl.u32 %v2939, 7
    %v2941 = vsub.s32 3, %v2940
    %v2942 = vrot.slane %v2921, %v2941
    %v2943 = vlaneseq
    %v2944 = vshrl.u32 %v2943, 7
    %v2945 = vsub.s32 4, %v2944
    %v2946 = vrot.slane %v2921, %v2945
    %v2947 = vlaneseq
    %v2948 = vshrl.u32 %v2947, 7
    %v2949 = vsub.s32 5, %v2948
    %v2950 = vrot.slane %v2921, %v2949
    %v2951 = vlaneseq
    %v2952 = vshrl.u32 %v2951, 7
    %v2953 = vsub.s32 6, %v2952
    %v2954 = vrot.slane %v2921, %v2953
    %v2955 = vlaneseq
    %v2956 = vshrl.u32 %v2955, 7
    %v2957 = vsub.s32 7, %v2956
    %v2958 = vrot.slane %v2921, %v2957
    %v2959 = vlaneseq
    %v2960 = vshrl.u32 %v2959, 7
    %v2961 = vsub.s32 0, %v2960
    %v2962 = vrot.slane %v2924, %v2961
    %v2963 = vlaneseq
    %v2964 = vshrl.u32 %v2963, 7
    %v2965 = vsub.s32 1, %v2964
    %v2966 = vrot.slane %v2924, %v2965
    %v2967 = vlaneseq
    %v2968 = vshrl.u32 %v2967, 7
    %v2969 = vsub.s32 2, %v2968
    %v2970 = vrot.slane %v2924, %v2969
    %v2971 = vlaneseq
    %v2972 = vshrl.u32 %v2971, 7
    %v2973 = vsub.s32 3, %v2972
    %v2974 = vrot.slane %v2924, %v2973
    %v2975 = vlaneseq
    %v2976 = vshrl.u32 %v2975, 7
    %v2977 = vsub.s32 4, %v2976
    %v2978 = vrot.slane %v2924, %v2977
    %v2979 = vlaneseq
    %v2980 = vshrl.u32 %v2979, 7
    %v2981 = vsub.s32 5, %v2980
    %v2982 = vrot.slane %v2924, %v2981
    %v2983 = vlaneseq
    %v2984 = vshrl.u32 %v2983, 7
    %v2985 = vsub.s32 6, %v2984
    %v2986 = vrot.slane %v2924, %v2985
    %v2987 = vlaneseq
    %v2988 = vshrl.u32 %v2987, 7
    %v2989 = vsub.s32 7, %v2988
    %v2990 = vrot.slane %v2924, %v2989
    %v3007 = vsub.f32 %v2807, %v2930
    %v3008 = vsub.f32 %v2808, %v2934
    %v3009 = vsub.f32 %v2809, %v2938
    %v3010 = vsub.f32 %v2810, %v2942
    %v3011 = vsub.f32 %v2811, %v2946
    %v3012 = vsub.f32 %v2812, %v2950
    %v3013 = vsub.f32 %v2813, %v2954
    %v3014 = vsub.f32 %v2814, %v2958
    %v3015 = vsub.f32 %v2815, %v2962
    %v3016 = vsub.f32 %v2816, %v2966
    %v3017 = vsub.f32 %v2817, %v2970
    %v3018 = vsub.f32 %v2818, %v2974
    %v3019 = vsub.f32 %v2819, %v2978
    %v3020 = vsub.f32 %v2820, %v2982
    %v3021 = vsub.f32 %v2821, %v2986
    %v3022 = vsub.f32 %v2822, %v2990
    %v3023 = vmul.f32 %v3007, 1.442695
    %v3024 = vpow.pop %v3023
    %v3025 = vmul.f32 %v3008, 1.442695
    %v3026 = vpow.pop %v3025
    %v3027 = vmul.f32 %v3009, 1.442695
    %v3028 = vpow.pop %v3027
    %v3029 = vmul.f32 %v3010, 1.442695
    %v3030 = vpow.pop %v3029
    %v3031 = vmul.f32 %v3011, 1.442695
    %v3032 = vpow.pop %v3031
    %v3033 = vmul.f32 %v3012, 1.442695
    %v3034 = vpow.pop %v3033
    %v3035 = vmul.f32 %v3013, 1.442695
    %v3036 = vpow.pop %v3035
    %v3037 = vmul.f32 %v3014, 1.442695
    %v3038 = vpow.pop %v3037
    %v3039 = vmul.f32 %v3015, 1.442695
    %v3040 = vpow.pop %v3039
    %v3041 = vmul.f32 %v3016, 1.442695
    %v3042 = vpow.pop %v3041
    %v3043 = vmul.f32 %v3017, 1.442695
    %v3044 = vpow.pop %v3043
    %v3045 = vmul.f32 %v3018, 1.442695
    %v3046 = vpow.pop %v3045
    %v3047 = vmul.f32 %v3019, 1.442695
    %v3048 = vpow.pop %v3047
    %v3049 = vmul.f32 %v3020, 1.442695
    %v3050 = vpow.pop %v3049
    %v3051 = vmul.f32 %v3021, 1.442695
    %v3052 = vpow.pop %v3051
    %v3053 = vmul.f32 %v3022, 1.442695
    %v3054 = vpow.pop %v3053
    %3071 = vset.pattern.permute.xlu0 0
    %3072 = vperm.xlu0 %3071, %v3024
    %v3073 = vpop.permute.xlu0 %3072
    %3074 = vset.pattern.permute.xlu0 0
    %3075 = vperm.xlu0 %3074, %v3026
    %v3076 = vpop.permute.xlu0 %3075
    %3077 = vset.pattern.permute.xlu0 0
    %3078 = vperm.xlu0 %3077, %v3028
    %v3079 = vpop.permute.xlu0 %3078
    %3080 = vset.pattern.permute.xlu0 0
    %3081 = vperm.xlu0 %3080, %v3030
    %v3082 = vpop.permute.xlu0 %3081
    %3083 = vset.pattern.permute.xlu0 0
    %3084 = vperm.xlu0 %3083, %v3032
    %v3085 = vpop.permute.xlu0 %3084
    %3086 = vset.pattern.permute.xlu0 0
    %3087 = vperm.xlu0 %3086, %v3034
    %v3088 = vpop.permute.xlu0 %3087
    %3089 = vset.pattern.permute.xlu0 0
    %3090 = vperm.xlu0 %3089, %v3036
    %v3091 = vpop.permute.xlu0 %3090
    %3092 = vset.pattern.permute.xlu0 0
    %3093 = vperm.xlu0 %3092, %v3038
    %v3094 = vpop.permute.xlu0 %3093
    %3095 = vset.pattern.permute.xlu0 0
    %3096 = vperm.xlu0 %3095, %v3040
    %v3097 = vpop.permute.xlu0 %3096
    %3098 = vset.pattern.permute.xlu0 0
    %3099 = vperm.xlu0 %3098, %v3042
    %v3100 = vpop.permute.xlu0 %3099
    %3101 = vset.pattern.permute.xlu0 0
    %3102 = vperm.xlu0 %3101, %v3044
    %v3103 = vpop.permute.xlu0 %3102
    %3104 = vset.pattern.permute.xlu0 0
    %3105 = vperm.xlu0 %3104, %v3046
    %v3106 = vpop.permute.xlu0 %3105
    %3107 = vset.pattern.permute.xlu0 0
    %3108 = vperm.xlu0 %3107, %v3048
    %v3109 = vpop.permute.xlu0 %3108
    %3110 = vset.pattern.permute.xlu0 0
    %3111 = vperm.xlu0 %3110, %v3050
    %v3112 = vpop.permute.xlu0 %3111
    %3113 = vset.pattern.permute.xlu0 0
    %3114 = vperm.xlu0 %3113, %v3052
    %v3115 = vpop.permute.xlu0 %3114
    %3116 = vset.pattern.permute.xlu0 0
    %3117 = vperm.xlu0 %3116, %v3054
    %v3118 = vpop.permute.xlu0 %3117
    %v3119 = vlaneseq
    %v3120 = vshrl.u32 %v3119, 7
    %v3121 = vsub.s32 %v918, %v3120
    %v3122 = vrot.slane %v3073, %v3121
    %v3123 = vlaneseq
    %v3124 = vshrl.u32 %v3123, 7
    %v3125 = vsub.s32 %v918, %v3124
    %v3126 = vrot.slane %v3076, %v3125
    %v3127 = vlaneseq
    %v3128 = vshrl.u32 %v3127, 7
    %v3129 = vsub.s32 %v918, %v3128
    %v3130 = vrot.slane %v3079, %v3129
    %v3131 = vlaneseq
    %v3132 = vshrl.u32 %v3131, 7
    %v3133 = vsub.s32 %v918, %v3132
    %v3134 = vrot.slane %v3082, %v3133
    %v3135 = vlaneseq
    %v3136 = vshrl.u32 %v3135, 7
    %v3137 = vsub.s32 %v918, %v3136
    %v3138 = vrot.slane %v3085, %v3137
    %v3139 = vlaneseq
    %v3140 = vshrl.u32 %v3139, 7
    %v3141 = vsub.s32 %v918, %v3140
    %v3142 = vrot.slane %v3088, %v3141
    %v3143 = vlaneseq
    %v3144 = vshrl.u32 %v3143, 7
    %v3145 = vsub.s32 %v918, %v3144
    %v3146 = vrot.slane %v3091, %v3145
    %v3147 = vlaneseq
    %v3148 = vshrl.u32 %v3147, 7
    %v3149 = vsub.s32 %v918, %v3148
    %v3150 = vrot.slane %v3094, %v3149
    %v3151 = vlaneseq
    %v3152 = vshrl.u32 %v3151, 7
    %v3153 = vsub.s32 %v918, %v3152
    %v3154 = vrot.slane %v3097, %v3153
    %v3155 = vlaneseq
    %v3156 = vshrl.u32 %v3155, 7
    %v3157 = vsub.s32 %v918, %v3156
    %v3158 = vrot.slane %v3100, %v3157
    %v3159 = vlaneseq
    %v3160 = vshrl.u32 %v3159, 7
    %v3161 = vsub.s32 %v918, %v3160
    %v3162 = vrot.slane %v3103, %v3161
    %v3163 = vlaneseq
    %v3164 = vshrl.u32 %v3163, 7
    %v3165 = vsub.s32 %v918, %v3164
    %v3166 = vrot.slane %v3106, %v3165
    %v3167 = vlaneseq
    %v3168 = vshrl.u32 %v3167, 7
    %v3169 = vsub.s32 %v918, %v3168
    %v3170 = vrot.slane %v3109, %v3169
    %v3171 = vlaneseq
    %v3172 = vshrl.u32 %v3171, 7
    %v3173 = vsub.s32 %v918, %v3172
    %v3174 = vrot.slane %v3112, %v3173
    %v3175 = vlaneseq
    %v3176 = vshrl.u32 %v3175, 7
    %v3177 = vsub.s32 %v918, %v3176
    %v3178 = vrot.slane %v3115, %v3177
    %v3179 = vlaneseq
    %v3180 = vshrl.u32 %v3179, 7
    %v3181 = vsub.s32 %v918, %v3180
    %v3182 = vrot.slane %v3118, %v3181
    %v3183 = vsel %vm983, %v3126, %v3122
    %v3184 = vsel %vm985, %v3130, %v3183
    %v3185 = vsel %vm987, %v3134, %v3184
    %v3186 = vsel %vm989, %v3138, %v3185
    %v3187 = vsel %vm991, %v3142, %v3186
    %v3188 = vsel %vm993, %v3146, %v3187
    %v3189 = vsel %vm995, %v3150, %v3188
    %v3190 = vsel %vm983, %v3158, %v3154
    %v3191 = vsel %vm985, %v3162, %v3190
    %v3192 = vsel %vm987, %v3166, %v3191
    %v3193 = vsel %vm989, %v3170, %v3192
    %v3194 = vsel %vm991, %v3174, %v3193
    %v3195 = vsel %vm993, %v3178, %v3194
    %v3196 = vsel %vm995, %v3182, %v3195
    %v3199 = vsel %vm1006, %v3189, 0.0
    %3200 = vadd.xlane.f32.xlu0 %v3199
    %v3201 = vpop.xlane.xlu0 %3200
    %v3202 = vsel %vm1006, %v3196, 0.0
    %3203 = vadd.xlane.f32.xlu0 %v3202
    %v3204 = vpop.xlane.xlu0 %3203
    %v3205 = vrcp.pop %v3201
    %v3206 = vrcp.pop %v3204
    %v3209 = vlaneseq
    %v3210 = vshrl.u32 %v3209, 7
    %v3211 = vsub.s32 0, %v3210
    %v3212 = vrot.slane %v3205, %v3211
    %v3213 = vlaneseq
    %v3214 = vshrl.u32 %v3213, 7
    %v3215 = vsub.s32 1, %v3214
    %v3216 = vrot.slane %v3205, %v3215
    %v3217 = vlaneseq
    %v3218 = vshrl.u32 %v3217, 7
    %v3219 = vsub.s32 2, %v3218
    %v3220 = vrot.slane %v3205, %v3219
    %v3221 = vlaneseq
    %v3222 = vshrl.u32 %v3221, 7
    %v3223 = vsub.s32 3, %v3222
    %v3224 = vrot.slane %v3205, %v3223
    %v3225 = vlaneseq
    %v3226 = vshrl.u32 %v3225, 7
    %v3227 = vsub.s32 4, %v3226
    %v3228 = vrot.slane %v3205, %v3227
    %v3229 = vlaneseq
    %v3230 = vshrl.u32 %v3229, 7
    %v3231 = vsub.s32 5, %v3230
    %v3232 = vrot.slane %v3205, %v3231
    %v3233 = vlaneseq
    %v3234 = vshrl.u32 %v3233, 7
    %v3235 = vsub.s32 6, %v3234
    %v3236 = vrot.slane %v3205, %v3235
    %v3237 = vlaneseq
    %v3238 = vshrl.u32 %v3237, 7
    %v3239 = vsub.s32 7, %v3238
    %v3240 = vrot.slane %v3205, %v3239
    %v3241 = vlaneseq
    %v3242 = vshrl.u32 %v3241, 7
    %v3243 = vsub.s32 0, %v3242
    %v3244 = vrot.slane %v3206, %v3243
    %v3245 = vlaneseq
    %v3246 = vshrl.u32 %v3245, 7
    %v3247 = vsub.s32 1, %v3246
    %v3248 = vrot.slane %v3206, %v3247
    %v3249 = vlaneseq
    %v3250 = vshrl.u32 %v3249, 7
    %v3251 = vsub.s32 2, %v3250
    %v3252 = vrot.slane %v3206, %v3251
    %v3253 = vlaneseq
    %v3254 = vshrl.u32 %v3253, 7
    %v3255 = vsub.s32 3, %v3254
    %v3256 = vrot.slane %v3206, %v3255
    %v3257 = vlaneseq
    %v3258 = vshrl.u32 %v3257, 7
    %v3259 = vsub.s32 4, %v3258
    %v3260 = vrot.slane %v3206, %v3259
    %v3261 = vlaneseq
    %v3262 = vshrl.u32 %v3261, 7
    %v3263 = vsub.s32 5, %v3262
    %v3264 = vrot.slane %v3206, %v3263
    %v3265 = vlaneseq
    %v3266 = vshrl.u32 %v3265, 7
    %v3267 = vsub.s32 6, %v3266
    %v3268 = vrot.slane %v3206, %v3267
    %v3269 = vlaneseq
    %v3270 = vshrl.u32 %v3269, 7
    %v3271 = vsub.s32 7, %v3270
    %v3272 = vrot.slane %v3206, %v3271
    %v3289 = vmul.f32 %v3024, %v3212
    %v3290 = vmul.f32 %v3026, %v3216
    %v3291 = vmul.f32 %v3028, %v3220
    %v3292 = vmul.f32 %v3030, %v3224
    %v3293 = vmul.f32 %v3032, %v3228
    %v3294 = vmul.f32 %v3034, %v3232
    %v3295 = vmul.f32 %v3036, %v3236
    %v3296 = vmul.f32 %v3038, %v3240
    %v3297 = vmul.f32 %v3040, %v3244
    %v3298 = vmul.f32 %v3042, %v3248
    %v3299 = vmul.f32 %v3044, %v3252
    %v3300 = vmul.f32 %v3046, %v3256
    %v3301 = vmul.f32 %v3048, %v3260
    %v3302 = vmul.f32 %v3050, %v3264
    %v3303 = vmul.f32 %v3052, %v3268
    %v3304 = vmul.f32 %v3054, %v3272
    %v3305 = vadd.f32 %v2357, %v3289
    %v3306 = vadd.f32 %v2358, %v3290
    %v3307 = vadd.f32 %v2359, %v3291
    %v3308 = vadd.f32 %v2360, %v3292
    %v3309 = vadd.f32 %v2361, %v3293
    %v3310 = vadd.f32 %v2362, %v3294
    %v3311 = vadd.f32 %v2363, %v3295
    %v3312 = vadd.f32 %v2364, %v3296
    %v3313 = vadd.f32 %v2365, %v3297
    %v3314 = vadd.f32 %v2366, %v3298
    %v3315 = vadd.f32 %v2367, %v3299
    %v3316 = vadd.f32 %v2368, %v3300
    %v3317 = vadd.f32 %v2369, %v3301
    %v3318 = vadd.f32 %v2370, %v3302
    %v3319 = vadd.f32 %v2371, %v3303
    %v3320 = vadd.f32 %v2372, %v3304
    %v3321 = vmul.f32 %v2761, %v2761
    %v3322 = vmul.f32 %v2764, %v2764
    %v3323 = vmul.f32 %v2767, %v2767
    %v3324 = vmul.f32 %v2770, %v2770
    %v3325 = vmul.f32 %v2773, %v2773
    %v3326 = vmul.f32 %v2776, %v2776
    %v3327 = vmul.f32 %v2779, %v2779
    %v3328 = vmul.f32 %v2782, %v2782
    %v3329 = vmul.f32 %v2785, %v2785
    %v3330 = vmul.f32 %v2788, %v2788
    %v3331 = vmul.f32 %v2791, %v2791
    %v3332 = vmul.f32 %v2794, %v2794
    %v3333 = vmul.f32 %v2797, %v2797
    %v3334 = vmul.f32 %v2800, %v2800
    %v3335 = vmul.f32 %v2803, %v2803
    %v3336 = vmul.f32 %v2806, %v2806
    %v3353 = vlaneseq
    %v3354 = vshrl.u32 %v3353, 7
    %v3355 = vsub.s32 %v918, %v3354
    %v3356 = vrot.slane %v3321, %v3355
    %v3357 = vlaneseq
    %v3358 = vshrl.u32 %v3357, 7
    %v3359 = vsub.s32 %v918, %v3358
    %v3360 = vrot.slane %v3322, %v3359
    %v3361 = vlaneseq
    %v3362 = vshrl.u32 %v3361, 7
    %v3363 = vsub.s32 %v918, %v3362
    %v3364 = vrot.slane %v3323, %v3363
    %v3365 = vlaneseq
    %v3366 = vshrl.u32 %v3365, 7
    %v3367 = vsub.s32 %v918, %v3366
    %v3368 = vrot.slane %v3324, %v3367
    %v3369 = vlaneseq
    %v3370 = vshrl.u32 %v3369, 7
    %v3371 = vsub.s32 %v918, %v3370
    %v3372 = vrot.slane %v3325, %v3371
    %v3373 = vlaneseq
    %v3374 = vshrl.u32 %v3373, 7
    %v3375 = vsub.s32 %v918, %v3374
    %v3376 = vrot.slane %v3326, %v3375
    %v3377 = vlaneseq
    %v3378 = vshrl.u32 %v3377, 7
    %v3379 = vsub.s32 %v918, %v3378
    %v3380 = vrot.slane %v3327, %v3379
    %v3381 = vlaneseq
    %v3382 = vshrl.u32 %v3381, 7
    %v3383 = vsub.s32 %v918, %v3382
    %v3384 = vrot.slane %v3328, %v3383
    %v3385 = vlaneseq
    %v3386 = vshrl.u32 %v3385, 7
    %v3387 = vsub.s32 %v918, %v3386
    %v3388 = vrot.slane %v3329, %v3387
    %v3389 = vlaneseq
    %v3390 = vshrl.u32 %v3389, 7
    %v3391 = vsub.s32 %v918, %v3390
    %v3392 = vrot.slane %v3330, %v3391
    %v3393 = vlaneseq
    %v3394 = vshrl.u32 %v3393, 7
    %v3395 = vsub.s32 %v918, %v3394
    %v3396 = vrot.slane %v3331, %v3395
    %v3397 = vlaneseq
    %v3398 = vshrl.u32 %v3397, 7
    %v3399 = vsub.s32 %v918, %v3398
    %v3400 = vrot.slane %v3332, %v3399
    %v3401 = vlaneseq
    %v3402 = vshrl.u32 %v3401, 7
    %v3403 = vsub.s32 %v918, %v3402
    %v3404 = vrot.slane %v3333, %v3403
    %v3405 = vlaneseq
    %v3406 = vshrl.u32 %v3405, 7
    %v3407 = vsub.s32 %v918, %v3406
    %v3408 = vrot.slane %v3334, %v3407
    %v3409 = vlaneseq
    %v3410 = vshrl.u32 %v3409, 7
    %v3411 = vsub.s32 %v918, %v3410
    %v3412 = vrot.slane %v3335, %v3411
    %v3413 = vlaneseq
    %v3414 = vshrl.u32 %v3413, 7
    %v3415 = vsub.s32 %v918, %v3414
    %v3416 = vrot.slane %v3336, %v3415
    %v3417 = vsel %vm983, %v3360, %v3356
    %v3418 = vsel %vm985, %v3364, %v3417
    %v3419 = vsel %vm987, %v3368, %v3418
    %v3420 = vsel %vm989, %v3372, %v3419
    %v3421 = vsel %vm991, %v3376, %v3420
    %v3422 = vsel %vm993, %v3380, %v3421
    %v3423 = vsel %vm995, %v3384, %v3422
    %v3424 = vsel %vm983, %v3392, %v3388
    %v3425 = vsel %vm985, %v3396, %v3424
    %v3426 = vsel %vm987, %v3400, %v3425
    %v3427 = vsel %vm989, %v3404, %v3426
    %v3428 = vsel %vm991, %v3408, %v3427
    %v3429 = vsel %vm993, %v3412, %v3428
    %v3430 = vsel %vm995, %v3416, %v3429
    %v3433 = vsel %vm1006, %v3423, 0.0
    %3434 = vadd.xlane.f32.xlu0 %v3433
    %v3435 = vpop.xlane.xlu0 %3434
    %v3436 = vsel %vm1006, %v3430, 0.0
    %3437 = vadd.xlane.f32.xlu0 %v3436
    %v3438 = vpop.xlane.xlu0 %3437
    %v3439 = vmul.f32 %v3435, %v835
    %v3440 = vmul.f32 %v3438, %v836
    %v3441 = vadd.f32 %v3289, 1e-08
    %v3442 = vadd.f32 %v3290, 1e-08
    %v3443 = vadd.f32 %v3291, 1e-08
    %v3444 = vadd.f32 %v3292, 1e-08
    %v3445 = vadd.f32 %v3293, 1e-08
    %v3446 = vadd.f32 %v3294, 1e-08
    %v3447 = vadd.f32 %v3295, 1e-08
    %v3448 = vadd.f32 %v3296, 1e-08
    %v3449 = vadd.f32 %v3297, 1e-08
    %v3450 = vadd.f32 %v3298, 1e-08
    %v3451 = vadd.f32 %v3299, 1e-08
    %v3452 = vadd.f32 %v3300, 1e-08
    %v3453 = vadd.f32 %v3301, 1e-08
    %v3454 = vadd.f32 %v3302, 1e-08
    %v3455 = vadd.f32 %v3303, 1e-08
    %v3456 = vadd.f32 %v3304, 1e-08
    %v3457 = vlog2.pop %v3441
    %v3458 = vmul.f32 %v3457, 0.6931472
    %v3459 = vlog2.pop %v3442
    %v3460 = vmul.f32 %v3459, 0.6931472
    %v3461 = vlog2.pop %v3443
    %v3462 = vmul.f32 %v3461, 0.6931472
    %v3463 = vlog2.pop %v3444
    %v3464 = vmul.f32 %v3463, 0.6931472
    %v3465 = vlog2.pop %v3445
    %v3466 = vmul.f32 %v3465, 0.6931472
    %v3467 = vlog2.pop %v3446
    %v3468 = vmul.f32 %v3467, 0.6931472
    %v3469 = vlog2.pop %v3447
    %v3470 = vmul.f32 %v3469, 0.6931472
    %v3471 = vlog2.pop %v3448
    %v3472 = vmul.f32 %v3471, 0.6931472
    %v3473 = vlog2.pop %v3449
    %v3474 = vmul.f32 %v3473, 0.6931472
    %v3475 = vlog2.pop %v3450
    %v3476 = vmul.f32 %v3475, 0.6931472
    %v3477 = vlog2.pop %v3451
    %v3478 = vmul.f32 %v3477, 0.6931472
    %v3479 = vlog2.pop %v3452
    %v3480 = vmul.f32 %v3479, 0.6931472
    %v3481 = vlog2.pop %v3453
    %v3482 = vmul.f32 %v3481, 0.6931472
    %v3483 = vlog2.pop %v3454
    %v3484 = vmul.f32 %v3483, 0.6931472
    %v3485 = vlog2.pop %v3455
    %v3486 = vmul.f32 %v3485, 0.6931472
    %v3487 = vlog2.pop %v3456
    %v3488 = vmul.f32 %v3487, 0.6931472
    %v3489 = vmul.f32 %v3458, %v3289
    %v3490 = vmul.f32 %v3460, %v3290
    %v3491 = vmul.f32 %v3462, %v3291
    %v3492 = vmul.f32 %v3464, %v3292
    %v3493 = vmul.f32 %v3466, %v3293
    %v3494 = vmul.f32 %v3468, %v3294
    %v3495 = vmul.f32 %v3470, %v3295
    %v3496 = vmul.f32 %v3472, %v3296
    %v3497 = vmul.f32 %v3474, %v3297
    %v3498 = vmul.f32 %v3476, %v3298
    %v3499 = vmul.f32 %v3478, %v3299
    %v3500 = vmul.f32 %v3480, %v3300
    %v3501 = vmul.f32 %v3482, %v3301
    %v3502 = vmul.f32 %v3484, %v3302
    %v3503 = vmul.f32 %v3486, %v3303
    %v3504 = vmul.f32 %v3488, %v3304
    %3521 = vset.pattern.permute.xlu0 0
    %3522 = vperm.xlu0 %3521, %v3489
    %v3523 = vpop.permute.xlu0 %3522
    %3524 = vset.pattern.permute.xlu0 0
    %3525 = vperm.xlu0 %3524, %v3490
    %v3526 = vpop.permute.xlu0 %3525
    %3527 = vset.pattern.permute.xlu0 0
    %3528 = vperm.xlu0 %3527, %v3491
    %v3529 = vpop.permute.xlu0 %3528
    %3530 = vset.pattern.permute.xlu0 0
    %3531 = vperm.xlu0 %3530, %v3492
    %v3532 = vpop.permute.xlu0 %3531
    %3533 = vset.pattern.permute.xlu0 0
    %3534 = vperm.xlu0 %3533, %v3493
    %v3535 = vpop.permute.xlu0 %3534
    %3536 = vset.pattern.permute.xlu0 0
    %3537 = vperm.xlu0 %3536, %v3494
    %v3538 = vpop.permute.xlu0 %3537
    %3539 = vset.pattern.permute.xlu0 0
    %3540 = vperm.xlu0 %3539, %v3495
    %v3541 = vpop.permute.xlu0 %3540
    %3542 = vset.pattern.permute.xlu0 0
    %3543 = vperm.xlu0 %3542, %v3496
    %v3544 = vpop.permute.xlu0 %3543
    %3545 = vset.pattern.permute.xlu0 0
    %3546 = vperm.xlu0 %3545, %v3497
    %v3547 = vpop.permute.xlu0 %3546
    %3548 = vset.pattern.permute.xlu0 0
    %3549 = vperm.xlu0 %3548, %v3498
    %v3550 = vpop.permute.xlu0 %3549
    %3551 = vset.pattern.permute.xlu0 0
    %3552 = vperm.xlu0 %3551, %v3499
    %v3553 = vpop.permute.xlu0 %3552
    %3554 = vset.pattern.permute.xlu0 0
    %3555 = vperm.xlu0 %3554, %v3500
    %v3556 = vpop.permute.xlu0 %3555
    %3557 = vset.pattern.permute.xlu0 0
    %3558 = vperm.xlu0 %3557, %v3501
    %v3559 = vpop.permute.xlu0 %3558
    %3560 = vset.pattern.permute.xlu0 0
    %3561 = vperm.xlu0 %3560, %v3502
    %v3562 = vpop.permute.xlu0 %3561
    %3563 = vset.pattern.permute.xlu0 0
    %3564 = vperm.xlu0 %3563, %v3503
    %v3565 = vpop.permute.xlu0 %3564
    %3566 = vset.pattern.permute.xlu0 0
    %3567 = vperm.xlu0 %3566, %v3504
    %v3568 = vpop.permute.xlu0 %3567
    %v3569 = vlaneseq
    %v3570 = vshrl.u32 %v3569, 7
    %v3571 = vsub.s32 %v918, %v3570
    %v3572 = vrot.slane %v3523, %v3571
    %v3573 = vlaneseq
    %v3574 = vshrl.u32 %v3573, 7
    %v3575 = vsub.s32 %v918, %v3574
    %v3576 = vrot.slane %v3526, %v3575
    %v3577 = vlaneseq
    %v3578 = vshrl.u32 %v3577, 7
    %v3579 = vsub.s32 %v918, %v3578
    %v3580 = vrot.slane %v3529, %v3579
    %v3581 = vlaneseq
    %v3582 = vshrl.u32 %v3581, 7
    %v3583 = vsub.s32 %v918, %v3582
    %v3584 = vrot.slane %v3532, %v3583
    %v3585 = vlaneseq
    %v3586 = vshrl.u32 %v3585, 7
    %v3587 = vsub.s32 %v918, %v3586
    %v3588 = vrot.slane %v3535, %v3587
    %v3589 = vlaneseq
    %v3590 = vshrl.u32 %v3589, 7
    %v3591 = vsub.s32 %v918, %v3590
    %v3592 = vrot.slane %v3538, %v3591
    %v3593 = vlaneseq
    %v3594 = vshrl.u32 %v3593, 7
    %v3595 = vsub.s32 %v918, %v3594
    %v3596 = vrot.slane %v3541, %v3595
    %v3597 = vlaneseq
    %v3598 = vshrl.u32 %v3597, 7
    %v3599 = vsub.s32 %v918, %v3598
    %v3600 = vrot.slane %v3544, %v3599
    %v3601 = vlaneseq
    %v3602 = vshrl.u32 %v3601, 7
    %v3603 = vsub.s32 %v918, %v3602
    %v3604 = vrot.slane %v3547, %v3603
    %v3605 = vlaneseq
    %v3606 = vshrl.u32 %v3605, 7
    %v3607 = vsub.s32 %v918, %v3606
    %v3608 = vrot.slane %v3550, %v3607
    %v3609 = vlaneseq
    %v3610 = vshrl.u32 %v3609, 7
    %v3611 = vsub.s32 %v918, %v3610
    %v3612 = vrot.slane %v3553, %v3611
    %v3613 = vlaneseq
    %v3614 = vshrl.u32 %v3613, 7
    %v3615 = vsub.s32 %v918, %v3614
    %v3616 = vrot.slane %v3556, %v3615
    %v3617 = vlaneseq
    %v3618 = vshrl.u32 %v3617, 7
    %v3619 = vsub.s32 %v918, %v3618
    %v3620 = vrot.slane %v3559, %v3619
    %v3621 = vlaneseq
    %v3622 = vshrl.u32 %v3621, 7
    %v3623 = vsub.s32 %v918, %v3622
    %v3624 = vrot.slane %v3562, %v3623
    %v3625 = vlaneseq
    %v3626 = vshrl.u32 %v3625, 7
    %v3627 = vsub.s32 %v918, %v3626
    %v3628 = vrot.slane %v3565, %v3627
    %v3629 = vlaneseq
    %v3630 = vshrl.u32 %v3629, 7
    %v3631 = vsub.s32 %v918, %v3630
    %v3632 = vrot.slane %v3568, %v3631
    %v3633 = vsel %vm983, %v3576, %v3572
    %v3634 = vsel %vm985, %v3580, %v3633
    %v3635 = vsel %vm987, %v3584, %v3634
    %v3636 = vsel %vm989, %v3588, %v3635
    %v3637 = vsel %vm991, %v3592, %v3636
    %v3638 = vsel %vm993, %v3596, %v3637
    %v3639 = vsel %vm995, %v3600, %v3638
    %v3640 = vsel %vm983, %v3608, %v3604
    %v3641 = vsel %vm985, %v3612, %v3640
    %v3642 = vsel %vm987, %v3616, %v3641
    %v3643 = vsel %vm989, %v3620, %v3642
    %v3644 = vsel %vm991, %v3624, %v3643
    %v3645 = vsel %vm993, %v3628, %v3644
    %v3646 = vsel %vm995, %v3632, %v3645
    %v3649 = vsel %vm1006, %v3639, 0.0
    %3650 = vadd.xlane.f32.xlu0 %v3649
    %v3651 = vpop.xlane.xlu0 %3650
    %v3652 = vsel %vm1006, %v3646, 0.0
    %3653 = vadd.xlane.f32.xlu0 %v3652
    %v3654 = vpop.xlane.xlu0 %3653
    %v3655 = vsub.f32 0.0, %v3651
    %v3656 = vsub.f32 0.0, %v3654
    %v3657 = vmul.f32 %v3655, %v835
    %v3658 = vmul.f32 %v3656, %v836
    %3659 = vrot.lane.b32.xlu0 %v808, 32
    %v3660 = vpop.permute.xlu0 %3659
    %3661 = vrot.lane.b32.xlu0 %v809, 32
    %v3662 = vpop.permute.xlu0 %3661
    %3663 = vrot.lane.b32.xlu0 %v810, 32
    %v3664 = vpop.permute.xlu0 %3663
    %3665 = vrot.lane.b32.xlu0 %v811, 32
    %v3666 = vpop.permute.xlu0 %3665
    %3667 = vrot.lane.b32.xlu0 %v812, 32
    %v3668 = vpop.permute.xlu0 %3667
    %3669 = vrot.lane.b32.xlu0 %v813, 32
    %v3670 = vpop.permute.xlu0 %3669
    %3671 = vrot.lane.b32.xlu0 %v814, 32
    %v3672 = vpop.permute.xlu0 %3671
    %3673 = vrot.lane.b32.xlu0 %v815, 32
    %v3674 = vpop.permute.xlu0 %3673
    %3675 = vrot.lane.b32.xlu0 %v816, 32
    %v3676 = vpop.permute.xlu0 %3675
    %3677 = vrot.lane.b32.xlu0 %v817, 32
    %v3678 = vpop.permute.xlu0 %3677
    %3679 = vrot.lane.b32.xlu0 %v818, 32
    %v3680 = vpop.permute.xlu0 %3679
    %3681 = vrot.lane.b32.xlu0 %v819, 32
    %v3682 = vpop.permute.xlu0 %3681
    %3683 = vrot.lane.b32.xlu0 %v820, 32
    %v3684 = vpop.permute.xlu0 %3683
    %3685 = vrot.lane.b32.xlu0 %v821, 32
    %v3686 = vpop.permute.xlu0 %3685
    %3687 = vrot.lane.b32.xlu0 %v822, 32
    %v3688 = vpop.permute.xlu0 %3687
    %3689 = vrot.lane.b32.xlu0 %v823, 32
    %v3690 = vpop.permute.xlu0 %3689
    %v3707 = vsel %vm160, %v3660, 0.0
    %3708 = vadd.xlane.f32.xlu0 %v3707
    %v3709 = vpop.xlane.xlu0 %3708
    %v3710 = vsel %vm160, %v3662, 0.0
    %3711 = vadd.xlane.f32.xlu0 %v3710
    %v3712 = vpop.xlane.xlu0 %3711
    %v3713 = vsel %vm160, %v3664, 0.0
    %3714 = vadd.xlane.f32.xlu0 %v3713
    %v3715 = vpop.xlane.xlu0 %3714
    %v3716 = vsel %vm160, %v3666, 0.0
    %3717 = vadd.xlane.f32.xlu0 %v3716
    %v3718 = vpop.xlane.xlu0 %3717
    %v3719 = vsel %vm160, %v3668, 0.0
    %3720 = vadd.xlane.f32.xlu0 %v3719
    %v3721 = vpop.xlane.xlu0 %3720
    %v3722 = vsel %vm160, %v3670, 0.0
    %3723 = vadd.xlane.f32.xlu0 %v3722
    %v3724 = vpop.xlane.xlu0 %3723
    %v3725 = vsel %vm160, %v3672, 0.0
    %3726 = vadd.xlane.f32.xlu0 %v3725
    %v3727 = vpop.xlane.xlu0 %3726
    %v3728 = vsel %vm160, %v3674, 0.0
    %3729 = vadd.xlane.f32.xlu0 %v3728
    %v3730 = vpop.xlane.xlu0 %3729
    %v3731 = vsel %vm160, %v3676, 0.0
    %3732 = vadd.xlane.f32.xlu0 %v3731
    %v3733 = vpop.xlane.xlu0 %3732
    %v3734 = vsel %vm160, %v3678, 0.0
    %3735 = vadd.xlane.f32.xlu0 %v3734
    %v3736 = vpop.xlane.xlu0 %3735
    %v3737 = vsel %vm160, %v3680, 0.0
    %3738 = vadd.xlane.f32.xlu0 %v3737
    %v3739 = vpop.xlane.xlu0 %3738
    %v3740 = vsel %vm160, %v3682, 0.0
    %3741 = vadd.xlane.f32.xlu0 %v3740
    %v3742 = vpop.xlane.xlu0 %3741
    %v3743 = vsel %vm160, %v3684, 0.0
    %3744 = vadd.xlane.f32.xlu0 %v3743
    %v3745 = vpop.xlane.xlu0 %3744
    %v3746 = vsel %vm160, %v3686, 0.0
    %3747 = vadd.xlane.f32.xlu0 %v3746
    %v3748 = vpop.xlane.xlu0 %3747
    %v3749 = vsel %vm160, %v3688, 0.0
    %3750 = vadd.xlane.f32.xlu0 %v3749
    %v3751 = vpop.xlane.xlu0 %3750
    %v3752 = vsel %vm160, %v3690, 0.0
    %3753 = vadd.xlane.f32.xlu0 %v3752
    %v3754 = vpop.xlane.xlu0 %3753
    %v3755 = vmul.f32 %v3709, 0.17677669
    %v3756 = vmul.f32 %v3712, 0.17677669
    %v3757 = vmul.f32 %v3715, 0.17677669
    %v3758 = vmul.f32 %v3718, 0.17677669
    %v3759 = vmul.f32 %v3721, 0.17677669
    %v3760 = vmul.f32 %v3724, 0.17677669
    %v3761 = vmul.f32 %v3727, 0.17677669
    %v3762 = vmul.f32 %v3730, 0.17677669
    %v3763 = vmul.f32 %v3733, 0.17677669
    %v3764 = vmul.f32 %v3736, 0.17677669
    %v3765 = vmul.f32 %v3739, 0.17677669
    %v3766 = vmul.f32 %v3742, 0.17677669
    %v3767 = vmul.f32 %v3745, 0.17677669
    %v3768 = vmul.f32 %v3748, 0.17677669
    %v3769 = vmul.f32 %v3751, 0.17677669
    %v3770 = vmul.f32 %v3754, 0.17677669
    %v3787 = vlaneseq
    %v3788 = vshrl.u32 %v3787, 7
    %v3789 = vsub.s32 %v918, %v3788
    %v3790 = vrot.slane %v3755, %v3789
    %v3791 = vlaneseq
    %v3792 = vshrl.u32 %v3791, 7
    %v3793 = vsub.s32 %v918, %v3792
    %v3794 = vrot.slane %v3756, %v3793
    %v3795 = vlaneseq
    %v3796 = vshrl.u32 %v3795, 7
    %v3797 = vsub.s32 %v918, %v3796
    %v3798 = vrot.slane %v3757, %v3797
    %v3799 = vlaneseq
    %v3800 = vshrl.u32 %v3799, 7
    %v3801 = vsub.s32 %v918, %v3800
    %v3802 = vrot.slane %v3758, %v3801
    %v3803 = vlaneseq
    %v3804 = vshrl.u32 %v3803, 7
    %v3805 = vsub.s32 %v918, %v3804
    %v3806 = vrot.slane %v3759, %v3805
    %v3807 = vlaneseq
    %v3808 = vshrl.u32 %v3807, 7
    %v3809 = vsub.s32 %v918, %v3808
    %v3810 = vrot.slane %v3760, %v3809
    %v3811 = vlaneseq
    %v3812 = vshrl.u32 %v3811, 7
    %v3813 = vsub.s32 %v918, %v3812
    %v3814 = vrot.slane %v3761, %v3813
    %v3815 = vlaneseq
    %v3816 = vshrl.u32 %v3815, 7
    %v3817 = vsub.s32 %v918, %v3816
    %v3818 = vrot.slane %v3762, %v3817
    %v3819 = vlaneseq
    %v3820 = vshrl.u32 %v3819, 7
    %v3821 = vsub.s32 %v918, %v3820
    %v3822 = vrot.slane %v3763, %v3821
    %v3823 = vlaneseq
    %v3824 = vshrl.u32 %v3823, 7
    %v3825 = vsub.s32 %v918, %v3824
    %v3826 = vrot.slane %v3764, %v3825
    %v3827 = vlaneseq
    %v3828 = vshrl.u32 %v3827, 7
    %v3829 = vsub.s32 %v918, %v3828
    %v3830 = vrot.slane %v3765, %v3829
    %v3831 = vlaneseq
    %v3832 = vshrl.u32 %v3831, 7
    %v3833 = vsub.s32 %v918, %v3832
    %v3834 = vrot.slane %v3766, %v3833
    %v3835 = vlaneseq
    %v3836 = vshrl.u32 %v3835, 7
    %v3837 = vsub.s32 %v918, %v3836
    %v3838 = vrot.slane %v3767, %v3837
    %v3839 = vlaneseq
    %v3840 = vshrl.u32 %v3839, 7
    %v3841 = vsub.s32 %v918, %v3840
    %v3842 = vrot.slane %v3768, %v3841
    %v3843 = vlaneseq
    %v3844 = vshrl.u32 %v3843, 7
    %v3845 = vsub.s32 %v918, %v3844
    %v3846 = vrot.slane %v3769, %v3845
    %v3847 = vlaneseq
    %v3848 = vshrl.u32 %v3847, 7
    %v3849 = vsub.s32 %v918, %v3848
    %v3850 = vrot.slane %v3770, %v3849
    %v3851 = vsel %vm983, %v3794, %v3790
    %v3852 = vsel %vm985, %v3798, %v3851
    %v3853 = vsel %vm987, %v3802, %v3852
    %v3854 = vsel %vm989, %v3806, %v3853
    %v3855 = vsel %vm991, %v3810, %v3854
    %v3856 = vsel %vm993, %v3814, %v3855
    %v3857 = vsel %vm995, %v3818, %v3856
    %v3858 = vsel %vm983, %v3826, %v3822
    %v3859 = vsel %vm985, %v3830, %v3858
    %v3860 = vsel %vm987, %v3834, %v3859
    %v3861 = vsel %vm989, %v3838, %v3860
    %v3862 = vsel %vm991, %v3842, %v3861
    %v3863 = vsel %vm993, %v3846, %v3862
    %v3864 = vsel %vm995, %v3850, %v3863
    %v3867 = vsel %vm1006, %v3857, -inf
    %3868 = vmax.xlane.f32.xlu0 %v3867
    %v3869 = vpop.xlane.xlu0 %3868
    %v3870 = vsel %vm1006, %v3864, -inf
    %3871 = vmax.xlane.f32.xlu0 %v3870
    %v3872 = vpop.xlane.xlu0 %3871
    %v3875 = vlaneseq
    %v3876 = vshrl.u32 %v3875, 7
    %v3877 = vsub.s32 0, %v3876
    %v3878 = vrot.slane %v3869, %v3877
    %v3879 = vlaneseq
    %v3880 = vshrl.u32 %v3879, 7
    %v3881 = vsub.s32 1, %v3880
    %v3882 = vrot.slane %v3869, %v3881
    %v3883 = vlaneseq
    %v3884 = vshrl.u32 %v3883, 7
    %v3885 = vsub.s32 2, %v3884
    %v3886 = vrot.slane %v3869, %v3885
    %v3887 = vlaneseq
    %v3888 = vshrl.u32 %v3887, 7
    %v3889 = vsub.s32 3, %v3888
    %v3890 = vrot.slane %v3869, %v3889
    %v3891 = vlaneseq
    %v3892 = vshrl.u32 %v3891, 7
    %v3893 = vsub.s32 4, %v3892
    %v3894 = vrot.slane %v3869, %v3893
    %v3895 = vlaneseq
    %v3896 = vshrl.u32 %v3895, 7
    %v3897 = vsub.s32 5, %v3896
    %v3898 = vrot.slane %v3869, %v3897
    %v3899 = vlaneseq
    %v3900 = vshrl.u32 %v3899, 7
    %v3901 = vsub.s32 6, %v3900
    %v3902 = vrot.slane %v3869, %v3901
    %v3903 = vlaneseq
    %v3904 = vshrl.u32 %v3903, 7
    %v3905 = vsub.s32 7, %v3904
    %v3906 = vrot.slane %v3869, %v3905
    %v3907 = vlaneseq
    %v3908 = vshrl.u32 %v3907, 7
    %v3909 = vsub.s32 0, %v3908
    %v3910 = vrot.slane %v3872, %v3909
    %v3911 = vlaneseq
    %v3912 = vshrl.u32 %v3911, 7
    %v3913 = vsub.s32 1, %v3912
    %v3914 = vrot.slane %v3872, %v3913
    %v3915 = vlaneseq
    %v3916 = vshrl.u32 %v3915, 7
    %v3917 = vsub.s32 2, %v3916
    %v3918 = vrot.slane %v3872, %v3917
    %v3919 = vlaneseq
    %v3920 = vshrl.u32 %v3919, 7
    %v3921 = vsub.s32 3, %v3920
    %v3922 = vrot.slane %v3872, %v3921
    %v3923 = vlaneseq
    %v3924 = vshrl.u32 %v3923, 7
    %v3925 = vsub.s32 4, %v3924
    %v3926 = vrot.slane %v3872, %v3925
    %v3927 = vlaneseq
    %v3928 = vshrl.u32 %v3927, 7
    %v3929 = vsub.s32 5, %v3928
    %v3930 = vrot.slane %v3872, %v3929
    %v3931 = vlaneseq
    %v3932 = vshrl.u32 %v3931, 7
    %v3933 = vsub.s32 6, %v3932
    %v3934 = vrot.slane %v3872, %v3933
    %v3935 = vlaneseq
    %v3936 = vshrl.u32 %v3935, 7
    %v3937 = vsub.s32 7, %v3936
    %v3938 = vrot.slane %v3872, %v3937
    %v3955 = vsub.f32 %v3755, %v3878
    %v3956 = vsub.f32 %v3756, %v3882
    %v3957 = vsub.f32 %v3757, %v3886
    %v3958 = vsub.f32 %v3758, %v3890
    %v3959 = vsub.f32 %v3759, %v3894
    %v3960 = vsub.f32 %v3760, %v3898
    %v3961 = vsub.f32 %v3761, %v3902
    %v3962 = vsub.f32 %v3762, %v3906
    %v3963 = vsub.f32 %v3763, %v3910
    %v3964 = vsub.f32 %v3764, %v3914
    %v3965 = vsub.f32 %v3765, %v3918
    %v3966 = vsub.f32 %v3766, %v3922
    %v3967 = vsub.f32 %v3767, %v3926
    %v3968 = vsub.f32 %v3768, %v3930
    %v3969 = vsub.f32 %v3769, %v3934
    %v3970 = vsub.f32 %v3770, %v3938
    %v3971 = vmul.f32 %v3955, 1.442695
    %v3972 = vpow.pop %v3971
    %v3973 = vmul.f32 %v3956, 1.442695
    %v3974 = vpow.pop %v3973
    %v3975 = vmul.f32 %v3957, 1.442695
    %v3976 = vpow.pop %v3975
    %v3977 = vmul.f32 %v3958, 1.442695
    %v3978 = vpow.pop %v3977
    %v3979 = vmul.f32 %v3959, 1.442695
    %v3980 = vpow.pop %v3979
    %v3981 = vmul.f32 %v3960, 1.442695
    %v3982 = vpow.pop %v3981
    %v3983 = vmul.f32 %v3961, 1.442695
    %v3984 = vpow.pop %v3983
    %v3985 = vmul.f32 %v3962, 1.442695
    %v3986 = vpow.pop %v3985
    %v3987 = vmul.f32 %v3963, 1.442695
    %v3988 = vpow.pop %v3987
    %v3989 = vmul.f32 %v3964, 1.442695
    %v3990 = vpow.pop %v3989
    %v3991 = vmul.f32 %v3965, 1.442695
    %v3992 = vpow.pop %v3991
    %v3993 = vmul.f32 %v3966, 1.442695
    %v3994 = vpow.pop %v3993
    %v3995 = vmul.f32 %v3967, 1.442695
    %v3996 = vpow.pop %v3995
    %v3997 = vmul.f32 %v3968, 1.442695
    %v3998 = vpow.pop %v3997
    %v3999 = vmul.f32 %v3969, 1.442695
    %v4000 = vpow.pop %v3999
    %v4001 = vmul.f32 %v3970, 1.442695
    %v4002 = vpow.pop %v4001
    %4019 = vset.pattern.permute.xlu0 0
    %4020 = vperm.xlu0 %4019, %v3972
    %v4021 = vpop.permute.xlu0 %4020
    %4022 = vset.pattern.permute.xlu0 0
    %4023 = vperm.xlu0 %4022, %v3974
    %v4024 = vpop.permute.xlu0 %4023
    %4025 = vset.pattern.permute.xlu0 0
    %4026 = vperm.xlu0 %4025, %v3976
    %v4027 = vpop.permute.xlu0 %4026
    %4028 = vset.pattern.permute.xlu0 0
    %4029 = vperm.xlu0 %4028, %v3978
    %v4030 = vpop.permute.xlu0 %4029
    %4031 = vset.pattern.permute.xlu0 0
    %4032 = vperm.xlu0 %4031, %v3980
    %v4033 = vpop.permute.xlu0 %4032
    %4034 = vset.pattern.permute.xlu0 0
    %4035 = vperm.xlu0 %4034, %v3982
    %v4036 = vpop.permute.xlu0 %4035
    %4037 = vset.pattern.permute.xlu0 0
    %4038 = vperm.xlu0 %4037, %v3984
    %v4039 = vpop.permute.xlu0 %4038
    %4040 = vset.pattern.permute.xlu0 0
    %4041 = vperm.xlu0 %4040, %v3986
    %v4042 = vpop.permute.xlu0 %4041
    %4043 = vset.pattern.permute.xlu0 0
    %4044 = vperm.xlu0 %4043, %v3988
    %v4045 = vpop.permute.xlu0 %4044
    %4046 = vset.pattern.permute.xlu0 0
    %4047 = vperm.xlu0 %4046, %v3990
    %v4048 = vpop.permute.xlu0 %4047
    %4049 = vset.pattern.permute.xlu0 0
    %4050 = vperm.xlu0 %4049, %v3992
    %v4051 = vpop.permute.xlu0 %4050
    %4052 = vset.pattern.permute.xlu0 0
    %4053 = vperm.xlu0 %4052, %v3994
    %v4054 = vpop.permute.xlu0 %4053
    %4055 = vset.pattern.permute.xlu0 0
    %4056 = vperm.xlu0 %4055, %v3996
    %v4057 = vpop.permute.xlu0 %4056
    %4058 = vset.pattern.permute.xlu0 0
    %4059 = vperm.xlu0 %4058, %v3998
    %v4060 = vpop.permute.xlu0 %4059
    %4061 = vset.pattern.permute.xlu0 0
    %4062 = vperm.xlu0 %4061, %v4000
    %v4063 = vpop.permute.xlu0 %4062
    %4064 = vset.pattern.permute.xlu0 0
    %4065 = vperm.xlu0 %4064, %v4002
    %v4066 = vpop.permute.xlu0 %4065
    %v4067 = vlaneseq
    %v4068 = vshrl.u32 %v4067, 7
    %v4069 = vsub.s32 %v918, %v4068
    %v4070 = vrot.slane %v4021, %v4069
    %v4071 = vlaneseq
    %v4072 = vshrl.u32 %v4071, 7
    %v4073 = vsub.s32 %v918, %v4072
    %v4074 = vrot.slane %v4024, %v4073
    %v4075 = vlaneseq
    %v4076 = vshrl.u32 %v4075, 7
    %v4077 = vsub.s32 %v918, %v4076
    %v4078 = vrot.slane %v4027, %v4077
    %v4079 = vlaneseq
    %v4080 = vshrl.u32 %v4079, 7
    %v4081 = vsub.s32 %v918, %v4080
    %v4082 = vrot.slane %v4030, %v4081
    %v4083 = vlaneseq
    %v4084 = vshrl.u32 %v4083, 7
    %v4085 = vsub.s32 %v918, %v4084
    %v4086 = vrot.slane %v4033, %v4085
    %v4087 = vlaneseq
    %v4088 = vshrl.u32 %v4087, 7
    %v4089 = vsub.s32 %v918, %v4088
    %v4090 = vrot.slane %v4036, %v4089
    %v4091 = vlaneseq
    %v4092 = vshrl.u32 %v4091, 7
    %v4093 = vsub.s32 %v918, %v4092
    %v4094 = vrot.slane %v4039, %v4093
    %v4095 = vlaneseq
    %v4096 = vshrl.u32 %v4095, 7
    %v4097 = vsub.s32 %v918, %v4096
    %v4098 = vrot.slane %v4042, %v4097
    %v4099 = vlaneseq
    %v4100 = vshrl.u32 %v4099, 7
    %v4101 = vsub.s32 %v918, %v4100
    %v4102 = vrot.slane %v4045, %v4101
    %v4103 = vlaneseq
    %v4104 = vshrl.u32 %v4103, 7
    %v4105 = vsub.s32 %v918, %v4104
    %v4106 = vrot.slane %v4048, %v4105
    %v4107 = vlaneseq
    %v4108 = vshrl.u32 %v4107, 7
    %v4109 = vsub.s32 %v918, %v4108
    %v4110 = vrot.slane %v4051, %v4109
    %v4111 = vlaneseq
    %v4112 = vshrl.u32 %v4111, 7
    %v4113 = vsub.s32 %v918, %v4112
    %v4114 = vrot.slane %v4054, %v4113
    %v4115 = vlaneseq
    %v4116 = vshrl.u32 %v4115, 7
    %v4117 = vsub.s32 %v918, %v4116
    %v4118 = vrot.slane %v4057, %v4117
    %v4119 = vlaneseq
    %v4120 = vshrl.u32 %v4119, 7
    %v4121 = vsub.s32 %v918, %v4120
    %v4122 = vrot.slane %v4060, %v4121
    %v4123 = vlaneseq
    %v4124 = vshrl.u32 %v4123, 7
    %v4125 = vsub.s32 %v918, %v4124
    %v4126 = vrot.slane %v4063, %v4125
    %v4127 = vlaneseq
    %v4128 = vshrl.u32 %v4127, 7
    %v4129 = vsub.s32 %v918, %v4128
    %v4130 = vrot.slane %v4066, %v4129
    %v4131 = vsel %vm983, %v4074, %v4070
    %v4132 = vsel %vm985, %v4078, %v4131
    %v4133 = vsel %vm987, %v4082, %v4132
    %v4134 = vsel %vm989, %v4086, %v4133
    %v4135 = vsel %vm991, %v4090, %v4134
    %v4136 = vsel %vm993, %v4094, %v4135
    %v4137 = vsel %vm995, %v4098, %v4136
    %v4138 = vsel %vm983, %v4106, %v4102
    %v4139 = vsel %vm985, %v4110, %v4138
    %v4140 = vsel %vm987, %v4114, %v4139
    %v4141 = vsel %vm989, %v4118, %v4140
    %v4142 = vsel %vm991, %v4122, %v4141
    %v4143 = vsel %vm993, %v4126, %v4142
    %v4144 = vsel %vm995, %v4130, %v4143
    %v4147 = vsel %vm1006, %v4137, 0.0
    %4148 = vadd.xlane.f32.xlu0 %v4147
    %v4149 = vpop.xlane.xlu0 %4148
    %v4150 = vsel %vm1006, %v4144, 0.0
    %4151 = vadd.xlane.f32.xlu0 %v4150
    %v4152 = vpop.xlane.xlu0 %4151
    %v4153 = vrcp.pop %v4149
    %v4154 = vrcp.pop %v4152
    %v4157 = vlaneseq
    %v4158 = vshrl.u32 %v4157, 7
    %v4159 = vsub.s32 0, %v4158
    %v4160 = vrot.slane %v4153, %v4159
    %v4161 = vlaneseq
    %v4162 = vshrl.u32 %v4161, 7
    %v4163 = vsub.s32 1, %v4162
    %v4164 = vrot.slane %v4153, %v4163
    %v4165 = vlaneseq
    %v4166 = vshrl.u32 %v4165, 7
    %v4167 = vsub.s32 2, %v4166
    %v4168 = vrot.slane %v4153, %v4167
    %v4169 = vlaneseq
    %v4170 = vshrl.u32 %v4169, 7
    %v4171 = vsub.s32 3, %v4170
    %v4172 = vrot.slane %v4153, %v4171
    %v4173 = vlaneseq
    %v4174 = vshrl.u32 %v4173, 7
    %v4175 = vsub.s32 4, %v4174
    %v4176 = vrot.slane %v4153, %v4175
    %v4177 = vlaneseq
    %v4178 = vshrl.u32 %v4177, 7
    %v4179 = vsub.s32 5, %v4178
    %v4180 = vrot.slane %v4153, %v4179
    %v4181 = vlaneseq
    %v4182 = vshrl.u32 %v4181, 7
    %v4183 = vsub.s32 6, %v4182
    %v4184 = vrot.slane %v4153, %v4183
    %v4185 = vlaneseq
    %v4186 = vshrl.u32 %v4185, 7
    %v4187 = vsub.s32 7, %v4186
    %v4188 = vrot.slane %v4153, %v4187
    %v4189 = vlaneseq
    %v4190 = vshrl.u32 %v4189, 7
    %v4191 = vsub.s32 0, %v4190
    %v4192 = vrot.slane %v4154, %v4191
    %v4193 = vlaneseq
    %v4194 = vshrl.u32 %v4193, 7
    %v4195 = vsub.s32 1, %v4194
    %v4196 = vrot.slane %v4154, %v4195
    %v4197 = vlaneseq
    %v4198 = vshrl.u32 %v4197, 7
    %v4199 = vsub.s32 2, %v4198
    %v4200 = vrot.slane %v4154, %v4199
    %v4201 = vlaneseq
    %v4202 = vshrl.u32 %v4201, 7
    %v4203 = vsub.s32 3, %v4202
    %v4204 = vrot.slane %v4154, %v4203
    %v4205 = vlaneseq
    %v4206 = vshrl.u32 %v4205, 7
    %v4207 = vsub.s32 4, %v4206
    %v4208 = vrot.slane %v4154, %v4207
    %v4209 = vlaneseq
    %v4210 = vshrl.u32 %v4209, 7
    %v4211 = vsub.s32 5, %v4210
    %v4212 = vrot.slane %v4154, %v4211
    %v4213 = vlaneseq
    %v4214 = vshrl.u32 %v4213, 7
    %v4215 = vsub.s32 6, %v4214
    %v4216 = vrot.slane %v4154, %v4215
    %v4217 = vlaneseq
    %v4218 = vshrl.u32 %v4217, 7
    %v4219 = vsub.s32 7, %v4218
    %v4220 = vrot.slane %v4154, %v4219
    %v4237 = vmul.f32 %v3972, %v4160
    %v4238 = vmul.f32 %v3974, %v4164
    %v4239 = vmul.f32 %v3976, %v4168
    %v4240 = vmul.f32 %v3978, %v4172
    %v4241 = vmul.f32 %v3980, %v4176
    %v4242 = vmul.f32 %v3982, %v4180
    %v4243 = vmul.f32 %v3984, %v4184
    %v4244 = vmul.f32 %v3986, %v4188
    %v4245 = vmul.f32 %v3988, %v4192
    %v4246 = vmul.f32 %v3990, %v4196
    %v4247 = vmul.f32 %v3992, %v4200
    %v4248 = vmul.f32 %v3994, %v4204
    %v4249 = vmul.f32 %v3996, %v4208
    %v4250 = vmul.f32 %v3998, %v4212
    %v4251 = vmul.f32 %v4000, %v4216
    %v4252 = vmul.f32 %v4002, %v4220
    %v4253 = vadd.f32 %v3305, %v4237
    %v4254 = vadd.f32 %v3306, %v4238
    %v4255 = vadd.f32 %v3307, %v4239
    %v4256 = vadd.f32 %v3308, %v4240
    %v4257 = vadd.f32 %v3309, %v4241
    %v4258 = vadd.f32 %v3310, %v4242
    %v4259 = vadd.f32 %v3311, %v4243
    %v4260 = vadd.f32 %v3312, %v4244
    %v4261 = vadd.f32 %v3313, %v4245
    %v4262 = vadd.f32 %v3314, %v4246
    %v4263 = vadd.f32 %v3315, %v4247
    %v4264 = vadd.f32 %v3316, %v4248
    %v4265 = vadd.f32 %v3317, %v4249
    %v4266 = vadd.f32 %v3318, %v4250
    %v4267 = vadd.f32 %v3319, %v4251
    %v4268 = vadd.f32 %v3320, %v4252
    %v4269 = vmul.f32 %v3709, %v3709
    %v4270 = vmul.f32 %v3712, %v3712
    %v4271 = vmul.f32 %v3715, %v3715
    %v4272 = vmul.f32 %v3718, %v3718
    %v4273 = vmul.f32 %v3721, %v3721
    %v4274 = vmul.f32 %v3724, %v3724
    %v4275 = vmul.f32 %v3727, %v3727
    %v4276 = vmul.f32 %v3730, %v3730
    %v4277 = vmul.f32 %v3733, %v3733
    %v4278 = vmul.f32 %v3736, %v3736
    %v4279 = vmul.f32 %v3739, %v3739
    %v4280 = vmul.f32 %v3742, %v3742
    %v4281 = vmul.f32 %v3745, %v3745
    %v4282 = vmul.f32 %v3748, %v3748
    %v4283 = vmul.f32 %v3751, %v3751
    %v4284 = vmul.f32 %v3754, %v3754
    %v4301 = vlaneseq
    %v4302 = vshrl.u32 %v4301, 7
    %v4303 = vsub.s32 %v918, %v4302
    %v4304 = vrot.slane %v4269, %v4303
    %v4305 = vlaneseq
    %v4306 = vshrl.u32 %v4305, 7
    %v4307 = vsub.s32 %v918, %v4306
    %v4308 = vrot.slane %v4270, %v4307
    %v4309 = vlaneseq
    %v4310 = vshrl.u32 %v4309, 7
    %v4311 = vsub.s32 %v918, %v4310
    %v4312 = vrot.slane %v4271, %v4311
    %v4313 = vlaneseq
    %v4314 = vshrl.u32 %v4313, 7
    %v4315 = vsub.s32 %v918, %v4314
    %v4316 = vrot.slane %v4272, %v4315
    %v4317 = vlaneseq
    %v4318 = vshrl.u32 %v4317, 7
    %v4319 = vsub.s32 %v918, %v4318
    %v4320 = vrot.slane %v4273, %v4319
    %v4321 = vlaneseq
    %v4322 = vshrl.u32 %v4321, 7
    %v4323 = vsub.s32 %v918, %v4322
    %v4324 = vrot.slane %v4274, %v4323
    %v4325 = vlaneseq
    %v4326 = vshrl.u32 %v4325, 7
    %v4327 = vsub.s32 %v918, %v4326
    %v4328 = vrot.slane %v4275, %v4327
    %v4329 = vlaneseq
    %v4330 = vshrl.u32 %v4329, 7
    %v4331 = vsub.s32 %v918, %v4330
    %v4332 = vrot.slane %v4276, %v4331
    %v4333 = vlaneseq
    %v4334 = vshrl.u32 %v4333, 7
    %v4335 = vsub.s32 %v918, %v4334
    %v4336 = vrot.slane %v4277, %v4335
    %v4337 = vlaneseq
    %v4338 = vshrl.u32 %v4337, 7
    %v4339 = vsub.s32 %v918, %v4338
    %v4340 = vrot.slane %v4278, %v4339
    %v4341 = vlaneseq
    %v4342 = vshrl.u32 %v4341, 7
    %v4343 = vsub.s32 %v918, %v4342
    %v4344 = vrot.slane %v4279, %v4343
    %v4345 = vlaneseq
    %v4346 = vshrl.u32 %v4345, 7
    %v4347 = vsub.s32 %v918, %v4346
    %v4348 = vrot.slane %v4280, %v4347
    %v4349 = vlaneseq
    %v4350 = vshrl.u32 %v4349, 7
    %v4351 = vsub.s32 %v918, %v4350
    %v4352 = vrot.slane %v4281, %v4351
    %v4353 = vlaneseq
    %v4354 = vshrl.u32 %v4353, 7
    %v4355 = vsub.s32 %v918, %v4354
    %v4356 = vrot.slane %v4282, %v4355
    %v4357 = vlaneseq
    %v4358 = vshrl.u32 %v4357, 7
    %v4359 = vsub.s32 %v918, %v4358
    %v4360 = vrot.slane %v4283, %v4359
    %v4361 = vlaneseq
    %v4362 = vshrl.u32 %v4361, 7
    %v4363 = vsub.s32 %v918, %v4362
    %v4364 = vrot.slane %v4284, %v4363
    %v4365 = vsel %vm983, %v4308, %v4304
    %v4366 = vsel %vm985, %v4312, %v4365
    %v4367 = vsel %vm987, %v4316, %v4366
    %v4368 = vsel %vm989, %v4320, %v4367
    %v4369 = vsel %vm991, %v4324, %v4368
    %v4370 = vsel %vm993, %v4328, %v4369
    %v4371 = vsel %vm995, %v4332, %v4370
    %v4372 = vsel %vm983, %v4340, %v4336
    %v4373 = vsel %vm985, %v4344, %v4372
    %v4374 = vsel %vm987, %v4348, %v4373
    %v4375 = vsel %vm989, %v4352, %v4374
    %v4376 = vsel %vm991, %v4356, %v4375
    %v4377 = vsel %vm993, %v4360, %v4376
    %v4378 = vsel %vm995, %v4364, %v4377
    %v4381 = vsel %vm1006, %v4371, 0.0
    %4382 = vadd.xlane.f32.xlu0 %v4381
    %v4383 = vpop.xlane.xlu0 %4382
    %v4384 = vsel %vm1006, %v4378, 0.0
    %4385 = vadd.xlane.f32.xlu0 %v4384
    %v4386 = vpop.xlane.xlu0 %4385
    %v4387 = vmul.f32 %v4383, %v835
    %v4388 = vmul.f32 %v4386, %v836
    %v4389 = vadd.f32 %v4237, 1e-08
    %v4390 = vadd.f32 %v4238, 1e-08
    %v4391 = vadd.f32 %v4239, 1e-08
    %v4392 = vadd.f32 %v4240, 1e-08
    %v4393 = vadd.f32 %v4241, 1e-08
    %v4394 = vadd.f32 %v4242, 1e-08
    %v4395 = vadd.f32 %v4243, 1e-08
    %v4396 = vadd.f32 %v4244, 1e-08
    %v4397 = vadd.f32 %v4245, 1e-08
    %v4398 = vadd.f32 %v4246, 1e-08
    %v4399 = vadd.f32 %v4247, 1e-08
    %v4400 = vadd.f32 %v4248, 1e-08
    %v4401 = vadd.f32 %v4249, 1e-08
    %v4402 = vadd.f32 %v4250, 1e-08
    %v4403 = vadd.f32 %v4251, 1e-08
    %v4404 = vadd.f32 %v4252, 1e-08
    %v4405 = vlog2.pop %v4389
    %v4406 = vmul.f32 %v4405, 0.6931472
    %v4407 = vlog2.pop %v4390
    %v4408 = vmul.f32 %v4407, 0.6931472
    %v4409 = vlog2.pop %v4391
    %v4410 = vmul.f32 %v4409, 0.6931472
    %v4411 = vlog2.pop %v4392
    %v4412 = vmul.f32 %v4411, 0.6931472
    %v4413 = vlog2.pop %v4393
    %v4414 = vmul.f32 %v4413, 0.6931472
    %v4415 = vlog2.pop %v4394
    %v4416 = vmul.f32 %v4415, 0.6931472
    %v4417 = vlog2.pop %v4395
    %v4418 = vmul.f32 %v4417, 0.6931472
    %v4419 = vlog2.pop %v4396
    %v4420 = vmul.f32 %v4419, 0.6931472
    %v4421 = vlog2.pop %v4397
    %v4422 = vmul.f32 %v4421, 0.6931472
    %v4423 = vlog2.pop %v4398
    %v4424 = vmul.f32 %v4423, 0.6931472
    %v4425 = vlog2.pop %v4399
    %v4426 = vmul.f32 %v4425, 0.6931472
    %v4427 = vlog2.pop %v4400
    %v4428 = vmul.f32 %v4427, 0.6931472
    %v4429 = vlog2.pop %v4401
    %v4430 = vmul.f32 %v4429, 0.6931472
    %v4431 = vlog2.pop %v4402
    %v4432 = vmul.f32 %v4431, 0.6931472
    %v4433 = vlog2.pop %v4403
    %v4434 = vmul.f32 %v4433, 0.6931472
    %v4435 = vlog2.pop %v4404
    %v4436 = vmul.f32 %v4435, 0.6931472
    %v4437 = vmul.f32 %v4406, %v4237
    %v4438 = vmul.f32 %v4408, %v4238
    %v4439 = vmul.f32 %v4410, %v4239
    %v4440 = vmul.f32 %v4412, %v4240
    %v4441 = vmul.f32 %v4414, %v4241
    %v4442 = vmul.f32 %v4416, %v4242
    %v4443 = vmul.f32 %v4418, %v4243
    %v4444 = vmul.f32 %v4420, %v4244
    %v4445 = vmul.f32 %v4422, %v4245
    %v4446 = vmul.f32 %v4424, %v4246
    %v4447 = vmul.f32 %v4426, %v4247
    %v4448 = vmul.f32 %v4428, %v4248
    %v4449 = vmul.f32 %v4430, %v4249
    %v4450 = vmul.f32 %v4432, %v4250
    %v4451 = vmul.f32 %v4434, %v4251
    %v4452 = vmul.f32 %v4436, %v4252
    %4469 = vset.pattern.permute.xlu0 0
    %4470 = vperm.xlu0 %4469, %v4437
    %v4471 = vpop.permute.xlu0 %4470
    %4472 = vset.pattern.permute.xlu0 0
    %4473 = vperm.xlu0 %4472, %v4438
    %v4474 = vpop.permute.xlu0 %4473
    %4475 = vset.pattern.permute.xlu0 0
    %4476 = vperm.xlu0 %4475, %v4439
    %v4477 = vpop.permute.xlu0 %4476
    %4478 = vset.pattern.permute.xlu0 0
    %4479 = vperm.xlu0 %4478, %v4440
    %v4480 = vpop.permute.xlu0 %4479
    %4481 = vset.pattern.permute.xlu0 0
    %4482 = vperm.xlu0 %4481, %v4441
    %v4483 = vpop.permute.xlu0 %4482
    %4484 = vset.pattern.permute.xlu0 0
    %4485 = vperm.xlu0 %4484, %v4442
    %v4486 = vpop.permute.xlu0 %4485
    %4487 = vset.pattern.permute.xlu0 0
    %4488 = vperm.xlu0 %4487, %v4443
    %v4489 = vpop.permute.xlu0 %4488
    %4490 = vset.pattern.permute.xlu0 0
    %4491 = vperm.xlu0 %4490, %v4444
    %v4492 = vpop.permute.xlu0 %4491
    %4493 = vset.pattern.permute.xlu0 0
    %4494 = vperm.xlu0 %4493, %v4445
    %v4495 = vpop.permute.xlu0 %4494
    %4496 = vset.pattern.permute.xlu0 0
    %4497 = vperm.xlu0 %4496, %v4446
    %v4498 = vpop.permute.xlu0 %4497
    %4499 = vset.pattern.permute.xlu0 0
    %4500 = vperm.xlu0 %4499, %v4447
    %v4501 = vpop.permute.xlu0 %4500
    %4502 = vset.pattern.permute.xlu0 0
    %4503 = vperm.xlu0 %4502, %v4448
    %v4504 = vpop.permute.xlu0 %4503
    %4505 = vset.pattern.permute.xlu0 0
    %4506 = vperm.xlu0 %4505, %v4449
    %v4507 = vpop.permute.xlu0 %4506
    %4508 = vset.pattern.permute.xlu0 0
    %4509 = vperm.xlu0 %4508, %v4450
    %v4510 = vpop.permute.xlu0 %4509
    %4511 = vset.pattern.permute.xlu0 0
    %4512 = vperm.xlu0 %4511, %v4451
    %v4513 = vpop.permute.xlu0 %4512
    %4514 = vset.pattern.permute.xlu0 0
    %4515 = vperm.xlu0 %4514, %v4452
    %v4516 = vpop.permute.xlu0 %4515
    %v4517 = vlaneseq
    %v4518 = vshrl.u32 %v4517, 7
    %v4519 = vsub.s32 %v918, %v4518
    %v4520 = vrot.slane %v4471, %v4519
    %v4521 = vlaneseq
    %v4522 = vshrl.u32 %v4521, 7
    %v4523 = vsub.s32 %v918, %v4522
    %v4524 = vrot.slane %v4474, %v4523
    %v4525 = vlaneseq
    %v4526 = vshrl.u32 %v4525, 7
    %v4527 = vsub.s32 %v918, %v4526
    %v4528 = vrot.slane %v4477, %v4527
    %v4529 = vlaneseq
    %v4530 = vshrl.u32 %v4529, 7
    %v4531 = vsub.s32 %v918, %v4530
    %v4532 = vrot.slane %v4480, %v4531
    %v4533 = vlaneseq
    %v4534 = vshrl.u32 %v4533, 7
    %v4535 = vsub.s32 %v918, %v4534
    %v4536 = vrot.slane %v4483, %v4535
    %v4537 = vlaneseq
    %v4538 = vshrl.u32 %v4537, 7
    %v4539 = vsub.s32 %v918, %v4538
    %v4540 = vrot.slane %v4486, %v4539
    %v4541 = vlaneseq
    %v4542 = vshrl.u32 %v4541, 7
    %v4543 = vsub.s32 %v918, %v4542
    %v4544 = vrot.slane %v4489, %v4543
    %v4545 = vlaneseq
    %v4546 = vshrl.u32 %v4545, 7
    %v4547 = vsub.s32 %v918, %v4546
    %v4548 = vrot.slane %v4492, %v4547
    %v4549 = vlaneseq
    %v4550 = vshrl.u32 %v4549, 7
    %v4551 = vsub.s32 %v918, %v4550
    %v4552 = vrot.slane %v4495, %v4551
    %v4553 = vlaneseq
    %v4554 = vshrl.u32 %v4553, 7
    %v4555 = vsub.s32 %v918, %v4554
    %v4556 = vrot.slane %v4498, %v4555
    %v4557 = vlaneseq
    %v4558 = vshrl.u32 %v4557, 7
    %v4559 = vsub.s32 %v918, %v4558
    %v4560 = vrot.slane %v4501, %v4559
    %v4561 = vlaneseq
    %v4562 = vshrl.u32 %v4561, 7
    %v4563 = vsub.s32 %v918, %v4562
    %v4564 = vrot.slane %v4504, %v4563
    %v4565 = vlaneseq
    %v4566 = vshrl.u32 %v4565, 7
    %v4567 = vsub.s32 %v918, %v4566
    %v4568 = vrot.slane %v4507, %v4567
    %v4569 = vlaneseq
    %v4570 = vshrl.u32 %v4569, 7
    %v4571 = vsub.s32 %v918, %v4570
    %v4572 = vrot.slane %v4510, %v4571
    %v4573 = vlaneseq
    %v4574 = vshrl.u32 %v4573, 7
    %v4575 = vsub.s32 %v918, %v4574
    %v4576 = vrot.slane %v4513, %v4575
    %v4577 = vlaneseq
    %v4578 = vshrl.u32 %v4577, 7
    %v4579 = vsub.s32 %v918, %v4578
    %v4580 = vrot.slane %v4516, %v4579
    %v4581 = vsel %vm983, %v4524, %v4520
    %v4582 = vsel %vm985, %v4528, %v4581
    %v4583 = vsel %vm987, %v4532, %v4582
    %v4584 = vsel %vm989, %v4536, %v4583
    %v4585 = vsel %vm991, %v4540, %v4584
    %v4586 = vsel %vm993, %v4544, %v4585
    %v4587 = vsel %vm995, %v4548, %v4586
    %v4588 = vsel %vm983, %v4556, %v4552
    %v4589 = vsel %vm985, %v4560, %v4588
    %v4590 = vsel %vm987, %v4564, %v4589
    %v4591 = vsel %vm989, %v4568, %v4590
    %v4592 = vsel %vm991, %v4572, %v4591
    %v4593 = vsel %vm993, %v4576, %v4592
    %v4594 = vsel %vm995, %v4580, %v4593
    %v4597 = vsel %vm1006, %v4587, 0.0
    %4598 = vadd.xlane.f32.xlu0 %v4597
    %v4599 = vpop.xlane.xlu0 %4598
    %v4600 = vsel %vm1006, %v4594, 0.0
    %4601 = vadd.xlane.f32.xlu0 %v4600
    %v4602 = vpop.xlane.xlu0 %4601
    %v4603 = vsub.f32 0.0, %v4599
    %v4604 = vsub.f32 0.0, %v4602
    %v4605 = vmul.f32 %v4603, %v835
    %v4606 = vmul.f32 %v4604, %v836
    %4623 = vset.pattern.permute.xlu0 0
    %4624 = vperm.xlu0 %4623, %v4253
    %v4625 = vpop.permute.xlu0 %4624
    %4626 = vset.pattern.permute.xlu0 0
    %4627 = vperm.xlu0 %4626, %v4254
    %v4628 = vpop.permute.xlu0 %4627
    %4629 = vset.pattern.permute.xlu0 0
    %4630 = vperm.xlu0 %4629, %v4255
    %v4631 = vpop.permute.xlu0 %4630
    %4632 = vset.pattern.permute.xlu0 0
    %4633 = vperm.xlu0 %4632, %v4256
    %v4634 = vpop.permute.xlu0 %4633
    %4635 = vset.pattern.permute.xlu0 0
    %4636 = vperm.xlu0 %4635, %v4257
    %v4637 = vpop.permute.xlu0 %4636
    %4638 = vset.pattern.permute.xlu0 0
    %4639 = vperm.xlu0 %4638, %v4258
    %v4640 = vpop.permute.xlu0 %4639
    %4641 = vset.pattern.permute.xlu0 0
    %4642 = vperm.xlu0 %4641, %v4259
    %v4643 = vpop.permute.xlu0 %4642
    %4644 = vset.pattern.permute.xlu0 0
    %4645 = vperm.xlu0 %4644, %v4260
    %v4646 = vpop.permute.xlu0 %4645
    %4647 = vset.pattern.permute.xlu0 0
    %4648 = vperm.xlu0 %4647, %v4261
    %v4649 = vpop.permute.xlu0 %4648
    %4650 = vset.pattern.permute.xlu0 0
    %4651 = vperm.xlu0 %4650, %v4262
    %v4652 = vpop.permute.xlu0 %4651
    %4653 = vset.pattern.permute.xlu0 0
    %4654 = vperm.xlu0 %4653, %v4263
    %v4655 = vpop.permute.xlu0 %4654
    %4656 = vset.pattern.permute.xlu0 0
    %4657 = vperm.xlu0 %4656, %v4264
    %v4658 = vpop.permute.xlu0 %4657
    %4659 = vset.pattern.permute.xlu0 0
    %4660 = vperm.xlu0 %4659, %v4265
    %v4661 = vpop.permute.xlu0 %4660
    %4662 = vset.pattern.permute.xlu0 0
    %4663 = vperm.xlu0 %4662, %v4266
    %v4664 = vpop.permute.xlu0 %4663
    %4665 = vset.pattern.permute.xlu0 0
    %4666 = vperm.xlu0 %4665, %v4267
    %v4667 = vpop.permute.xlu0 %4666
    %4668 = vset.pattern.permute.xlu0 0
    %4669 = vperm.xlu0 %4668, %v4268
    %v4670 = vpop.permute.xlu0 %4669
    %v4671 = vlaneseq
    %v4672 = vshrl.u32 %v4671, 7
    %v4673 = vsub.s32 %v918, %v4672
    %v4674 = vrot.slane %v4625, %v4673
    %v4675 = vlaneseq
    %v4676 = vshrl.u32 %v4675, 7
    %v4677 = vsub.s32 %v918, %v4676
    %v4678 = vrot.slane %v4628, %v4677
    %v4679 = vlaneseq
    %v4680 = vshrl.u32 %v4679, 7
    %v4681 = vsub.s32 %v918, %v4680
    %v4682 = vrot.slane %v4631, %v4681
    %v4683 = vlaneseq
    %v4684 = vshrl.u32 %v4683, 7
    %v4685 = vsub.s32 %v918, %v4684
    %v4686 = vrot.slane %v4634, %v4685
    %v4687 = vlaneseq
    %v4688 = vshrl.u32 %v4687, 7
    %v4689 = vsub.s32 %v918, %v4688
    %v4690 = vrot.slane %v4637, %v4689
    %v4691 = vlaneseq
    %v4692 = vshrl.u32 %v4691, 7
    %v4693 = vsub.s32 %v918, %v4692
    %v4694 = vrot.slane %v4640, %v4693
    %v4695 = vlaneseq
    %v4696 = vshrl.u32 %v4695, 7
    %v4697 = vsub.s32 %v918, %v4696
    %v4698 = vrot.slane %v4643, %v4697
    %v4699 = vlaneseq
    %v4700 = vshrl.u32 %v4699, 7
    %v4701 = vsub.s32 %v918, %v4700
    %v4702 = vrot.slane %v4646, %v4701
    %v4703 = vlaneseq
    %v4704 = vshrl.u32 %v4703, 7
    %v4705 = vsub.s32 %v918, %v4704
    %v4706 = vrot.slane %v4649, %v4705
    %v4707 = vlaneseq
    %v4708 = vshrl.u32 %v4707, 7
    %v4709 = vsub.s32 %v918, %v4708
    %v4710 = vrot.slane %v4652, %v4709
    %v4711 = vlaneseq
    %v4712 = vshrl.u32 %v4711, 7
    %v4713 = vsub.s32 %v918, %v4712
    %v4714 = vrot.slane %v4655, %v4713
    %v4715 = vlaneseq
    %v4716 = vshrl.u32 %v4715, 7
    %v4717 = vsub.s32 %v918, %v4716
    %v4718 = vrot.slane %v4658, %v4717
    %v4719 = vlaneseq
    %v4720 = vshrl.u32 %v4719, 7
    %v4721 = vsub.s32 %v918, %v4720
    %v4722 = vrot.slane %v4661, %v4721
    %v4723 = vlaneseq
    %v4724 = vshrl.u32 %v4723, 7
    %v4725 = vsub.s32 %v918, %v4724
    %v4726 = vrot.slane %v4664, %v4725
    %v4727 = vlaneseq
    %v4728 = vshrl.u32 %v4727, 7
    %v4729 = vsub.s32 %v918, %v4728
    %v4730 = vrot.slane %v4667, %v4729
    %v4731 = vlaneseq
    %v4732 = vshrl.u32 %v4731, 7
    %v4733 = vsub.s32 %v918, %v4732
    %v4734 = vrot.slane %v4670, %v4733
    %v4735 = vsel %vm983, %v4678, %v4674
    %v4736 = vsel %vm985, %v4682, %v4735
    %v4737 = vsel %vm987, %v4686, %v4736
    %v4738 = vsel %vm989, %v4690, %v4737
    %v4739 = vsel %vm991, %v4694, %v4738
    %v4740 = vsel %vm993, %v4698, %v4739
    %v4741 = vsel %vm995, %v4702, %v4740
    %v4742 = vsel %vm983, %v4710, %v4706
    %v4743 = vsel %vm985, %v4714, %v4742
    %v4744 = vsel %vm987, %v4718, %v4743
    %v4745 = vsel %vm989, %v4722, %v4744
    %v4746 = vsel %vm991, %v4726, %v4745
    %v4747 = vsel %vm993, %v4730, %v4746
    %v4748 = vsel %vm995, %v4734, %v4747
    %4751 = vst.msk [vmem:[%s8] sm:$0xff] %vm1006, %v4741
    %4752 = vst.msk [vmem:[%s8 + $0x8] sm:$0xff] %vm1006, %v4748
    %v4753 = vld [vmem:[%s6] sm:$0x1]
    %v4755 = vlaneseq
    %v4756 = vshrl.u32 %v4755, 7
    %v4757 = vsub.s32 0, %v4756
    %v4758 = vrot.slane %v4753, %v4757
    %v4760 = vmul.f32 %v321, %v4758
    %v4761 = vmul.f32 %v324, %v4758
    %v4762 = vsel %vm160, %v4760, 0.0
    %4763 = vadd.xlane.f32.xlu0 %v4762
    %v4764 = vpop.xlane.xlu0 %4763
    %v4765 = vsel %vm160, %v4761, 0.0
    %4766 = vadd.xlane.f32.xlu0 %v4765
    %v4767 = vpop.xlane.xlu0 %4766
    %v4768 = vld [vmem:[#allocation2] sm:$0x1]
    %v4770 = vlaneseq
    %v4771 = vshrl.u32 %v4770, 7
    %v4772 = vsub.s32 0, %v4771
    %v4773 = vrot.slane %v4768, %v4772
    %v4775 = vadd.f32 %v4764, %v4773
    %v4776 = vadd.f32 %v4767, %v4773
    %vm4777 = vcmask 7168
    %4778 = vst.msk [vmem:[%s9] sm:$0xff] %vm4777, %v4775
    %4779 = vst.msk [vmem:[%s9 + $0x8] sm:$0xff] %vm4777, %v4776
    %v4780 = vsel %vm4777, %v1527, %v2491
    %v4781 = vsel %vm4777, %v1528, %v2492
    %vm4782 = vcmask 15360
    %v4783 = vsel %vm4782, %v4780, %v3439
    %v4784 = vsel %vm4782, %v4781, %v3440
    %vm4785 = vcmask 23552
    %v4786 = vsel %vm4785, %v4783, %v4387
    %v4787 = vsel %vm4785, %v4784, %v4388
    %vm4788 = vcmask 31744
    %v4789 = vsel %vm4788, %v4786, %v1745
    %v4790 = vsel %vm4788, %v4787, %v1746
    %vm4791 = vcmask 39936
    %v4792 = vsel %vm4791, %v4789, %v2709
    %v4793 = vsel %vm4791, %v4790, %v2710
    %vm4794 = vcmask 48128
    %v4795 = vsel %vm4794, %v4792, %v3657
    %v4796 = vsel %vm4794, %v4793, %v3658
    %vm4797 = vcmask 56320
    %v4798 = vsel %vm4797, %v4795, %v4605
    %v4799 = vsel %vm4797, %v4796, %v4606
    %v4800 = vsel %vm1006, %v4798, 0.0
    %v4801 = vsel %vm1006, %v4799, 0.0
    %v4802 = vadd.f32 %v4800, %v4801
    %v4803 = vrot.slane %v4802, 4
    %v4804 = vadd.f32 %v4802, %v4803
    %v4805 = vrot.slane %v4804, 2
    %v4806 = vadd.f32 %v4804, %v4805
    %v4807 = vrot.slane %v4806, 1
    %v4808 = vadd.f32 %v4806, %v4807
    %4809 = vst.msk [vmem:[#allocation8] sm:$0xff] %vm1006, %v4808
    // Predicated region
    $region42: #{tpu_custom_call.1} parent=1 // pred_check
      _
    $region43: #{tpu_custom_call.1} parent=1 // pred_check_branch
      %4811 = sbr.rel (0) target = $region45
    $region44: #{tpu_custom_call.1} parent=1 // pred_region
      _
    $region45: #{tpu_custom_call.1} parent=1 // pred_fallthru
      _
    // Predicated region
    $region46: #{tpu_custom_call.1} parent=1 // pred_check
      _
    $region47: #{tpu_custom_call.1} parent=1 // pred_check_branch
      %4813 = sbr.rel (0) target = $region49
    $region48: #{tpu_custom_call.1} parent=1 // pred_region
      _
    $region49: #{tpu_custom_call.1} parent=1 // pred_fallthru
      _
    // Predicated region
    $region50: #{tpu_custom_call.1} parent=1 // pred_check
      _
    $region51: #{tpu_custom_call.1} parent=1 // pred_check_branch
      %4815 = sbr.rel (0) target = $region53
    $region52: #{tpu_custom_call.1} parent=1 // pred_region
      %s4817 = ssub.s32 128, 128
      %4818 = vsyncadd [#allocation5], %s4817
      %s4820 = sshll.u32 [#allocation8], 4
      %s4821 = int_to_ptr.vmem [resolvable:$true] %s4820
      %4823 = dma.vmem_to_hbm [thread:$0]  %s4821, 128, %s10, [#allocation5]
    $region53: #{tpu_custom_call.1} parent=1 // pred_fallthru
      _
    // Predicated region
    $region54: #{tpu_custom_call.1} parent=1 // pred_check
      _
    $region55: #{tpu_custom_call.1} parent=1 // pred_check_branch
      %4825 = sbr.rel (0) target = $region57
    $region56: #{tpu_custom_call.1} parent=1 // pred_region
      _
    $region57: #{tpu_custom_call.1} parent=1 // pred_fallthru
      _
    // Predicated region
    $region58: #{tpu_custom_call.1} parent=1 // pred_check
      _
    $region59: #{tpu_custom_call.1} parent=1 // pred_check_branch
      %4827 = sbr.rel (0) target = $region61
    $region60: #{tpu_custom_call.1} parent=1 // pred_region
      _
    $region61: #{tpu_custom_call.1} parent=1 // pred_fallthru
      _
    // Predicated region
    $region62: #{tpu_custom_call.1} parent=1 // pred_check
      _
    $region63: #{tpu_custom_call.1} parent=1 // pred_check_branch
      %4829 = sbr.rel (0) target = $region65
    $region64: #{tpu_custom_call.1} parent=1 // pred_region
      %4830 = dma.done [#allocation5], 128
    $region65: #{tpu_custom_call.1} parent=1 // pred_fallthru
      _
    %4831 = vsyncpa [#allocation4], 1
    %4832 = vsyncpa [#allocation7], 1
    %4833 = vsyncpa [#allocation5], 1

</llo_original>
